<compile_context>
chip_gen: v7x
topology: tpu7x:2x2x1
jax: 0.10.0
libtpu: 0.0.40
codegen_flags: <defaults>
</compile_context>

<pallas_src>
import jax
import jax.numpy as jnp
from jax.experimental import pallas as pl
from jax.experimental.pallas import tpu as pltpu

# ---------------- shapes consistent with T_GNN defaults (kept small) ----------------
N = 1                 # batch
SEQ_LEN = 8           # T_obs
PRED_SEQ_LEN = 12
NUM_PEDS = 12         # V
INPUT_FEAT = 2
FEAT_DIM = 64         # C
OUTPUT_FEAT = 5
KERNEL_SIZE = 3       # temporal kernel of st_gcn
MAX_NUM_PEDS = 32     # P (GATConv in/out channels); kept small for the example
GAT_HEADS = 4
BN_EPS = 1e-5
PRELU_INIT = 0.25     # nn.PReLU() default initial weight

TV = SEQ_LEN * NUM_PEDS          # 96
PV = PRED_SEQ_LEN * NUM_PEDS     # 144
GBLK = 256                       # lane-aligned stride of the 3 folded tpcnn weight blocks

# ---- weight-slab row offsets (multiples of 8 -> sublane-aligned static carves) ----
R_WT = 0        # wt_cat          (C, 3C)  = (64, 192)
R_GCNW = 64     # gcn 1x1 conv    (C, C)   = (64, 64)
R_WSTK = 128    # GAT W stacked   (H*P, P) = (128, 32)
R_ATTN = 256    # W@att vectors   (P, 2H)  = (32, 8)
R_COL = 288     # column pack     (C, 9): wp(0:2) bp gcn_b bn1_g bn1_b tcn_b bn2_g bn2_b
R_MISC = 352    # row 352: gat bias (1,32); row 353: tpcnn bias row (1,144)
R_W2 = 360      # lin_proj_2 [W|b] = (5, 65)
W_ROWS = 368
W_COLS = 192

DATA_ROWS = TV + 8               # rows 0..95: x_gat (96,32); rows 96..97: v_in (2,96)
DATA_COLS = TV

OUT_ROWS = 24                    # rows 0..11: a_flat (12,96); rows 16..20: v_flat (5,144)
OUT_COLS = PV
V_ROW0 = 16

USE_BF16_MATMUL = False          # True => ~3x fewer MXU passes, breaks f32 bit parity


def _dot(a, b):
    if USE_BF16_MATMUL:
        a = a.astype(jnp.bfloat16)
        b = b.astype(jnp.bfloat16)
    return jnp.dot(a, b, preferred_element_type=jnp.float32)


# ================================ fused kernel ================================
def t_gnn_kernel(data_ref, w_ref, g_ref, out_ref):
    T, V, P, H, C = SEQ_LEN, NUM_PEDS, MAX_NUM_PEDS, GAT_HEADS, FEAT_DIM
    NEG = -1e30
    f32 = jnp.float32

    # ---------------- carve packed inputs (static slices) ----------------
    x_gat = data_ref[0:TV, 0:P]                        # (96, 32) stacked/padded A[t].T
    v_in = data_ref[TV:TV + 2, 0:TV]                   # (2, 96)  node features

    wt_cat = w_ref[R_WT:R_WT + C, 0:3 * C]             # (64, 192) temporal conv taps
    gcn_w = w_ref[R_GCNW:R_GCNW + C, 0:C]              # (64, 64)
    w_stk = w_ref[R_WSTK:R_WSTK + H * P, 0:P]          # (128, 32) GAT head weights stacked
    attn_c = w_ref[R_ATTN:R_ATTN + P, 0:2 * H]         # (32, 8)   cols 0..H-1 dst, H..2H-1 src
    colpk = w_ref[R_COL:R_COL + C, 0:9]                # (64, 9)
    wp = colpk[:, 0:2]
    bp = colpk[:, 2:3]
    gcn_b = colpk[:, 3:4]
    bn1_g = colpk[:, 4:5]
    bn1_b = colpk[:, 5:6]
    tcn_b = colpk[:, 6:7]
    bn2_g = colpk[:, 7:8]
    bn2_b = colpk[:, 8:9]
    gat_b = w_ref[R_MISC:R_MISC + 1, 0:P]              # (1, 32)
    btp_row = w_ref[R_MISC + 1:R_MISC + 2, 0:PV]       # (1, 144)
    w2aug = w_ref[R_W2:R_W2 + OUTPUT_FEAT, 0:C + 1]    # (5, 65)
    w2 = w2aug[:, 0:C]
    b2 = w2aug[:, C:C + 1]

    # ------------- structural constants generated in-kernel (no DMAs) -------------
    def fdiv(i_f, d):
        # exact floor-division for the small non-negative integer indices used here
        return jnp.floor((i_f + 0.5) * (1.0 / d))

    rb = jax.lax.broadcasted_iota(jnp.int32, (TV, TV), 0).astype(f32)
    cb = jax.lax.broadcasted_iota(jnp.int32, (TV, TV), 1).astype(f32)
    bm96 = fdiv(rb, V) == fdiv(cb, V)                  # same-timestep block mask (TV, TV)

    rr = jax.lax.broadcasted_iota(jnp.int32, (TV, V), 0).astype(f32)
    cr = jax.lax.broadcasted_iota(jnp.int32, (TV, V), 1).astype(f32)
    rep = ((rr - V * fdiv(rr, V)) == cr).astype(f32)   # (TV, V): rep[t*V+v, w] = (v == w)

    rv = jax.lax.broadcasted_iota(jnp.int32, (V, TV), 0).astype(f32)
    cv = jax.lax.broadcasted_iota(jnp.int32, (V, TV), 1).astype(f32)
    eyef = (rv == (cv - V * fdiv(cv, V))).astype(f32)  # (V, TV): per-timestep identity

    # ---------------- GAT: all timesteps & all heads batched ----------------
    # att_dst.(W x_i) + att_src.(W x_j)  ==  x_i.(W att_dst) + x_j.(W att_src)
    scores = _dot(x_gat, attn_c)                       # (TV, 2H)
    scores_t = scores.T                                # (2H, TV)
    e_all = jnp.concatenate(
        [scores[:, h:h + 1] + scores_t[H + h:H + h + 1, :] for h in range(H)],
        axis=0)                                        # (H*TV, TV): e[h*TV+i, j] = dst_i + src_j
    e_all = jnp.where(e_all > 0, e_all, 0.2 * e_all)   # GATConv LeakyReLU(0.2)

    rm = jax.lax.broadcasted_iota(jnp.int32, (H * TV, TV), 0).astype(f32)
    cm = jax.lax.broadcasted_iota(jnp.int32, (H * TV, TV), 1).astype(f32)
    rmod = rm - TV * fdiv(rm, TV)
    same_t = fdiv(rmod, V) == fdiv(cm, V)
    # NOTE: every row keeps exactly V unmasked entries (dense graph + self loops).
    e_all = jnp.where(same_t, e_all, NEG)

    m = jnp.max(e_all, axis=1, keepdims=True)          # batched softmax over sources j
    pexp = jnp.exp(e_all - m)
    inv_den = 1.0 / jnp.sum(pexp, axis=1, keepdims=True)
    alpha = pexp * inv_den                             # (H*TV, TV)

    ctx = _dot(alpha, x_gat)                           # (H*TV, P): per-head aggregated raw feats
    # alpha_h @ (x W_h) == (alpha_h @ x) @ W_h ; sublane-aligned slices only
    acc = _dot(ctx[0:TV, :], w_stk[0:P, :])
    for h in range(1, H):
        acc = acc + _dot(ctx[h * TV:(h + 1) * TV, :], w_stk[h * P:(h + 1) * P, :])
    o_gat = acc * (1.0 / H) + gat_b                    # concat=False: head mean + bias
    o_gat = jnp.where(o_gat > 0, o_gat, 0.2 * o_gat)   # module-level LeakyReLU(0.2)

    # a_flat[i, t*V + j] = new_A[t, i, j] = gat_out[t*V + j, i] + eye
    a_flat = o_gat[:, 0:V].T + eyef                    # (V, TV)
    # block-diagonal graph operator: bd[t*V+v, t*V+w] = new_A[t, v, w]
    bd = jnp.where(bm96, _dot(rep, a_flat), 0.0)       # (TV, TV)

    # ---------------- feature projection: relu(Linear(2 -> C)) ----------------
    x = jnp.maximum(_dot(wp, v_in) + bp, 0.0)          # (C, TV)

    # --------------------------------- st_gcn ----------------------------------
    z = _dot(gcn_w, x) + gcn_b                         # 1x1 conv over channels
    y = _dot(z, bd)                                    # einsum 'nctv,tvw->nctw'

    inv_tv = 1.0 / TV
    mu = jnp.sum(y, axis=1, keepdims=True) * inv_tv    # BN1 (training batch stats, N=1)
    d = y - mu
    var = jnp.sum(d * d, axis=1, keepdims=True) * inv_tv
    yn = d * jax.lax.rsqrt(var + BN_EPS) * bn1_g + bn1_b
    yp = jnp.where(yn > 0, yn, PRELU_INIT * yn)        # PReLU

    # temporal Conv2d (3,1), stride 1, pad (1,0): ONE K=3C dot over sublane-stacked shifts
    col = jax.lax.broadcasted_iota(jnp.int32, (1, TV), 1)
    y_prev = jnp.where(col >= V, pltpu.roll(yp, shift=V, axis=1), 0.0)            # yp[:, t-1]
    y_next = jnp.where(col < TV - V, pltpu.roll(yp, shift=TV - V, axis=1), 0.0)   # yp[:, t+1]
    y_stack = jnp.concatenate([y_prev, yp, y_next], axis=0)                       # (3C, TV)
    c = _dot(wt_cat, y_stack) + tcn_b                                             # (C, TV)

    mu2 = jnp.sum(c, axis=1, keepdims=True) * inv_tv   # BN2
    d2 = c - mu2
    var2 = jnp.sum(d2 * d2, axis=1, keepdims=True) * inv_tv
    cn = d2 * jax.lax.rsqrt(var2 + BN_EPS) * bn2_g + bn2_b
    vs = cn + x                      # Dropout(0) id; residual id; use_mdn -> no PReLU

    # ---------- tpcnn 3x3 conv (+permutes) as ONE kron-folded MXU dot + PReLU ----------
    hw = _dot(vs, g_ref[...])                          # (C, 3*GBLK); blocks lane-aligned at 0/256/512
    h0 = hw[:, 0:PV]
    h1 = hw[:, GBLK:GBLK + PV]
    h2 = hw[:, 2 * GBLK:2 * GBLK + PV]
    row = jax.lax.broadcasted_iota(jnp.int32, (C, 1), 0)
    h0s = jnp.where(row >= 1, pltpu.roll(h0, shift=1, axis=0), 0.0)               # H0[c-1]
    h2s = jnp.where(row < C - 1, pltpu.roll(h2, shift=C - 1, axis=0), 0.0)        # H2[c+1]
    co = h0s + h1 + h2s + btp_row                      # (C, PV)
    co = jnp.where(co > 0, co, PRELU_INIT * co)        # PReLU

    # ----------------------- lin_proj_2: Linear(C -> 5) ------------------------
    v_flat = _dot(w2, co) + b2                         # (5, PV)

    # ----------------------- single merged output slab -------------------------
    out_ref[0:V, 0:TV] = a_flat
    out_ref[V_ROW0:V_ROW0 + OUTPUT_FEAT, 0:PV] = v_flat


# ================================ parameters ==================================
def init_params(key):
    keys = jax.random.split(key, 16)
    s = 0.1
    p = {}
    # lin_proj: Linear(input_feat, feat_dim)   (stored (in, out))
    p["lin_proj_w"] = s * jax.random.normal(keys[0], (INPUT_FEAT, FEAT_DIM), jnp.float32)
    p["lin_proj_b"] = s * jax.random.normal(keys[1], (1, FEAT_DIM), jnp.float32)
    # lin_proj_2: Linear(feat_dim, output_feat)
    p["lin_proj2_w"] = s * jax.random.normal(keys[2], (FEAT_DIM, OUTPUT_FEAT), jnp.float32)
    p["lin_proj2_b"] = s * jax.random.normal(keys[3], (1, OUTPUT_FEAT), jnp.float32)
    # GATConv(max_num_peds, max_num_peds, heads=4, concat=False)
    p["gat_w"] = s * jax.random.normal(keys[4], (GAT_HEADS, MAX_NUM_PEDS, MAX_NUM_PEDS), jnp.float32)
    p["gat_att_src"] = s * jax.random.normal(keys[5], (GAT_HEADS, 1, MAX_NUM_PEDS), jnp.float32)
    p["gat_att_dst"] = s * jax.random.normal(keys[6], (GAT_HEADS, 1, MAX_NUM_PEDS), jnp.float32)
    p["gat_bias"] = s * jax.random.normal(keys[7], (1, MAX_NUM_PEDS), jnp.float32)
    # st_gcn: 1x1 gcn conv, BN1, PReLU(0.25 baked), temporal conv (3,1), BN2
    p["gcn_w"] = s * jax.random.normal(keys[8], (FEAT_DIM, FEAT_DIM), jnp.float32)
    p["gcn_b"] = s * jax.random.normal(keys[9], (FEAT_DIM, 1), jnp.float32)
    p["bn1_g"] = jnp.ones((FEAT_DIM, 1, 1), jnp.float32)
    p["bn1_b"] = jnp.zeros((FEAT_DIM, 1, 1), jnp.float32)
    p["tcn_w"] = s * jax.random.normal(keys[10], (KERNEL_SIZE, FEAT_DIM, FEAT_DIM), jnp.float32)
    p["tcn_b"] = s * jax.random.normal(keys[11], (FEAT_DIM, 1), jnp.float32)
    p["bn2_g"] = jnp.ones((FEAT_DIM, 1, 1), jnp.float32)
    p["bn2_b"] = jnp.zeros((FEAT_DIM, 1, 1), jnp.float32)
    # tpcnn: Conv2d(seq_len, pred_seq_len, 3, padding=1)   (torch layout (O, I, 3, 3))
    p["tp_w"] = s * jax.random.normal(keys[12], (PRED_SEQ_LEN, SEQ_LEN, 3, 3), jnp.float32)
    p["tp_b"] = s * jax.random.normal(keys[13], (PRED_SEQ_LEN, 1), jnp.float32)
    return p


# ================= one-time host-side packing of all weights ==================
def pack_params(p):
    C, P, H, V = FEAT_DIM, MAX_NUM_PEDS, GAT_HEADS, NUM_PEDS

    w = jnp.zeros((W_ROWS, W_COLS), jnp.float32)
    # temporal conv taps, lane-concatenated: wt_cat[c, k*C + c'] = tcn_w[k, c, c']
    wt_cat = jnp.transpose(p["tcn_w"], (1, 0, 2)).reshape(C, 3 * C)
    w = w.at[R_WT:R_WT + C, 0:3 * C].set(wt_cat)
    w = w.at[R_GCNW:R_GCNW + C, 0:C].set(p["gcn_w"])
    # GAT head weights stacked along rows
    w = w.at[R_WSTK:R_WSTK + H * P, 0:P].set(p["gat_w"].reshape(H * P, P))
    # fold attention vectors through W so scores come straight from raw features
    a_dst = jnp.einsum('hpq,hq->ph', p["gat_w"], p["gat_att_dst"][:, 0, :])   # (P, H)
    a_src = jnp.einsum('hpq,hq->ph', p["gat_w"], p["gat_att_src"][:, 0, :])   # (P, H)
    w = w.at[R_ATTN:R_ATTN + P, 0:2 * H].set(jnp.concatenate([a_dst, a_src], axis=1))
    # per-channel column pack
    colpk = jnp.concatenate([
        p["lin_proj_w"].T,                 # (C, 2)
        p["lin_proj_b"].T,                 # (C, 1)
        p["gcn_b"],                        # (C, 1)
        p["bn1_g"].reshape(C, 1), p["bn1_b"].reshape(C, 1),
        p["tcn_b"],                        # (C, 1)
        p["bn2_g"].reshape(C, 1), p["bn2_b"].reshape(C, 1)], axis=1)          # (C, 9)
    w = w.at[R_COL:R_COL + C, 0:9].set(colpk)
    w = w.at[R_MISC, 0:P].set(p["gat_bias"][0])
    btp_row = jnp.repeat(p["tp_b"].reshape(-1), V)                            # (PV,)
    w = w.at[R_MISC + 1, 0:PV].set(btp_row)
    w2aug = jnp.concatenate([p["lin_proj2_w"].T, p["lin_proj2_b"].T], axis=1)  # (5, C+1)
    w = w.at[R_W2:R_W2 + OUTPUT_FEAT, 0:C + 1].set(w2aug)

    # tpcnn 3x3 conv folded into 3 block-structured (TV, PV) weights, lane-aligned at
    # GBLK strides:  G[di][t*V+v', p*V+v] = tp_w[p, t, di, v'-v+1]
    base = jnp.arange(V)
    shift = [(base[:, None] == (base[None, :] + dj - 1)).astype(jnp.float32) for dj in range(3)]
    g_wide = jnp.zeros((TV, 3 * GBLK), jnp.float32)
    for di in range(3):
        g_di = sum(jnp.kron(p["tp_w"][:, :, di, dj].T, shift[dj]) for dj in range(3))  # (TV, PV)
        g_wide = g_wide.at[:, di * GBLK:di * GBLK + PV].set(g_di)
    return {"w": w, "g": g_wide}


# ================================ full forward ================================
@jax.jit
def t_gnn_forward(v_s, a_s, packed):
    T, V, _ = a_s.shape
    P = MAX_NUM_PEDS

    # ---- tiny per-call data layout prep (compiles into the same jit program) ----
    x_gat = jnp.transpose(a_s, (0, 2, 1))                                 # A[t].T
    x_gat = jnp.pad(x_gat, ((0, 0), (0, 0), (0, P - V))).reshape(T * V, P)  # F.pad(..., (0, P-V))
    v_in = v_s.reshape(T * V, INPUT_FEAT).T                               # (2, TV)
    data = jnp.zeros((DATA_ROWS, DATA_COLS), jnp.float32)
    data = data.at[0:T * V, 0:P].set(x_gat)
    data = data.at[T * V:T * V + INPUT_FEAT, 0:T * V].set(v_in)

    out = pl.pallas_call(
        t_gnn_kernel,
        out_shape=jax.ShapeDtypeStruct((OUT_ROWS, OUT_COLS), jnp.float32),
    )(data, packed["w"], packed["g"])

    # ---- tiny host-side output reshapes ----
    a_flat = out[0:V, 0:T * V]                                            # (V, TV)
    v_flat = out[V_ROW0:V_ROW0 + OUTPUT_FEAT, 0:PRED_SEQ_LEN * V]         # (5, PV)
    a_out = a_flat.reshape(V, T, V).transpose(1, 0, 2)                    # (T, V, V)
    v_out = v_flat.T.reshape(PRED_SEQ_LEN, V, OUTPUT_FEAT)[None]          # (1, predT, V, 5)
    return v_out, a_out


if __name__ == "__main__":
    key = jax.random.PRNGKey(0)
    kp, kv, ka = jax.random.split(key, 3)
    params = init_params(kp)
    packed = pack_params(params)   # one-time weight packing (2 slabs)
    # v_s: (N, T_obs, V, input_feat)  ;  a_s: (T_obs, V, V)
    v_s = jax.random.normal(kv, (N, SEQ_LEN, NUM_PEDS, INPUT_FEAT), jnp.float32)
    a_s = jax.random.normal(ka, (SEQ_LEN, NUM_PEDS, NUM_PEDS), jnp.float32)

    v_out, a_out = t_gnn_forward(v_s, a_s, packed)
    jax.block_until_ready((v_out, a_out))

    assert v_out.shape == (N, PRED_SEQ_LEN, NUM_PEDS, OUTPUT_FEAT)
    assert a_out.shape == (SEQ_LEN, NUM_PEDS, NUM_PEDS)
    assert bool(jnp.isfinite(v_out).all()) and bool(jnp.isfinite(a_out).all())
    print("KERNEL_OK")
</pallas_src>

<mosaic_0001>
module attributes {stable_mosaic.version = 11 : i64} {
  func.func @t_gnn_kernel(%arg0: memref<104x96xf32, #tpu.memory_space<vmem>>, %arg1: memref<368x192xf32, #tpu.memory_space<vmem>>, %arg2: memref<96x768xf32, #tpu.memory_space<vmem>>, %arg3: memref<24x144xf32, #tpu.memory_space<vmem>>) attributes {dimension_semantics = [], scalar_prefetch = 0 : i64, scratch_operands = 0 : i64, tpu.core_type = #tpu.core_type<tc>} {
    %c0 = arith.constant 0 : index
    %c0_0 = arith.constant 0 : index
    %0 = vector.load %arg0[%c0, %c0_0] : memref<104x96xf32, #tpu.memory_space<vmem>>, vector<96x32xf32>
    %c96 = arith.constant 96 : index
    %c0_1 = arith.constant 0 : index
    %1 = vector.load %arg0[%c96, %c0_1] : memref<104x96xf32, #tpu.memory_space<vmem>>, vector<2x96xf32>
    %c0_2 = arith.constant 0 : index
    %c0_3 = arith.constant 0 : index
    %2 = vector.load %arg1[%c0_2, %c0_3] : memref<368x192xf32, #tpu.memory_space<vmem>>, vector<64x192xf32>
    %c64 = arith.constant 64 : index
    %c0_4 = arith.constant 0 : index
    %3 = vector.load %arg1[%c64, %c0_4] : memref<368x192xf32, #tpu.memory_space<vmem>>, vector<64x64xf32>
    %c128 = arith.constant 128 : index
    %c0_5 = arith.constant 0 : index
    %4 = vector.load %arg1[%c128, %c0_5] : memref<368x192xf32, #tpu.memory_space<vmem>>, vector<128x32xf32>
    %c256 = arith.constant 256 : index
    %c0_6 = arith.constant 0 : index
    %5 = vector.load %arg1[%c256, %c0_6] : memref<368x192xf32, #tpu.memory_space<vmem>>, vector<32x8xf32>
    %c288 = arith.constant 288 : index
    %c0_7 = arith.constant 0 : index
    %6 = vector.load %arg1[%c288, %c0_7] : memref<368x192xf32, #tpu.memory_space<vmem>>, vector<64x9xf32>
    %7 = vector.extract_strided_slice %6 {offsets = [0, 0], sizes = [64, 2], strides = [1, 1]} : vector<64x9xf32> to vector<64x2xf32>
    %8 = vector.extract_strided_slice %6 {offsets = [0, 2], sizes = [64, 1], strides = [1, 1]} : vector<64x9xf32> to vector<64x1xf32>
    %9 = vector.extract_strided_slice %6 {offsets = [0, 3], sizes = [64, 1], strides = [1, 1]} : vector<64x9xf32> to vector<64x1xf32>
    %10 = vector.extract_strided_slice %6 {offsets = [0, 4], sizes = [64, 1], strides = [1, 1]} : vector<64x9xf32> to vector<64x1xf32>
    %11 = vector.extract_strided_slice %6 {offsets = [0, 5], sizes = [64, 1], strides = [1, 1]} : vector<64x9xf32> to vector<64x1xf32>
    %12 = vector.extract_strided_slice %6 {offsets = [0, 6], sizes = [64, 1], strides = [1, 1]} : vector<64x9xf32> to vector<64x1xf32>
    %13 = vector.extract_strided_slice %6 {offsets = [0, 7], sizes = [64, 1], strides = [1, 1]} : vector<64x9xf32> to vector<64x1xf32>
    %14 = vector.extract_strided_slice %6 {offsets = [0, 8], sizes = [64, 1], strides = [1, 1]} : vector<64x9xf32> to vector<64x1xf32>
    %c352 = arith.constant 352 : index
    %c0_8 = arith.constant 0 : index
    %15 = vector.load %arg1[%c352, %c0_8] : memref<368x192xf32, #tpu.memory_space<vmem>>, vector<1x32xf32>
    %c353 = arith.constant 353 : index
    %c0_9 = arith.constant 0 : index
    %16 = vector.load %arg1[%c353, %c0_9] : memref<368x192xf32, #tpu.memory_space<vmem>>, vector<1x144xf32>
    %c360 = arith.constant 360 : index
    %c0_10 = arith.constant 0 : index
    %17 = vector.load %arg1[%c360, %c0_10] : memref<368x192xf32, #tpu.memory_space<vmem>>, vector<5x65xf32>
    %18 = vector.extract_strided_slice %17 {offsets = [0, 0], sizes = [5, 64], strides = [1, 1]} : vector<5x65xf32> to vector<5x64xf32>
    %19 = vector.extract_strided_slice %17 {offsets = [0, 64], sizes = [5, 1], strides = [1, 1]} : vector<5x65xf32> to vector<5x1xf32>
    %20 = tpu.iota {dimensions = array<i32: 0>} : vector<96x96xi32>
    %21 = arith.sitofp %20 : vector<96x96xi32> to vector<96x96xf32>
    %22 = tpu.iota {dimensions = array<i32: 1>} : vector<96x96xi32>
    %23 = arith.sitofp %22 : vector<96x96xi32> to vector<96x96xf32>
    %cst = arith.constant 5.000000e-01 : f32
    %24 = vector.broadcast %cst : f32 to vector<96x96xf32>
    %25 = arith.addf %21, %24 : vector<96x96xf32>
    %cst_11 = arith.constant 0.0833333358 : f32
    %26 = vector.broadcast %cst_11 : f32 to vector<96x96xf32>
    %27 = arith.mulf %25, %26 : vector<96x96xf32>
    %28 = math.floor %27 : vector<96x96xf32>
    %cst_12 = arith.constant 5.000000e-01 : f32
    %29 = vector.broadcast %cst_12 : f32 to vector<96x96xf32>
    %30 = arith.addf %23, %29 : vector<96x96xf32>
    %cst_13 = arith.constant 0.0833333358 : f32
    %31 = vector.broadcast %cst_13 : f32 to vector<96x96xf32>
    %32 = arith.mulf %30, %31 : vector<96x96xf32>
    %33 = math.floor %32 : vector<96x96xf32>
    %34 = arith.cmpf oeq, %28, %33 : vector<96x96xf32>
    %35 = tpu.iota {dimensions = array<i32: 0>} : vector<96x12xi32>
    %36 = arith.sitofp %35 : vector<96x12xi32> to vector<96x12xf32>
    %37 = tpu.iota {dimensions = array<i32: 1>} : vector<96x12xi32>
    %38 = arith.sitofp %37 : vector<96x12xi32> to vector<96x12xf32>
    %cst_14 = arith.constant 5.000000e-01 : f32
    %39 = vector.broadcast %cst_14 : f32 to vector<96x12xf32>
    %40 = arith.addf %36, %39 : vector<96x12xf32>
    %cst_15 = arith.constant 0.0833333358 : f32
    %41 = vector.broadcast %cst_15 : f32 to vector<96x12xf32>
    %42 = arith.mulf %40, %41 : vector<96x12xf32>
    %43 = math.floor %42 : vector<96x12xf32>
    %cst_16 = arith.constant 1.200000e+01 : f32
    %44 = vector.broadcast %cst_16 : f32 to vector<96x12xf32>
    %45 = arith.mulf %44, %43 : vector<96x12xf32>
    %46 = arith.subf %36, %45 : vector<96x12xf32>
    %47 = arith.cmpf oeq, %46, %38 : vector<96x12xf32>
    %48 = arith.extui %47 : vector<96x12xi1> to vector<96x12xi32>
    %49 = arith.sitofp %48 : vector<96x12xi32> to vector<96x12xf32>
    %50 = tpu.iota {dimensions = array<i32: 0>} : vector<12x96xi32>
    %51 = arith.sitofp %50 : vector<12x96xi32> to vector<12x96xf32>
    %52 = tpu.iota {dimensions = array<i32: 1>} : vector<12x96xi32>
    %53 = arith.sitofp %52 : vector<12x96xi32> to vector<12x96xf32>
    %cst_17 = arith.constant 5.000000e-01 : f32
    %54 = vector.broadcast %cst_17 : f32 to vector<12x96xf32>
    %55 = arith.addf %53, %54 : vector<12x96xf32>
    %cst_18 = arith.constant 0.0833333358 : f32
    %56 = vector.broadcast %cst_18 : f32 to vector<12x96xf32>
    %57 = arith.mulf %55, %56 : vector<12x96xf32>
    %58 = math.floor %57 : vector<12x96xf32>
    %cst_19 = arith.constant 1.200000e+01 : f32
    %59 = vector.broadcast %cst_19 : f32 to vector<12x96xf32>
    %60 = arith.mulf %59, %58 : vector<12x96xf32>
    %61 = arith.subf %53, %60 : vector<12x96xf32>
    %62 = arith.cmpf oeq, %51, %61 : vector<12x96xf32>
    %63 = arith.extui %62 : vector<12x96xi1> to vector<12x96xi32>
    %64 = arith.sitofp %63 : vector<12x96xi32> to vector<12x96xf32>
    %cst_20 = arith.constant dense<0.000000e+00> : vector<96x8xf32>
    %65 = tpu.matmul %0, %5, %cst_20 {dimension_numbers = #tpu.dot_dimension_numbers<[1], [0], [0], [1], [0, 0, 1, 1], [], []>} : vector<96x32xf32>, vector<32x8xf32>, vector<96x8xf32> -> vector<96x8xf32>
    %66 = tpu.transpose %65, [1, 0] : vector<96x8xf32> -> vector<8x96xf32>
    %67 = vector.extract_strided_slice %65 {offsets = [0, 0], sizes = [96, 1], strides = [1, 1]} : vector<96x8xf32> to vector<96x1xf32>
    %68 = vector.extract_strided_slice %66 {offsets = [4, 0], sizes = [1, 96], strides = [1, 1]} : vector<8x96xf32> to vector<1x96xf32>
    %69 = vector.broadcast %67 : vector<96x1xf32> to vector<96x96xf32>
    %70 = vector.broadcast %68 : vector<1x96xf32> to vector<96x96xf32>
    %71 = arith.addf %69, %70 : vector<96x96xf32>
    %72 = vector.extract_strided_slice %65 {offsets = [0, 1], sizes = [96, 1], strides = [1, 1]} : vector<96x8xf32> to vector<96x1xf32>
    %73 = vector.extract_strided_slice %66 {offsets = [5, 0], sizes = [1, 96], strides = [1, 1]} : vector<8x96xf32> to vector<1x96xf32>
    %74 = vector.broadcast %72 : vector<96x1xf32> to vector<96x96xf32>
    %75 = vector.broadcast %73 : vector<1x96xf32> to vector<96x96xf32>
    %76 = arith.addf %74, %75 : vector<96x96xf32>
    %77 = vector.extract_strided_slice %65 {offsets = [0, 2], sizes = [96, 1], strides = [1, 1]} : vector<96x8xf32> to vector<96x1xf32>
    %78 = vector.extract_strided_slice %66 {offsets = [6, 0], sizes = [1, 96], strides = [1, 1]} : vector<8x96xf32> to vector<1x96xf32>
    %79 = vector.broadcast %77 : vector<96x1xf32> to vector<96x96xf32>
    %80 = vector.broadcast %78 : vector<1x96xf32> to vector<96x96xf32>
    %81 = arith.addf %79, %80 : vector<96x96xf32>
    %82 = vector.extract_strided_slice %65 {offsets = [0, 3], sizes = [96, 1], strides = [1, 1]} : vector<96x8xf32> to vector<96x1xf32>
    %83 = vector.extract_strided_slice %66 {offsets = [7, 0], sizes = [1, 96], strides = [1, 1]} : vector<8x96xf32> to vector<1x96xf32>
    %84 = vector.broadcast %82 : vector<96x1xf32> to vector<96x96xf32>
    %85 = vector.broadcast %83 : vector<1x96xf32> to vector<96x96xf32>
    %86 = arith.addf %84, %85 : vector<96x96xf32>
    %87 = tpu.concatenate %71, %76, %81, %86 in 0 : vector<96x96xf32>, vector<96x96xf32>, vector<96x96xf32>, vector<96x96xf32> -> vector<384x96xf32>
    %cst_21 = arith.constant 0.000000e+00 : f32
    %88 = vector.broadcast %cst_21 : f32 to vector<384x96xf32>
    %89 = arith.cmpf ogt, %87, %88 : vector<384x96xf32>
    %cst_22 = arith.constant 2.000000e-01 : f32
    %90 = vector.broadcast %cst_22 : f32 to vector<384x96xf32>
    %91 = arith.mulf %90, %87 : vector<384x96xf32>
    %92 = arith.select %89, %87, %91 : vector<384x96xi1>, vector<384x96xf32>
    %93 = tpu.iota {dimensions = array<i32: 0>} : vector<384x96xi32>
    %94 = arith.sitofp %93 : vector<384x96xi32> to vector<384x96xf32>
    %95 = tpu.iota {dimensions = array<i32: 1>} : vector<384x96xi32>
    %96 = arith.sitofp %95 : vector<384x96xi32> to vector<384x96xf32>
    %cst_23 = arith.constant 5.000000e-01 : f32
    %97 = vector.broadcast %cst_23 : f32 to vector<384x96xf32>
    %98 = arith.addf %94, %97 : vector<384x96xf32>
    %cst_24 = arith.constant 0.010416667 : f32
    %99 = vector.broadcast %cst_24 : f32 to vector<384x96xf32>
    %100 = arith.mulf %98, %99 : vector<384x96xf32>
    %101 = math.floor %100 : vector<384x96xf32>
    %cst_25 = arith.constant 9.600000e+01 : f32
    %102 = vector.broadcast %cst_25 : f32 to vector<384x96xf32>
    %103 = arith.mulf %102, %101 : vector<384x96xf32>
    %104 = arith.subf %94, %103 : vector<384x96xf32>
    %cst_26 = arith.constant 5.000000e-01 : f32
    %105 = vector.broadcast %cst_26 : f32 to vector<384x96xf32>
    %106 = arith.addf %104, %105 : vector<384x96xf32>
    %cst_27 = arith.constant 0.0833333358 : f32
    %107 = vector.broadcast %cst_27 : f32 to vector<384x96xf32>
    %108 = arith.mulf %106, %107 : vector<384x96xf32>
    %109 = math.floor %108 : vector<384x96xf32>
    %cst_28 = arith.constant 5.000000e-01 : f32
    %110 = vector.broadcast %cst_28 : f32 to vector<384x96xf32>
    %111 = arith.addf %96, %110 : vector<384x96xf32>
    %cst_29 = arith.constant 0.0833333358 : f32
    %112 = vector.broadcast %cst_29 : f32 to vector<384x96xf32>
    %113 = arith.mulf %111, %112 : vector<384x96xf32>
    %114 = math.floor %113 : vector<384x96xf32>
    %115 = arith.cmpf oeq, %109, %114 : vector<384x96xf32>
    %cst_30 = arith.constant -1.000000e+30 : f32
    %116 = vector.broadcast %cst_30 : f32 to vector<384x96xf32>
    %117 = arith.select %115, %92, %116 : vector<384x96xi1>, vector<384x96xf32>
    %cst_31 = arith.constant dense<0xFF800000> : vector<384xf32>
    %118 = vector.multi_reduction <maximumf>, %117, %cst_31 [1] : vector<384x96xf32> to vector<384xf32>
    %119 = vector.shape_cast %118 : vector<384xf32> to vector<384x1xf32>
    %120 = vector.broadcast %119 : vector<384x1xf32> to vector<384x96xf32>
    %121 = arith.subf %117, %120 : vector<384x96xf32>
    %122 = math.exp %121 : vector<384x96xf32>
    %cst_32 = arith.constant dense<0.000000e+00> : vector<384xf32>
    %123 = vector.multi_reduction <add>, %122, %cst_32 [1] : vector<384x96xf32> to vector<384xf32>
    %124 = vector.shape_cast %123 : vector<384xf32> to vector<384x1xf32>
    %cst_33 = arith.constant 1.000000e+00 : f32
    %125 = vector.broadcast %cst_33 : f32 to vector<384x1xf32>
    %126 = arith.divf %125, %124 : vector<384x1xf32>
    %127 = vector.broadcast %126 : vector<384x1xf32> to vector<384x96xf32>
    %128 = arith.mulf %122, %127 : vector<384x96xf32>
    %cst_34 = arith.constant dense<0.000000e+00> : vector<384x32xf32>
    %129 = tpu.matmul %128, %0, %cst_34 {dimension_numbers = #tpu.dot_dimension_numbers<[1], [0], [0], [1], [0, 0, 1, 1], [], []>} : vector<384x96xf32>, vector<96x32xf32>, vector<384x32xf32> -> vector<384x32xf32>
    %130 = vector.extract_strided_slice %129 {offsets = [0, 0], sizes = [96, 32], strides = [1, 1]} : vector<384x32xf32> to vector<96x32xf32>
    %131 = vector.extract_strided_slice %4 {offsets = [0, 0], sizes = [32, 32], strides = [1, 1]} : vector<128x32xf32> to vector<32x32xf32>
    %cst_35 = arith.constant dense<0.000000e+00> : vector<96x32xf32>
    %132 = tpu.matmul %130, %131, %cst_35 {dimension_numbers = #tpu.dot_dimension_numbers<[1], [0], [0], [1], [0, 0, 1, 1], [], []>} : vector<96x32xf32>, vector<32x32xf32>, vector<96x32xf32> -> vector<96x32xf32>
    %133 = vector.extract_strided_slice %129 {offsets = [96, 0], sizes = [96, 32], strides = [1, 1]} : vector<384x32xf32> to vector<96x32xf32>
    %134 = vector.extract_strided_slice %4 {offsets = [32, 0], sizes = [32, 32], strides = [1, 1]} : vector<128x32xf32> to vector<32x32xf32>
    %cst_36 = arith.constant dense<0.000000e+00> : vector<96x32xf32>
    %135 = tpu.matmul %133, %134, %cst_36 {dimension_numbers = #tpu.dot_dimension_numbers<[1], [0], [0], [1], [0, 0, 1, 1], [], []>} : vector<96x32xf32>, vector<32x32xf32>, vector<96x32xf32> -> vector<96x32xf32>
    %136 = arith.addf %132, %135 : vector<96x32xf32>
    %137 = vector.extract_strided_slice %129 {offsets = [192, 0], sizes = [96, 32], strides = [1, 1]} : vector<384x32xf32> to vector<96x32xf32>
    %138 = vector.extract_strided_slice %4 {offsets = [64, 0], sizes = [32, 32], strides = [1, 1]} : vector<128x32xf32> to vector<32x32xf32>
    %cst_37 = arith.constant dense<0.000000e+00> : vector<96x32xf32>
    %139 = tpu.matmul %137, %138, %cst_37 {dimension_numbers = #tpu.dot_dimension_numbers<[1], [0], [0], [1], [0, 0, 1, 1], [], []>} : vector<96x32xf32>, vector<32x32xf32>, vector<96x32xf32> -> vector<96x32xf32>
    %140 = arith.addf %136, %139 : vector<96x32xf32>
    %141 = vector.extract_strided_slice %129 {offsets = [288, 0], sizes = [96, 32], strides = [1, 1]} : vector<384x32xf32> to vector<96x32xf32>
    %142 = vector.extract_strided_slice %4 {offsets = [96, 0], sizes = [32, 32], strides = [1, 1]} : vector<128x32xf32> to vector<32x32xf32>
    %cst_38 = arith.constant dense<0.000000e+00> : vector<96x32xf32>
    %143 = tpu.matmul %141, %142, %cst_38 {dimension_numbers = #tpu.dot_dimension_numbers<[1], [0], [0], [1], [0, 0, 1, 1], [], []>} : vector<96x32xf32>, vector<32x32xf32>, vector<96x32xf32> -> vector<96x32xf32>
    %144 = arith.addf %140, %143 : vector<96x32xf32>
    %cst_39 = arith.constant 2.500000e-01 : f32
    %145 = vector.broadcast %cst_39 : f32 to vector<96x32xf32>
    %146 = arith.mulf %144, %145 : vector<96x32xf32>
    %147 = vector.broadcast %15 : vector<1x32xf32> to vector<96x32xf32>
    %148 = arith.addf %146, %147 : vector<96x32xf32>
    %cst_40 = arith.constant 0.000000e+00 : f32
    %149 = vector.broadcast %cst_40 : f32 to vector<96x32xf32>
    %150 = arith.cmpf ogt, %148, %149 : vector<96x32xf32>
    %cst_41 = arith.constant 2.000000e-01 : f32
    %151 = vector.broadcast %cst_41 : f32 to vector<96x32xf32>
    %152 = arith.mulf %151, %148 : vector<96x32xf32>
    %153 = arith.select %150, %148, %152 : vector<96x32xi1>, vector<96x32xf32>
    %154 = vector.extract_strided_slice %153 {offsets = [0, 0], sizes = [96, 12], strides = [1, 1]} : vector<96x32xf32> to vector<96x12xf32>
    %155 = tpu.transpose %154, [1, 0] : vector<96x12xf32> -> vector<12x96xf32>
    %156 = arith.addf %155, %64 : vector<12x96xf32>
    %cst_42 = arith.constant dense<0.000000e+00> : vector<96x96xf32>
    %157 = tpu.matmul %49, %156, %cst_42 {dimension_numbers = #tpu.dot_dimension_numbers<[1], [0], [0], [1], [0, 0, 1, 1], [], []>} : vector<96x12xf32>, vector<12x96xf32>, vector<96x96xf32> -> vector<96x96xf32>
    %cst_43 = arith.constant 0.000000e+00 : f32
    %158 = vector.broadcast %cst_43 : f32 to vector<96x96xf32>
    %159 = arith.select %34, %157, %158 : vector<96x96xi1>, vector<96x96xf32>
    %cst_44 = arith.constant dense<0.000000e+00> : vector<64x96xf32>
    %160 = tpu.matmul %7, %1, %cst_44 {dimension_numbers = #tpu.dot_dimension_numbers<[1], [0], [0], [1], [0, 0, 1, 1], [], []>} : vector<64x2xf32>, vector<2x96xf32>, vector<64x96xf32> -> vector<64x96xf32>
    %161 = vector.broadcast %8 : vector<64x1xf32> to vector<64x96xf32>
    %162 = arith.addf %160, %161 : vector<64x96xf32>
    %cst_45 = arith.constant 0.000000e+00 : f32
    %163 = vector.broadcast %cst_45 : f32 to vector<64x96xf32>
    %164 = arith.maximumf %162, %163 : vector<64x96xf32>
    %cst_46 = arith.constant dense<0.000000e+00> : vector<64x96xf32>
    %165 = tpu.matmul %3, %164, %cst_46 {dimension_numbers = #tpu.dot_dimension_numbers<[1], [0], [0], [1], [0, 0, 1, 1], [], []>} : vector<64x64xf32>, vector<64x96xf32>, vector<64x96xf32> -> vector<64x96xf32>
    %166 = vector.broadcast %9 : vector<64x1xf32> to vector<64x96xf32>
    %167 = arith.addf %165, %166 : vector<64x96xf32>
    %cst_47 = arith.constant dense<0.000000e+00> : vector<64x96xf32>
    %168 = tpu.matmul %167, %159, %cst_47 {dimension_numbers = #tpu.dot_dimension_numbers<[1], [0], [0], [1], [0, 0, 1, 1], [], []>} : vector<64x96xf32>, vector<96x96xf32>, vector<64x96xf32> -> vector<64x96xf32>
    %cst_48 = arith.constant dense<0.000000e+00> : vector<64xf32>
    %169 = vector.multi_reduction <add>, %168, %cst_48 [1] : vector<64x96xf32> to vector<64xf32>
    %170 = vector.shape_cast %169 : vector<64xf32> to vector<64x1xf32>
    %cst_49 = arith.constant 0.010416667 : f32
    %171 = vector.broadcast %cst_49 : f32 to vector<64x1xf32>
    %172 = arith.mulf %170, %171 : vector<64x1xf32>
    %173 = vector.broadcast %172 : vector<64x1xf32> to vector<64x96xf32>
    %174 = arith.subf %168, %173 : vector<64x96xf32>
    %175 = arith.mulf %174, %174 : vector<64x96xf32>
    %cst_50 = arith.constant dense<0.000000e+00> : vector<64xf32>
    %176 = vector.multi_reduction <add>, %175, %cst_50 [1] : vector<64x96xf32> to vector<64xf32>
    %177 = vector.shape_cast %176 : vector<64xf32> to vector<64x1xf32>
    %cst_51 = arith.constant 0.010416667 : f32
    %178 = vector.broadcast %cst_51 : f32 to vector<64x1xf32>
    %179 = arith.mulf %177, %178 : vector<64x1xf32>
    %cst_52 = arith.constant 9.99999974E-6 : f32
    %180 = vector.broadcast %cst_52 : f32 to vector<64x1xf32>
    %181 = arith.addf %179, %180 : vector<64x1xf32>
    %182 = math.rsqrt %181 : vector<64x1xf32>
    %183 = vector.broadcast %182 : vector<64x1xf32> to vector<64x96xf32>
    %184 = arith.mulf %174, %183 : vector<64x96xf32>
    %185 = vector.broadcast %10 : vector<64x1xf32> to vector<64x96xf32>
    %186 = arith.mulf %184, %185 : vector<64x96xf32>
    %187 = vector.broadcast %11 : vector<64x1xf32> to vector<64x96xf32>
    %188 = arith.addf %186, %187 : vector<64x96xf32>
    %cst_53 = arith.constant 0.000000e+00 : f32
    %189 = vector.broadcast %cst_53 : f32 to vector<64x96xf32>
    %190 = arith.cmpf ogt, %188, %189 : vector<64x96xf32>
    %cst_54 = arith.constant 2.500000e-01 : f32
    %191 = vector.broadcast %cst_54 : f32 to vector<64x96xf32>
    %192 = arith.mulf %191, %188 : vector<64x96xf32>
    %193 = arith.select %190, %188, %192 : vector<64x96xi1>, vector<64x96xf32>
    %194 = tpu.iota {dimensions = array<i32: 1>} : vector<1x96xi32>
    %c12_i32 = arith.constant 12 : i32
    %195 = vector.broadcast %c12_i32 : i32 to vector<1x96xi32>
    %196 = arith.cmpi sge, %194, %195 : vector<1x96xi32>
    %c12_i32_55 = arith.constant 12 : i32
    %197 = tpu.dynamic_rotate %193 by %c12_i32_55 dim 1 : vector<64x96xf32>, i32 -> vector<64x96xf32>
    %cst_56 = arith.constant 0.000000e+00 : f32
    %198 = vector.shape_cast %196 : vector<1x96xi1> to vector<1x96xi1>
    %199 = vector.broadcast %198 : vector<1x96xi1> to vector<64x96xi1>
    %200 = vector.broadcast %cst_56 : f32 to vector<64x96xf32>
    %201 = arith.select %199, %197, %200 : vector<64x96xi1>, vector<64x96xf32>
    %c84_i32 = arith.constant 84 : i32
    %202 = vector.broadcast %c84_i32 : i32 to vector<1x96xi32>
    %203 = arith.cmpi slt, %194, %202 : vector<1x96xi32>
    %c84_i32_57 = arith.constant 84 : i32
    %204 = tpu.dynamic_rotate %193 by %c84_i32_57 dim 1 : vector<64x96xf32>, i32 -> vector<64x96xf32>
    %cst_58 = arith.constant 0.000000e+00 : f32
    %205 = vector.shape_cast %203 : vector<1x96xi1> to vector<1x96xi1>
    %206 = vector.broadcast %205 : vector<1x96xi1> to vector<64x96xi1>
    %207 = vector.broadcast %cst_58 : f32 to vector<64x96xf32>
    %208 = arith.select %206, %204, %207 : vector<64x96xi1>, vector<64x96xf32>
    %209 = tpu.concatenate %201, %193, %208 in 0 : vector<64x96xf32>, vector<64x96xf32>, vector<64x96xf32> -> vector<192x96xf32>
    %cst_59 = arith.constant dense<0.000000e+00> : vector<64x96xf32>
    %210 = tpu.matmul %2, %209, %cst_59 {dimension_numbers = #tpu.dot_dimension_numbers<[1], [0], [0], [1], [0, 0, 1, 1], [], []>} : vector<64x192xf32>, vector<192x96xf32>, vector<64x96xf32> -> vector<64x96xf32>
    %211 = vector.broadcast %12 : vector<64x1xf32> to vector<64x96xf32>
    %212 = arith.addf %210, %211 : vector<64x96xf32>
    %cst_60 = arith.constant dense<0.000000e+00> : vector<64xf32>
    %213 = vector.multi_reduction <add>, %212, %cst_60 [1] : vector<64x96xf32> to vector<64xf32>
    %214 = vector.shape_cast %213 : vector<64xf32> to vector<64x1xf32>
    %cst_61 = arith.constant 0.010416667 : f32
    %215 = vector.broadcast %cst_61 : f32 to vector<64x1xf32>
    %216 = arith.mulf %214, %215 : vector<64x1xf32>
    %217 = vector.broadcast %216 : vector<64x1xf32> to vector<64x96xf32>
    %218 = arith.subf %212, %217 : vector<64x96xf32>
    %219 = arith.mulf %218, %218 : vector<64x96xf32>
    %cst_62 = arith.constant dense<0.000000e+00> : vector<64xf32>
    %220 = vector.multi_reduction <add>, %219, %cst_62 [1] : vector<64x96xf32> to vector<64xf32>
    %221 = vector.shape_cast %220 : vector<64xf32> to vector<64x1xf32>
    %cst_63 = arith.constant 0.010416667 : f32
    %222 = vector.broadcast %cst_63 : f32 to vector<64x1xf32>
    %223 = arith.mulf %221, %222 : vector<64x1xf32>
    %cst_64 = arith.constant 9.99999974E-6 : f32
    %224 = vector.broadcast %cst_64 : f32 to vector<64x1xf32>
    %225 = arith.addf %223, %224 : vector<64x1xf32>
    %226 = math.rsqrt %225 : vector<64x1xf32>
    %227 = vector.broadcast %226 : vector<64x1xf32> to vector<64x96xf32>
    %228 = arith.mulf %218, %227 : vector<64x96xf32>
    %229 = vector.broadcast %13 : vector<64x1xf32> to vector<64x96xf32>
    %230 = arith.mulf %228, %229 : vector<64x96xf32>
    %231 = vector.broadcast %14 : vector<64x1xf32> to vector<64x96xf32>
    %232 = arith.addf %230, %231 : vector<64x96xf32>
    %233 = arith.addf %232, %164 : vector<64x96xf32>
    %c0_65 = arith.constant 0 : index
    %c0_66 = arith.constant 0 : index
    %234 = vector.load %arg2[%c0_65, %c0_66] : memref<96x768xf32, #tpu.memory_space<vmem>>, vector<96x768xf32>
    %cst_67 = arith.constant dense<0.000000e+00> : vector<64x768xf32>
    %235 = tpu.matmul %233, %234, %cst_67 {dimension_numbers = #tpu.dot_dimension_numbers<[1], [0], [0], [1], [0, 0, 1, 1], [], []>} : vector<64x96xf32>, vector<96x768xf32>, vector<64x768xf32> -> vector<64x768xf32>
    %236 = vector.extract_strided_slice %235 {offsets = [0, 0], sizes = [64, 144], strides = [1, 1]} : vector<64x768xf32> to vector<64x144xf32>
    %237 = vector.extract_strided_slice %235 {offsets = [0, 256], sizes = [64, 144], strides = [1, 1]} : vector<64x768xf32> to vector<64x144xf32>
    %238 = vector.extract_strided_slice %235 {offsets = [0, 512], sizes = [64, 144], strides = [1, 1]} : vector<64x768xf32> to vector<64x144xf32>
    %239 = tpu.iota {dimensions = array<i32: 0>} : vector<64x1xi32>
    %c1_i32 = arith.constant 1 : i32
    %240 = vector.broadcast %c1_i32 : i32 to vector<64x1xi32>
    %241 = arith.cmpi sge, %239, %240 : vector<64x1xi32>
    %c1_i32_68 = arith.constant 1 : i32
    %242 = tpu.dynamic_rotate %236 by %c1_i32_68 dim 0 : vector<64x144xf32>, i32 -> vector<64x144xf32>
    %cst_69 = arith.constant 0.000000e+00 : f32
    %243 = vector.shape_cast %241 : vector<64x1xi1> to vector<64x1xi1>
    %244 = vector.broadcast %243 : vector<64x1xi1> to vector<64x144xi1>
    %245 = vector.broadcast %cst_69 : f32 to vector<64x144xf32>
    %246 = arith.select %244, %242, %245 : vector<64x144xi1>, vector<64x144xf32>
    %c63_i32 = arith.constant 63 : i32
    %247 = vector.broadcast %c63_i32 : i32 to vector<64x1xi32>
    %248 = arith.cmpi slt, %239, %247 : vector<64x1xi32>
    %c63_i32_70 = arith.constant 63 : i32
    %249 = tpu.dynamic_rotate %238 by %c63_i32_70 dim 0 : vector<64x144xf32>, i32 -> vector<64x144xf32>
    %cst_71 = arith.constant 0.000000e+00 : f32
    %250 = vector.shape_cast %248 : vector<64x1xi1> to vector<64x1xi1>
    %251 = vector.broadcast %250 : vector<64x1xi1> to vector<64x144xi1>
    %252 = vector.broadcast %cst_71 : f32 to vector<64x144xf32>
    %253 = arith.select %251, %249, %252 : vector<64x144xi1>, vector<64x144xf32>
    %254 = arith.addf %246, %237 : vector<64x144xf32>
    %255 = arith.addf %254, %253 : vector<64x144xf32>
    %256 = vector.broadcast %16 : vector<1x144xf32> to vector<64x144xf32>
    %257 = arith.addf %255, %256 : vector<64x144xf32>
    %cst_72 = arith.constant 0.000000e+00 : f32
    %258 = vector.broadcast %cst_72 : f32 to vector<64x144xf32>
    %259 = arith.cmpf ogt, %257, %258 : vector<64x144xf32>
    %cst_73 = arith.constant 2.500000e-01 : f32
    %260 = vector.broadcast %cst_73 : f32 to vector<64x144xf32>
    %261 = arith.mulf %260, %257 : vector<64x144xf32>
    %262 = arith.select %259, %257, %261 : vector<64x144xi1>, vector<64x144xf32>
    %cst_74 = arith.constant dense<0.000000e+00> : vector<5x144xf32>
    %263 = tpu.matmul %18, %262, %cst_74 {dimension_numbers = #tpu.dot_dimension_numbers<[1], [0], [0], [1], [0, 0, 1, 1], [], []>} : vector<5x64xf32>, vector<64x144xf32>, vector<5x144xf32> -> vector<5x144xf32>
    %264 = vector.broadcast %19 : vector<5x1xf32> to vector<5x144xf32>
    %265 = arith.addf %263, %264 : vector<5x144xf32>
    %c0_75 = arith.constant 0 : index
    %c0_76 = arith.constant 0 : index
    %266 = vector.load %arg3[%c0_75, %c0_76] : memref<24x144xf32, #tpu.memory_space<vmem>>, vector<12x96xf32>
    tpu.vector_store %arg3[%c0_75, %c0_76], %156 {strides = array<i32>} : memref<24x144xf32, #tpu.memory_space<vmem>>, vector<12x96xf32>,
    %c16 = arith.constant 16 : index
    %c0_77 = arith.constant 0 : index
    %267 = vector.load %arg3[%c16, %c0_77] : memref<24x144xf32, #tpu.memory_space<vmem>>, vector<5x144xf32>
    tpu.vector_store %arg3[%c16, %c0_77], %265 {strides = array<i32>} : memref<24x144xf32, #tpu.memory_space<vmem>>, vector<5x144xf32>,
    return
  }
}

</mosaic_0001>

<llo_original>
// kernel: t_gnn_forward.1
$region0: #{t_gnn_forward.1}
  #allocation0 [shape = 'u32[]', space=smem, size = 0x4, offset = 0x4, fixed_abs, tag = 'smem constant byte address 0x4 - core index']
  #allocation1 [shape = 'u32[144,128]{1,0:T(1,128)}', space=vmem, size = 0x12000, scoped, tag = 'internal scratch']
  %s0 = inlined_call_operand.vmem [shape: f32[104,96], index: 0, kind: input, shape index: {}]
  %s1 = inlined_call_operand.vmem [shape: f32[368,192], index: 1, kind: input, shape index: {}]
  %s2 = inlined_call_operand.vmem [shape: f32[96,768], index: 2, kind: input, shape index: {}]
  %s3 = inlined_call_operand.vmem [shape: f32[24,144], index: 3, kind: output, shape index: {}]
  %s4 = sld [smem:[#allocation0]]
  $region22: #{t_gnn_forward.1} parent=0
    _
  %s6 = ssub.s32 1, %s4
  %s7 = scalar_select 0, %s6, %s4
  // Predicated region
  $region2: #{t_gnn_forward.1} parent=0 // pred_check
    _
  $region3: #{t_gnn_forward.1} parent=0 // pred_check_branch
    %9 = sbr.rel (0) target = $region5
  $region4: #{t_gnn_forward.1} parent=0 // pred_region
    _
  $region5: #{t_gnn_forward.1} parent=0 // pred_fallthru
    _
  // Predicated region
  $region6: #{t_gnn_forward.1} parent=0 // pred_check
    _
  $region7: #{t_gnn_forward.1} parent=0 // pred_check_branch
    %11 = sbr.rel (0) target = $region9
  $region8: #{t_gnn_forward.1} parent=0 // pred_region
    _
  $region9: #{t_gnn_forward.1} parent=0 // pred_fallthru
    _
  // Predicated region
  $region10: #{t_gnn_forward.1} parent=0 // pred_check
    _
  $region11: #{t_gnn_forward.1} parent=0 // pred_check_branch
    %13 = sbr.rel (0) target = $region13
  $region12: #{t_gnn_forward.1} parent=0 // pred_region
    _
  $region13: #{t_gnn_forward.1} parent=0 // pred_fallthru
    _
  %v14 = vld [vmem:[%s0] sm:$0xff]
  %v15 = vld [vmem:[%s0 + $0x8] sm:$0xff]
  %v16 = vld [vmem:[%s0 + $0x10] sm:$0xff]
  %v17 = vld [vmem:[%s0 + $0x18] sm:$0xff]
  %v18 = vld [vmem:[%s0 + $0x20] sm:$0xff]
  %v19 = vld [vmem:[%s0 + $0x28] sm:$0xff]
  %v20 = vld [vmem:[%s0 + $0x30] sm:$0xff]
  %v21 = vld [vmem:[%s0 + $0x38] sm:$0xff]
  %v22 = vld [vmem:[%s0 + $0x40] sm:$0xff]
  %v23 = vld [vmem:[%s0 + $0x48] sm:$0xff]
  %v24 = vld [vmem:[%s0 + $0x50] sm:$0xff]
  %v25 = vld [vmem:[%s0 + $0x58] sm:$0xff]
  %v26 = vld [vmem:[%s0 + $0x60] sm:$0x3]
  %v27 = vld [vmem:[%s1] sm:$0xff]
  %v28 = vld [vmem:[%s1 + $0x8] sm:$0xff]
  %v29 = vld [vmem:[%s1 + $0x10] sm:$0xff]
  %v30 = vld [vmem:[%s1 + $0x18] sm:$0xff]
  %v31 = vld [vmem:[%s1 + $0x20] sm:$0xff]
  %v32 = vld [vmem:[%s1 + $0x28] sm:$0xff]
  %v33 = vld [vmem:[%s1 + $0x30] sm:$0xff]
  %v34 = vld [vmem:[%s1 + $0x38] sm:$0xff]
  %v35 = vld [vmem:[%s1 + $0x40] sm:$0xff]
  %v36 = vld [vmem:[%s1 + $0x48] sm:$0xff]
  %v37 = vld [vmem:[%s1 + $0x50] sm:$0xff]
  %v38 = vld [vmem:[%s1 + $0x58] sm:$0xff]
  %v39 = vld [vmem:[%s1 + $0x60] sm:$0xff]
  %v40 = vld [vmem:[%s1 + $0x68] sm:$0xff]
  %v41 = vld [vmem:[%s1 + $0x70] sm:$0xff]
  %v42 = vld [vmem:[%s1 + $0x78] sm:$0xff]
  %v43 = vld [vmem:[%s1 + $0x80] sm:$0xff]
  %v44 = vld [vmem:[%s1 + $0x90] sm:$0xff]
  %v45 = vld [vmem:[%s1 + $0xa0] sm:$0xff]
  %v46 = vld [vmem:[%s1 + $0xb0] sm:$0xff]
  %v47 = vld [vmem:[%s1 + $0xc0] sm:$0xff]
  %v48 = vld [vmem:[%s1 + $0xd0] sm:$0xff]
  %v49 = vld [vmem:[%s1 + $0xe0] sm:$0xff]
  %v50 = vld [vmem:[%s1 + $0xf0] sm:$0xff]
  %v51 = vld [vmem:[%s1 + $0x100] sm:$0xff]
  %v52 = vld [vmem:[%s1 + $0x110] sm:$0xff]
  %v53 = vld [vmem:[%s1 + $0x120] sm:$0xff]
  %v54 = vld [vmem:[%s1 + $0x130] sm:$0xff]
  %v55 = vld [vmem:[%s1 + $0x140] sm:$0xff]
  %v56 = vld [vmem:[%s1 + $0x150] sm:$0xff]
  %v57 = vld [vmem:[%s1 + $0x160] sm:$0xff]
  %v58 = vld [vmem:[%s1 + $0x170] sm:$0xff]
  %v59 = vld [vmem:[%s1 + $0x180] sm:$0xff]
  %v60 = vld [vmem:[%s1 + $0x190] sm:$0xff]
  %v61 = vld [vmem:[%s1 + $0x1a0] sm:$0xff]
  %v62 = vld [vmem:[%s1 + $0x1b0] sm:$0xff]
  %v63 = vld [vmem:[%s1 + $0x1c0] sm:$0xff]
  %v64 = vld [vmem:[%s1 + $0x1d0] sm:$0xff]
  %v65 = vld [vmem:[%s1 + $0x1e0] sm:$0xff]
  %v66 = vld [vmem:[%s1 + $0x1f0] sm:$0xff]
  %v67 = vld [vmem:[%s1 + $0x200] sm:$0xff]
  %v68 = vld [vmem:[%s1 + $0x210] sm:$0xff]
  %v69 = vld [vmem:[%s1 + $0x220] sm:$0xff]
  %v70 = vld [vmem:[%s1 + $0x230] sm:$0xff]
  %v71 = vld [vmem:[%s1 + $0x240] sm:$0xff]
  %v72 = vld [vmem:[%s1 + $0x250] sm:$0xff]
  %v73 = vld [vmem:[%s1 + $0x260] sm:$0xff]
  %v74 = vld [vmem:[%s1 + $0x270] sm:$0xff]
  %v75 = vld [vmem:[%s1 + $0x280] sm:$0xff]
  %v76 = vld [vmem:[%s1 + $0x290] sm:$0xff]
  %v77 = vld [vmem:[%s1 + $0x2a0] sm:$0xff]
  %v78 = vld [vmem:[%s1 + $0x2b0] sm:$0xff]
  %v79 = vld [vmem:[%s1 + $0x2c0] ss:$0 sm:$0xff]
  %s80 = scalar_lea.vmem %s1, 705
  %v81 = vld [vmem:[%s80] ss:$8 sm:$0x3]
  %v82 = vld [vmem:[%s1 + $0x2d0] sm:$0x1f]
  %v83 = vlaneseq
  %v84 = vshrl.u32 %v83, 7
  %v85 = vadd.s32 %v84, 8
  %v86 = vadd.s32 %v84, 16
  %v87 = vadd.s32 %v84, 24
  %v88 = vadd.s32 %v84, 32
  %v89 = vadd.s32 %v84, 40
  %v90 = vadd.s32 %v84, 48
  %v91 = vadd.s32 %v84, 56
  %v92 = vadd.s32 %v84, 64
  %v93 = vadd.s32 %v84, 72
  %v94 = vadd.s32 %v84, 80
  %v95 = vadd.s32 %v84, 88
  %v96 = vcvt.s32.f32 %v84
  %v97 = vcvt.s32.f32 %v85
  %v98 = vcvt.s32.f32 %v86
  %v99 = vcvt.s32.f32 %v87
  %v100 = vcvt.s32.f32 %v88
  %v101 = vcvt.s32.f32 %v89
  %v102 = vcvt.s32.f32 %v90
  %v103 = vcvt.s32.f32 %v91
  %v104 = vcvt.s32.f32 %v92
  %v105 = vcvt.s32.f32 %v93
  %v106 = vcvt.s32.f32 %v94
  %v107 = vcvt.s32.f32 %v95
  %v108 = vlaneseq
  %v109 = vand.u32 %v108, 127
  %v110 = vcvt.s32.f32 %v109
  %v111 = vadd.f32 %v96, 0.5
  %v112 = vadd.f32 %v97, 0.5
  %v113 = vadd.f32 %v98, 0.5
  %v114 = vadd.f32 %v99, 0.5
  %v115 = vadd.f32 %v100, 0.5
  %v116 = vadd.f32 %v101, 0.5
  %v117 = vadd.f32 %v102, 0.5
  %v118 = vadd.f32 %v103, 0.5
  %v119 = vadd.f32 %v104, 0.5
  %v120 = vadd.f32 %v105, 0.5
  %v121 = vadd.f32 %v106, 0.5
  %v122 = vadd.f32 %v107, 0.5
  %v123 = vmul.f32 %v111, 0.083333336
  %v124 = vmul.f32 %v112, 0.083333336
  %v125 = vmul.f32 %v113, 0.083333336
  %v126 = vmul.f32 %v114, 0.083333336
  %v127 = vmul.f32 %v115, 0.083333336
  %v128 = vmul.f32 %v116, 0.083333336
  %v129 = vmul.f32 %v117, 0.083333336
  %v130 = vmul.f32 %v118, 0.083333336
  %v131 = vmul.f32 %v119, 0.083333336
  %v132 = vmul.f32 %v120, 0.083333336
  %v133 = vmul.f32 %v121, 0.083333336
  %v134 = vmul.f32 %v122, 0.083333336
  %v135 = vfloor.f32 %v123
  %v136 = vfloor.f32 %v124
  %v137 = vfloor.f32 %v125
  %v138 = vfloor.f32 %v126
  %v139 = vfloor.f32 %v127
  %v140 = vfloor.f32 %v128
  %v141 = vfloor.f32 %v129
  %v142 = vfloor.f32 %v130
  %v143 = vfloor.f32 %v131
  %v144 = vfloor.f32 %v132
  %v145 = vfloor.f32 %v133
  %v146 = vfloor.f32 %v134
  %v147 = vadd.f32 %v110, 0.5
  %v148 = vmul.f32 %v147, 0.083333336
  %v149 = vfloor.f32 %v148
  %vm150 = vcmp.eq.f32.partialorder %v135, %v149
  %vm151 = vcmp.eq.f32.partialorder %v136, %v149
  %vm152 = vcmp.eq.f32.partialorder %v137, %v149
  %vm153 = vcmp.eq.f32.partialorder %v138, %v149
  %vm154 = vcmp.eq.f32.partialorder %v139, %v149
  %vm155 = vcmp.eq.f32.partialorder %v140, %v149
  %vm156 = vcmp.eq.f32.partialorder %v141, %v149
  %vm157 = vcmp.eq.f32.partialorder %v142, %v149
  %vm158 = vcmp.eq.f32.partialorder %v143, %v149
  %vm159 = vcmp.eq.f32.partialorder %v144, %v149
  %vm160 = vcmp.eq.f32.partialorder %v145, %v149
  %vm161 = vcmp.eq.f32.partialorder %v146, %v149
  %v162 = vmul.f32 %v135, 12.0
  %v163 = vmul.f32 %v136, 12.0
  %v164 = vmul.f32 %v137, 12.0
  %v165 = vmul.f32 %v138, 12.0
  %v166 = vmul.f32 %v139, 12.0
  %v167 = vmul.f32 %v140, 12.0
  %v168 = vmul.f32 %v141, 12.0
  %v169 = vmul.f32 %v142, 12.0
  %v170 = vmul.f32 %v143, 12.0
  %v171 = vmul.f32 %v144, 12.0
  %v172 = vmul.f32 %v145, 12.0
  %v173 = vmul.f32 %v146, 12.0
  %v174 = vsub.f32 %v96, %v162
  %v175 = vsub.f32 %v97, %v163
  %v176 = vsub.f32 %v98, %v164
  %v177 = vsub.f32 %v99, %v165
  %v178 = vsub.f32 %v100, %v166
  %v179 = vsub.f32 %v101, %v167
  %v180 = vsub.f32 %v102, %v168
  %v181 = vsub.f32 %v103, %v169
  %v182 = vsub.f32 %v104, %v170
  %v183 = vsub.f32 %v105, %v171
  %v184 = vsub.f32 %v106, %v172
  %v185 = vsub.f32 %v107, %v173
  %vm186 = vcmp.eq.f32.partialorder %v174, %v110
  %vm187 = vcmp.eq.f32.partialorder %v175, %v110
  %vm188 = vcmp.eq.f32.partialorder %v176, %v110
  %vm189 = vcmp.eq.f32.partialorder %v177, %v110
  %vm190 = vcmp.eq.f32.partialorder %v178, %v110
  %vm191 = vcmp.eq.f32.partialorder %v179, %v110
  %vm192 = vcmp.eq.f32.partialorder %v180, %v110
  %vm193 = vcmp.eq.f32.partialorder %v181, %v110
  %vm194 = vcmp.eq.f32.partialorder %v182, %v110
  %vm195 = vcmp.eq.f32.partialorder %v183, %v110
  %vm196 = vcmp.eq.f32.partialorder %v184, %v110
  %vm197 = vcmp.eq.f32.partialorder %v185, %v110
  %v198 = vsel %vm186, 1, 0
  %v199 = vsel %vm187, 1, 0
  %v200 = vsel %vm188, 1, 0
  %v201 = vsel %vm189, 1, 0
  %v202 = vsel %vm190, 1, 0
  %v203 = vsel %vm191, 1, 0
  %v204 = vsel %vm192, 1, 0
  %v205 = vsel %vm193, 1, 0
  %v206 = vsel %vm194, 1, 0
  %v207 = vsel %vm195, 1, 0
  %v208 = vsel %vm196, 1, 0
  %v209 = vsel %vm197, 1, 0
  %v210 = vcvt.s32.f32 %v198
  %v211 = vcvt.s32.f32 %v199
  %v212 = vcvt.s32.f32 %v200
  %v213 = vcvt.s32.f32 %v201
  %v214 = vcvt.s32.f32 %v202
  %v215 = vcvt.s32.f32 %v203
  %v216 = vcvt.s32.f32 %v204
  %v217 = vcvt.s32.f32 %v205
  %v218 = vcvt.s32.f32 %v206
  %v219 = vcvt.s32.f32 %v207
  %v220 = vcvt.s32.f32 %v208
  %v221 = vcvt.s32.f32 %v209
  %v222 = vmul.f32 %v149, 12.0
  %v223 = vsub.f32 %v110, %v222
  %vm224 = vcmp.eq.f32.partialorder %v96, %v223
  %vm225 = vcmp.eq.f32.partialorder %v97, %v223
  %v226 = vsel %vm224, 1, 0
  %v227 = vsel %vm225, 1, 0
  %v228 = vcvt.s32.f32 %v226
  %v229 = vcvt.s32.f32 %v227
  %vm230 = vcmask 261120
  %v232 = vsel %vm230, %v14, 0
  %v235 = vsel %vm230, %v15, 0
  %v238 = vsel %vm230, %v16, 0
  %v241 = vsel %vm230, %v17, 0
  %v244 = vsel %vm230, %v18, 0
  %v247 = vsel %vm230, %v19, 0
  %v250 = vsel %vm230, %v20, 0
  %v253 = vsel %vm230, %v21, 0
  %v256 = vsel %vm230, %v22, 0
  %v259 = vsel %vm230, %v23, 0
  %v262 = vsel %vm230, %v24, 0
  %v265 = vsel %vm230, %v25, 0
  %267 = vmatprep.subr.mxu0 0.0
  %268 = vmatpush1.msra.mxu0 %v67
  %269 = vmatprep.subr.mxu0 0.0
  %270 = vmatpush1.msra.mxu0 %v68
  %271 = vmatprep.subr.mxu0 0.0
  %272 = vmatpush1.msra.mxu0 %v69
  %273 = vmatprep.subr.mxu0 0.0
  %274 = vmatpush1.msra.mxu0 %v70
  %275 = vmatprep.subr.mxu0 0.0
  %276 = vmatpush1.msra.mxu0 0.0
  %277 = vmatprep.subr.mxu0 0.0
  %278 = vmatpush1.msra.mxu0 0.0
  %279 = vmatprep.subr.mxu0 0.0
  %280 = vmatpush1.msra.mxu0 0.0
  %281 = vmatprep.subr.mxu0 0.0
  %282 = vmatpush1.msra.mxu0 0.0
  %283 = vmatprep.subr.mxu0 0.0
  %284 = vmatpush1.msra.mxu0 0.0
  %285 = vmatprep.subr.mxu0 0.0
  %286 = vmatpush1.msra.mxu0 0.0
  %287 = vmatprep.subr.mxu0 0.0
  %288 = vmatpush1.msra.mxu0 0.0
  %289 = vmatprep.subr.mxu0 0.0
  %290 = vmatpush1.msra.mxu0 0.0
  %291 = vmatprep.subr.mxu0 0.0
  %292 = vmatpush1.msra.mxu0 0.0
  %293 = vmatprep.subr.mxu0 0.0
  %294 = vmatpush1.msra.mxu0 0.0
  %295 = vmatprep.subr.mxu0 0.0
  %296 = vmatpush1.msra.mxu0 0.0
  %297 = vmatprep.subr.mxu0 0.0
  %298 = vmatpush1.msra.mxu0 0.0
  %299 = vmatprep.subr.mxu0 0.0
  %300 = vmatpush1.msra.mxu0 0.0
  %301 = vmatprep.subr.mxu0 0.0
  %302 = vmatpush1.msra.mxu0 0.0
  %303 = vmatprep.subr.mxu0 0.0
  %304 = vmatpush1.msra.mxu0 0.0
  %305 = vmatprep.subr.mxu0 0.0
  %306 = vmatpush1.msra.mxu0 0.0
  %307 = vmatprep.subr.mxu0 0.0
  %308 = vmatpush1.msra.mxu0 0.0
  %309 = vmatprep.subr.mxu0 0.0
  %310 = vmatpush1.msra.mxu0 0.0
  %311 = vmatprep.subr.mxu0 0.0
  %312 = vmatpush1.msra.mxu0 0.0
  %313 = vmatprep.subr.mxu0 0.0
  %314 = vmatpush1.msra.mxu0 0.0
  %315 = vmatprep.subr.mxu0 0.0
  %316 = vmatpush1.msra.mxu0 0.0
  %317 = vmatprep.subr.mxu0 0.0
  %318 = vmatpush1.msra.mxu0 0.0
  %319 = vmatprep.subr.mxu0 0.0
  %320 = vmatpush1.msra.mxu0 0.0
  %321 = vmatprep.subr.mxu0 0.0
  %322 = vmatpush1.msra.mxu0 0.0
  %323 = vmatprep.subr.mxu0 0.0
  %324 = vmatpush1.msra.mxu0 0.0
  %325 = vmatprep.subr.mxu0 0.0
  %326 = vmatpush1.msra.mxu0 0.0
  %327 = vmatprep.subr.mxu0 0.0
  %328 = vmatpush1.msra.mxu0 0.0
  %329 = vmatprep.subr.mxu0 0.0
  %330 = vmatpush1.msra.mxu0 0.0
  %331 = vmatprep.mubr.f32.mxu0 0.0
  %332 = vmatmul.mubr.f32.gmra.mrb[0].mxu0 %v232
  %v333 = vpop.f32.mrb[0].mxu0
  %v334 = vadd.f32 0.0, %v333
  %v335 = vpop.f32.mrb[0].mxu0
  %336 = vmatprep.mubr.f32.mxu0 0.0
  %337 = vmatmul.mubr.f32.gmra.mrb[0].mxu0 %v235
  %v338 = vpop.f32.mrb[0].mxu0
  %v339 = vadd.f32 0.0, %v338
  %v340 = vpop.f32.mrb[0].mxu0
  %341 = vmatprep.mubr.f32.mxu0 0.0
  %342 = vmatmul.mubr.f32.gmra.mrb[0].mxu0 %v238
  %v343 = vpop.f32.mrb[0].mxu0
  %v344 = vadd.f32 0.0, %v343
  %v345 = vpop.f32.mrb[0].mxu0
  %346 = vmatprep.mubr.f32.mxu0 0.0
  %347 = vmatmul.mubr.f32.gmra.mrb[0].mxu0 %v241
  %v348 = vpop.f32.mrb[0].mxu0
  %v349 = vadd.f32 0.0, %v348
  %v350 = vpop.f32.mrb[0].mxu0
  %351 = vmatprep.mubr.f32.mxu0 0.0
  %352 = vmatmul.mubr.f32.gmra.mrb[0].mxu0 %v244
  %v353 = vpop.f32.mrb[0].mxu0
  %v354 = vadd.f32 0.0, %v353
  %v355 = vpop.f32.mrb[0].mxu0
  %356 = vmatprep.mubr.f32.mxu0 0.0
  %357 = vmatmul.mubr.f32.gmra.mrb[0].mxu0 %v247
  %v358 = vpop.f32.mrb[0].mxu0
  %v359 = vadd.f32 0.0, %v358
  %v360 = vpop.f32.mrb[0].mxu0
  %361 = vmatprep.mubr.f32.mxu0 0.0
  %362 = vmatmul.mubr.f32.gmra.mrb[0].mxu0 %v250
  %v363 = vpop.f32.mrb[0].mxu0
  %v364 = vadd.f32 0.0, %v363
  %v365 = vpop.f32.mrb[0].mxu0
  %366 = vmatprep.mubr.f32.mxu0 0.0
  %367 = vmatmul.mubr.f32.gmra.mrb[0].mxu0 %v253
  %v368 = vpop.f32.mrb[0].mxu0
  %v369 = vadd.f32 0.0, %v368
  %v370 = vpop.f32.mrb[0].mxu0
  %371 = vmatprep.mubr.f32.mxu0 0.0
  %372 = vmatmul.mubr.f32.gmra.mrb[0].mxu0 %v256
  %v373 = vpop.f32.mrb[0].mxu0
  %v374 = vadd.f32 0.0, %v373
  %v375 = vpop.f32.mrb[0].mxu0
  %376 = vmatprep.mubr.f32.mxu0 0.0
  %377 = vmatmul.mubr.f32.gmra.mrb[0].mxu0 %v259
  %v378 = vpop.f32.mrb[0].mxu0
  %v379 = vadd.f32 0.0, %v378
  %v380 = vpop.f32.mrb[0].mxu0
  %381 = vmatprep.mubr.f32.mxu0 0.0
  %382 = vmatmul.mubr.f32.gmra.mrb[0].mxu0 %v262
  %v383 = vpop.f32.mrb[0].mxu0
  %v384 = vadd.f32 0.0, %v383
  %v385 = vpop.f32.mrb[0].mxu0
  %386 = vmatprep.mubr.f32.mxu0 0.0
  %387 = vmatmul.mubr.f32.gmra.mrb[0].mxu0 %v265
  %v388 = vpop.f32.mrb[0].mxu0
  %v389 = vadd.f32 0.0, %v388
  %v390 = vpop.f32.mrb[0].mxu0
  %391 = vdwg.mxu0
  %392 = vxpose.xlu0.b32.start [1/16] %v334, 128
  %393 = vxpose.xlu0.b32.cont [2/16] %v339, 128
  %394 = vxpose.xlu0.b32.cont [3/16] %v344, 128
  %395 = vxpose.xlu0.b32.cont [4/16] %v349, 128
  %396 = vxpose.xlu0.b32.cont [5/16] %v354, 128
  %397 = vxpose.xlu0.b32.cont [6/16] %v359, 128
  %398 = vxpose.xlu0.b32.cont [7/16] %v364, 128
  %399 = vxpose.xlu0.b32.cont [8/16] %v369, 128
  %400 = vxpose.xlu0.b32.cont [9/16] %v374, 128
  %401 = vxpose.xlu0.b32.cont [10/16] %v379, 128
  %402 = vxpose.xlu0.b32.cont [11/16] %v384, 128
  %403 = vxpose.xlu0.b32.cont [12/16] %v389, 128
  %404 = vxpose.xlu0.b32.cont [13/16] 0.0, 128
  %405 = vxpose.xlu0.b32.cont [14/16] 0.0, 128
  %406 = vxpose.xlu0.b32.cont [15/16] 0.0, 128
  %407 = vxpose.xlu0.b32.end [16/16] 0.0, 128
  %v408 = vpop.trf.xlu0
  %v409 = vpop.trf.xlu0
  %v410 = vpop.trf.xlu0
  %v411 = vpop.trf.xlu0
  %v412 = vpop.trf.xlu0
  %v413 = vpop.trf.xlu0
  %v414 = vpop.trf.xlu0
  %v415 = vpop.trf.xlu0
  %v416 = vpop.trf.xlu0
  %v417 = vpop.trf.xlu0
  %v418 = vpop.trf.xlu0
  %v419 = vpop.trf.xlu0
  %v420 = vpop.trf.xlu0
  %v421 = vpop.trf.xlu0
  %v422 = vpop.trf.xlu0
  %v423 = vpop.trf.xlu0
  %425 = vset.pattern.permute.xlu0 0
  %426 = vperm.xlu0 %425, %v334
  %v427 = vpop.permute.xlu0 %426
  %430 = vset.pattern.permute.xlu0 0
  %431 = vperm.xlu0 %430, %v339
  %v432 = vpop.permute.xlu0 %431
  %435 = vset.pattern.permute.xlu0 0
  %436 = vperm.xlu0 %435, %v344
  %v437 = vpop.permute.xlu0 %436
  %440 = vset.pattern.permute.xlu0 0
  %441 = vperm.xlu0 %440, %v349
  %v442 = vpop.permute.xlu0 %441
  %445 = vset.pattern.permute.xlu0 0
  %446 = vperm.xlu0 %445, %v354
  %v447 = vpop.permute.xlu0 %446
  %450 = vset.pattern.permute.xlu0 0
  %451 = vperm.xlu0 %450, %v359
  %v452 = vpop.permute.xlu0 %451
  %455 = vset.pattern.permute.xlu0 0
  %456 = vperm.xlu0 %455, %v364
  %v457 = vpop.permute.xlu0 %456
  %460 = vset.pattern.permute.xlu0 0
  %461 = vperm.xlu0 %460, %v369
  %v462 = vpop.permute.xlu0 %461
  %465 = vset.pattern.permute.xlu0 0
  %466 = vperm.xlu0 %465, %v374
  %v467 = vpop.permute.xlu0 %466
  %470 = vset.pattern.permute.xlu0 0
  %471 = vperm.xlu0 %470, %v379
  %v472 = vpop.permute.xlu0 %471
  %475 = vset.pattern.permute.xlu0 0
  %476 = vperm.xlu0 %475, %v384
  %v477 = vpop.permute.xlu0 %476
  %480 = vset.pattern.permute.xlu0 0
  %481 = vperm.xlu0 %480, %v389
  %v482 = vpop.permute.xlu0 %481
  %v484 = vlaneseq
  %v485 = vshrl.u32 %v484, 7
  %v486 = vsub.s32 4, %v485
  %v487 = vrot.slane %v408, %v486
  %v488 = vadd.f32 %v427, %v487
  %v489 = vadd.f32 %v432, %v487
  %v490 = vadd.f32 %v437, %v487
  %v491 = vadd.f32 %v442, %v487
  %v492 = vadd.f32 %v447, %v487
  %v493 = vadd.f32 %v452, %v487
  %v494 = vadd.f32 %v457, %v487
  %v495 = vadd.f32 %v462, %v487
  %v496 = vadd.f32 %v467, %v487
  %v497 = vadd.f32 %v472, %v487
  %v498 = vadd.f32 %v477, %v487
  %v499 = vadd.f32 %v482, %v487
  %500 = vset.pattern.permute.xlu0 1
  %501 = vperm.xlu0 %500, %v334
  %v502 = vpop.permute.xlu0 %501
  %504 = vset.pattern.permute.xlu0 1
  %505 = vperm.xlu0 %504, %v339
  %v506 = vpop.permute.xlu0 %505
  %508 = vset.pattern.permute.xlu0 1
  %509 = vperm.xlu0 %508, %v344
  %v510 = vpop.permute.xlu0 %509
  %512 = vset.pattern.permute.xlu0 1
  %513 = vperm.xlu0 %512, %v349
  %v514 = vpop.permute.xlu0 %513
  %516 = vset.pattern.permute.xlu0 1
  %517 = vperm.xlu0 %516, %v354
  %v518 = vpop.permute.xlu0 %517
  %520 = vset.pattern.permute.xlu0 1
  %521 = vperm.xlu0 %520, %v359
  %v522 = vpop.permute.xlu0 %521
  %524 = vset.pattern.permute.xlu0 1
  %525 = vperm.xlu0 %524, %v364
  %v526 = vpop.permute.xlu0 %525
  %528 = vset.pattern.permute.xlu0 1
  %529 = vperm.xlu0 %528, %v369
  %v530 = vpop.permute.xlu0 %529
  %532 = vset.pattern.permute.xlu0 1
  %533 = vperm.xlu0 %532, %v374
  %v534 = vpop.permute.xlu0 %533
  %536 = vset.pattern.permute.xlu0 1
  %537 = vperm.xlu0 %536, %v379
  %v538 = vpop.permute.xlu0 %537
  %540 = vset.pattern.permute.xlu0 1
  %541 = vperm.xlu0 %540, %v384
  %v542 = vpop.permute.xlu0 %541
  %544 = vset.pattern.permute.xlu0 1
  %545 = vperm.xlu0 %544, %v389
  %v546 = vpop.permute.xlu0 %545
  %v548 = vlaneseq
  %v549 = vshrl.u32 %v548, 7
  %v550 = vsub.s32 5, %v549
  %v551 = vrot.slane %v408, %v550
  %v552 = vadd.f32 %v502, %v551
  %v553 = vadd.f32 %v506, %v551
  %v554 = vadd.f32 %v510, %v551
  %v555 = vadd.f32 %v514, %v551
  %v556 = vadd.f32 %v518, %v551
  %v557 = vadd.f32 %v522, %v551
  %v558 = vadd.f32 %v526, %v551
  %v559 = vadd.f32 %v530, %v551
  %v560 = vadd.f32 %v534, %v551
  %v561 = vadd.f32 %v538, %v551
  %v562 = vadd.f32 %v542, %v551
  %v563 = vadd.f32 %v546, %v551
  %564 = vset.pattern.permute.xlu0 2
  %565 = vperm.xlu0 %564, %v334
  %v566 = vpop.permute.xlu0 %565
  %568 = vset.pattern.permute.xlu0 2
  %569 = vperm.xlu0 %568, %v339
  %v570 = vpop.permute.xlu0 %569
  %572 = vset.pattern.permute.xlu0 2
  %573 = vperm.xlu0 %572, %v344
  %v574 = vpop.permute.xlu0 %573
  %576 = vset.pattern.permute.xlu0 2
  %577 = vperm.xlu0 %576, %v349
  %v578 = vpop.permute.xlu0 %577
  %580 = vset.pattern.permute.xlu0 2
  %581 = vperm.xlu0 %580, %v354
  %v582 = vpop.permute.xlu0 %581
  %584 = vset.pattern.permute.xlu0 2
  %585 = vperm.xlu0 %584, %v359
  %v586 = vpop.permute.xlu0 %585
  %588 = vset.pattern.permute.xlu0 2
  %589 = vperm.xlu0 %588, %v364
  %v590 = vpop.permute.xlu0 %589
  %592 = vset.pattern.permute.xlu0 2
  %593 = vperm.xlu0 %592, %v369
  %v594 = vpop.permute.xlu0 %593
  %596 = vset.pattern.permute.xlu0 2
  %597 = vperm.xlu0 %596, %v374
  %v598 = vpop.permute.xlu0 %597
  %600 = vset.pattern.permute.xlu0 2
  %601 = vperm.xlu0 %600, %v379
  %v602 = vpop.permute.xlu0 %601
  %604 = vset.pattern.permute.xlu0 2
  %605 = vperm.xlu0 %604, %v384
  %v606 = vpop.permute.xlu0 %605
  %608 = vset.pattern.permute.xlu0 2
  %609 = vperm.xlu0 %608, %v389
  %v610 = vpop.permute.xlu0 %609
  %v612 = vlaneseq
  %v613 = vshrl.u32 %v612, 7
  %v614 = vsub.s32 6, %v613
  %v615 = vrot.slane %v408, %v614
  %v616 = vadd.f32 %v566, %v615
  %v617 = vadd.f32 %v570, %v615
  %v618 = vadd.f32 %v574, %v615
  %v619 = vadd.f32 %v578, %v615
  %v620 = vadd.f32 %v582, %v615
  %v621 = vadd.f32 %v586, %v615
  %v622 = vadd.f32 %v590, %v615
  %v623 = vadd.f32 %v594, %v615
  %v624 = vadd.f32 %v598, %v615
  %v625 = vadd.f32 %v602, %v615
  %v626 = vadd.f32 %v606, %v615
  %v627 = vadd.f32 %v610, %v615
  %628 = vset.pattern.permute.xlu0 3
  %629 = vperm.xlu0 %628, %v334
  %v630 = vpop.permute.xlu0 %629
  %632 = vset.pattern.permute.xlu0 3
  %633 = vperm.xlu0 %632, %v339
  %v634 = vpop.permute.xlu0 %633
  %636 = vset.pattern.permute.xlu0 3
  %637 = vperm.xlu0 %636, %v344
  %v638 = vpop.permute.xlu0 %637
  %640 = vset.pattern.permute.xlu0 3
  %641 = vperm.xlu0 %640, %v349
  %v642 = vpop.permute.xlu0 %641
  %644 = vset.pattern.permute.xlu0 3
  %645 = vperm.xlu0 %644, %v354
  %v646 = vpop.permute.xlu0 %645
  %648 = vset.pattern.permute.xlu0 3
  %649 = vperm.xlu0 %648, %v359
  %v650 = vpop.permute.xlu0 %649
  %652 = vset.pattern.permute.xlu0 3
  %653 = vperm.xlu0 %652, %v364
  %v654 = vpop.permute.xlu0 %653
  %656 = vset.pattern.permute.xlu0 3
  %657 = vperm.xlu0 %656, %v369
  %v658 = vpop.permute.xlu0 %657
  %660 = vset.pattern.permute.xlu0 3
  %661 = vperm.xlu0 %660, %v374
  %v662 = vpop.permute.xlu0 %661
  %664 = vset.pattern.permute.xlu0 3
  %665 = vperm.xlu0 %664, %v379
  %v666 = vpop.permute.xlu0 %665
  %668 = vset.pattern.permute.xlu0 3
  %669 = vperm.xlu0 %668, %v384
  %v670 = vpop.permute.xlu0 %669
  %672 = vset.pattern.permute.xlu0 3
  %673 = vperm.xlu0 %672, %v389
  %v674 = vpop.permute.xlu0 %673
  %v676 = vlaneseq
  %v677 = vshrl.u32 %v676, 7
  %v678 = vsub.s32 7, %v677
  %v679 = vrot.slane %v408, %v678
  %v680 = vadd.f32 %v630, %v679
  %v681 = vadd.f32 %v634, %v679
  %v682 = vadd.f32 %v638, %v679
  %v683 = vadd.f32 %v642, %v679
  %v684 = vadd.f32 %v646, %v679
  %v685 = vadd.f32 %v650, %v679
  %v686 = vadd.f32 %v654, %v679
  %v687 = vadd.f32 %v658, %v679
  %v688 = vadd.f32 %v662, %v679
  %v689 = vadd.f32 %v666, %v679
  %v690 = vadd.f32 %v670, %v679
  %v691 = vadd.f32 %v674, %v679
  %vm692 = vcmp.gt.f32.partialorder %v488, 0.0
  %vm693 = vcmp.gt.f32.partialorder %v489, 0.0
  %vm694 = vcmp.gt.f32.partialorder %v490, 0.0
  %vm695 = vcmp.gt.f32.partialorder %v491, 0.0
  %vm696 = vcmp.gt.f32.partialorder %v492, 0.0
  %vm697 = vcmp.gt.f32.partialorder %v493, 0.0
  %vm698 = vcmp.gt.f32.partialorder %v494, 0.0
  %vm699 = vcmp.gt.f32.partialorder %v495, 0.0
  %vm700 = vcmp.gt.f32.partialorder %v496, 0.0
  %vm701 = vcmp.gt.f32.partialorder %v497, 0.0
  %vm702 = vcmp.gt.f32.partialorder %v498, 0.0
  %vm703 = vcmp.gt.f32.partialorder %v499, 0.0
  %vm704 = vcmp.gt.f32.partialorder %v552, 0.0
  %vm705 = vcmp.gt.f32.partialorder %v553, 0.0
  %vm706 = vcmp.gt.f32.partialorder %v554, 0.0
  %vm707 = vcmp.gt.f32.partialorder %v555, 0.0
  %vm708 = vcmp.gt.f32.partialorder %v556, 0.0
  %vm709 = vcmp.gt.f32.partialorder %v557, 0.0
  %vm710 = vcmp.gt.f32.partialorder %v558, 0.0
  %vm711 = vcmp.gt.f32.partialorder %v559, 0.0
  %vm712 = vcmp.gt.f32.partialorder %v560, 0.0
  %vm713 = vcmp.gt.f32.partialorder %v561, 0.0
  %vm714 = vcmp.gt.f32.partialorder %v562, 0.0
  %vm715 = vcmp.gt.f32.partialorder %v563, 0.0
  %vm716 = vcmp.gt.f32.partialorder %v616, 0.0
  %vm717 = vcmp.gt.f32.partialorder %v617, 0.0
  %vm718 = vcmp.gt.f32.partialorder %v618, 0.0
  %vm719 = vcmp.gt.f32.partialorder %v619, 0.0
  %vm720 = vcmp.gt.f32.partialorder %v620, 0.0
  %vm721 = vcmp.gt.f32.partialorder %v621, 0.0
  %vm722 = vcmp.gt.f32.partialorder %v622, 0.0
  %vm723 = vcmp.gt.f32.partialorder %v623, 0.0
  %vm724 = vcmp.gt.f32.partialorder %v624, 0.0
  %vm725 = vcmp.gt.f32.partialorder %v625, 0.0
  %vm726 = vcmp.gt.f32.partialorder %v626, 0.0
  %vm727 = vcmp.gt.f32.partialorder %v627, 0.0
  %vm728 = vcmp.gt.f32.partialorder %v680, 0.0
  %vm729 = vcmp.gt.f32.partialorder %v681, 0.0
  %vm730 = vcmp.gt.f32.partialorder %v682, 0.0
  %vm731 = vcmp.gt.f32.partialorder %v683, 0.0
  %vm732 = vcmp.gt.f32.partialorder %v684, 0.0
  %vm733 = vcmp.gt.f32.partialorder %v685, 0.0
  %vm734 = vcmp.gt.f32.partialorder %v686, 0.0
  %vm735 = vcmp.gt.f32.partialorder %v687, 0.0
  %vm736 = vcmp.gt.f32.partialorder %v688, 0.0
  %vm737 = vcmp.gt.f32.partialorder %v689, 0.0
  %vm738 = vcmp.gt.f32.partialorder %v690, 0.0
  %vm739 = vcmp.gt.f32.partialorder %v691, 0.0
  %v740 = vmul.f32 %v488, 0.2
  %v741 = vmul.f32 %v489, 0.2
  %v742 = vmul.f32 %v490, 0.2
  %v743 = vmul.f32 %v491, 0.2
  %v744 = vmul.f32 %v492, 0.2
  %v745 = vmul.f32 %v493, 0.2
  %v746 = vmul.f32 %v494, 0.2
  %v747 = vmul.f32 %v495, 0.2
  %v748 = vmul.f32 %v496, 0.2
  %v749 = vmul.f32 %v497, 0.2
  %v750 = vmul.f32 %v498, 0.2
  %v751 = vmul.f32 %v499, 0.2
  %v752 = vmul.f32 %v552, 0.2
  %v753 = vmul.f32 %v553, 0.2
  %v754 = vmul.f32 %v554, 0.2
  %v755 = vmul.f32 %v555, 0.2
  %v756 = vmul.f32 %v556, 0.2
  %v757 = vmul.f32 %v557, 0.2
  %v758 = vmul.f32 %v558, 0.2
  %v759 = vmul.f32 %v559, 0.2
  %v760 = vmul.f32 %v560, 0.2
  %v761 = vmul.f32 %v561, 0.2
  %v762 = vmul.f32 %v562, 0.2
  %v763 = vmul.f32 %v563, 0.2
  %v764 = vmul.f32 %v616, 0.2
  %v765 = vmul.f32 %v617, 0.2
  %v766 = vmul.f32 %v618, 0.2
  %v767 = vmul.f32 %v619, 0.2
  %v768 = vmul.f32 %v620, 0.2
  %v769 = vmul.f32 %v621, 0.2
  %v770 = vmul.f32 %v622, 0.2
  %v771 = vmul.f32 %v623, 0.2
  %v772 = vmul.f32 %v624, 0.2
  %v773 = vmul.f32 %v625, 0.2
  %v774 = vmul.f32 %v626, 0.2
  %v775 = vmul.f32 %v627, 0.2
  %v776 = vmul.f32 %v680, 0.2
  %v777 = vmul.f32 %v681, 0.2
  %v778 = vmul.f32 %v682, 0.2
  %v779 = vmul.f32 %v683, 0.2
  %v780 = vmul.f32 %v684, 0.2
  %v781 = vmul.f32 %v685, 0.2
  %v782 = vmul.f32 %v686, 0.2
  %v783 = vmul.f32 %v687, 0.2
  %v784 = vmul.f32 %v688, 0.2
  %v785 = vmul.f32 %v689, 0.2
  %v786 = vmul.f32 %v690, 0.2
  %v787 = vmul.f32 %v691, 0.2
  %v788 = vsel %vm692, %v488, %v740
  %v789 = vsel %vm693, %v489, %v741
  %v790 = vsel %vm694, %v490, %v742
  %v791 = vsel %vm695, %v491, %v743
  %v792 = vsel %vm696, %v492, %v744
  %v793 = vsel %vm697, %v493, %v745
  %v794 = vsel %vm698, %v494, %v746
  %v795 = vsel %vm699, %v495, %v747
  %v796 = vsel %vm700, %v496, %v748
  %v797 = vsel %vm701, %v497, %v749
  %v798 = vsel %vm702, %v498, %v750
  %v799 = vsel %vm703, %v499, %v751
  %v800 = vsel %vm704, %v552, %v752
  %v801 = vsel %vm705, %v553, %v753
  %v802 = vsel %vm706, %v554, %v754
  %v803 = vsel %vm707, %v555, %v755
  %v804 = vsel %vm708, %v556, %v756
  %v805 = vsel %vm709, %v557, %v757
  %v806 = vsel %vm710, %v558, %v758
  %v807 = vsel %vm711, %v559, %v759
  %v808 = vsel %vm712, %v560, %v760
  %v809 = vsel %vm713, %v561, %v761
  %v810 = vsel %vm714, %v562, %v762
  %v811 = vsel %vm715, %v563, %v763
  %v812 = vsel %vm716, %v616, %v764
  %v813 = vsel %vm717, %v617, %v765
  %v814 = vsel %vm718, %v618, %v766
  %v815 = vsel %vm719, %v619, %v767
  %v816 = vsel %vm720, %v620, %v768
  %v817 = vsel %vm721, %v621, %v769
  %v818 = vsel %vm722, %v622, %v770
  %v819 = vsel %vm723, %v623, %v771
  %v820 = vsel %vm724, %v624, %v772
  %v821 = vsel %vm725, %v625, %v773
  %v822 = vsel %vm726, %v626, %v774
  %v823 = vsel %vm727, %v627, %v775
  %v824 = vsel %vm728, %v680, %v776
  %v825 = vsel %vm729, %v681, %v777
  %v826 = vsel %vm730, %v682, %v778
  %v827 = vsel %vm731, %v683, %v779
  %v828 = vsel %vm732, %v684, %v780
  %v829 = vsel %vm733, %v685, %v781
  %v830 = vsel %vm734, %v686, %v782
  %v831 = vsel %vm735, %v687, %v783
  %v832 = vsel %vm736, %v688, %v784
  %v833 = vsel %vm737, %v689, %v785
  %v834 = vsel %vm738, %v690, %v786
  %v835 = vsel %vm739, %v691, %v787
  %v836 = vadd.s32 %v84, 96
  %v837 = vadd.s32 %v84, 104
  %v838 = vadd.s32 %v84, 112
  %v839 = vadd.s32 %v84, 120
  %v840 = vadd.s32 %v84, 128
  %v841 = vadd.s32 %v84, 136
  %v842 = vadd.s32 %v84, 144
  %v843 = vadd.s32 %v84, 152
  %v844 = vadd.s32 %v84, 160
  %v845 = vadd.s32 %v84, 168
  %v846 = vadd.s32 %v84, 176
  %v847 = vadd.s32 %v84, 184
  %v848 = vadd.s32 %v84, 192
  %v849 = vadd.s32 %v84, 200
  %v850 = vadd.s32 %v84, 208
  %v851 = vadd.s32 %v84, 216
  %v852 = vadd.s32 %v84, 224
  %v853 = vadd.s32 %v84, 232
  %v854 = vadd.s32 %v84, 240
  %v855 = vadd.s32 %v84, 248
  %v856 = vadd.s32 %v84, 256
  %v857 = vadd.s32 %v84, 264
  %v858 = vadd.s32 %v84, 272
  %v859 = vadd.s32 %v84, 280
  %v860 = vadd.s32 %v84, 288
  %v861 = vadd.s32 %v84, 296
  %v862 = vadd.s32 %v84, 304
  %v863 = vadd.s32 %v84, 312
  %v864 = vadd.s32 %v84, 320
  %v865 = vadd.s32 %v84, 328
  %v866 = vadd.s32 %v84, 336
  %v867 = vadd.s32 %v84, 344
  %v868 = vadd.s32 %v84, 352
  %v869 = vadd.s32 %v84, 360
  %v870 = vadd.s32 %v84, 368
  %v871 = vadd.s32 %v84, 376
  %v872 = vcvt.s32.f32 %v836
  %v873 = vcvt.s32.f32 %v837
  %v874 = vcvt.s32.f32 %v838
  %v875 = vcvt.s32.f32 %v839
  %v876 = vcvt.s32.f32 %v840
  %v877 = vcvt.s32.f32 %v841
  %v878 = vcvt.s32.f32 %v842
  %v879 = vcvt.s32.f32 %v843
  %v880 = vcvt.s32.f32 %v844
  %v881 = vcvt.s32.f32 %v845
  %v882 = vcvt.s32.f32 %v846
  %v883 = vcvt.s32.f32 %v847
  %v884 = vcvt.s32.f32 %v848
  %v885 = vcvt.s32.f32 %v849
  %v886 = vcvt.s32.f32 %v850
  %v887 = vcvt.s32.f32 %v851
  %v888 = vcvt.s32.f32 %v852
  %v889 = vcvt.s32.f32 %v853
  %v890 = vcvt.s32.f32 %v854
  %v891 = vcvt.s32.f32 %v855
  %v892 = vcvt.s32.f32 %v856
  %v893 = vcvt.s32.f32 %v857
  %v894 = vcvt.s32.f32 %v858
  %v895 = vcvt.s32.f32 %v859
  %v896 = vcvt.s32.f32 %v860
  %v897 = vcvt.s32.f32 %v861
  %v898 = vcvt.s32.f32 %v862
  %v899 = vcvt.s32.f32 %v863
  %v900 = vcvt.s32.f32 %v864
  %v901 = vcvt.s32.f32 %v865
  %v902 = vcvt.s32.f32 %v866
  %v903 = vcvt.s32.f32 %v867
  %v904 = vcvt.s32.f32 %v868
  %v905 = vcvt.s32.f32 %v869
  %v906 = vcvt.s32.f32 %v870
  %v907 = vcvt.s32.f32 %v871
  %v908 = vadd.f32 %v872, 0.5
  %v909 = vadd.f32 %v873, 0.5
  %v910 = vadd.f32 %v874, 0.5
  %v911 = vadd.f32 %v875, 0.5
  %v912 = vadd.f32 %v876, 0.5
  %v913 = vadd.f32 %v877, 0.5
  %v914 = vadd.f32 %v878, 0.5
  %v915 = vadd.f32 %v879, 0.5
  %v916 = vadd.f32 %v880, 0.5
  %v917 = vadd.f32 %v881, 0.5
  %v918 = vadd.f32 %v882, 0.5
  %v919 = vadd.f32 %v883, 0.5
  %v920 = vadd.f32 %v884, 0.5
  %v921 = vadd.f32 %v885, 0.5
  %v922 = vadd.f32 %v886, 0.5
  %v923 = vadd.f32 %v887, 0.5
  %v924 = vadd.f32 %v888, 0.5
  %v925 = vadd.f32 %v889, 0.5
  %v926 = vadd.f32 %v890, 0.5
  %v927 = vadd.f32 %v891, 0.5
  %v928 = vadd.f32 %v892, 0.5
  %v929 = vadd.f32 %v893, 0.5
  %v930 = vadd.f32 %v894, 0.5
  %v931 = vadd.f32 %v895, 0.5
  %v932 = vadd.f32 %v896, 0.5
  %v933 = vadd.f32 %v897, 0.5
  %v934 = vadd.f32 %v898, 0.5
  %v935 = vadd.f32 %v899, 0.5
  %v936 = vadd.f32 %v900, 0.5
  %v937 = vadd.f32 %v901, 0.5
  %v938 = vadd.f32 %v902, 0.5
  %v939 = vadd.f32 %v903, 0.5
  %v940 = vadd.f32 %v904, 0.5
  %v941 = vadd.f32 %v905, 0.5
  %v942 = vadd.f32 %v906, 0.5
  %v943 = vadd.f32 %v907, 0.5
  %v944 = vmul.f32 %v111, 0.010416667
  %v945 = vmul.f32 %v112, 0.010416667
  %v946 = vmul.f32 %v113, 0.010416667
  %v947 = vmul.f32 %v114, 0.010416667
  %v948 = vmul.f32 %v115, 0.010416667
  %v949 = vmul.f32 %v116, 0.010416667
  %v950 = vmul.f32 %v117, 0.010416667
  %v951 = vmul.f32 %v118, 0.010416667
  %v952 = vmul.f32 %v119, 0.010416667
  %v953 = vmul.f32 %v120, 0.010416667
  %v954 = vmul.f32 %v121, 0.010416667
  %v955 = vmul.f32 %v122, 0.010416667
  %v956 = vmul.f32 %v908, 0.010416667
  %v957 = vmul.f32 %v909, 0.010416667
  %v958 = vmul.f32 %v910, 0.010416667
  %v959 = vmul.f32 %v911, 0.010416667
  %v960 = vmul.f32 %v912, 0.010416667
  %v961 = vmul.f32 %v913, 0.010416667
  %v962 = vmul.f32 %v914, 0.010416667
  %v963 = vmul.f32 %v915, 0.010416667
  %v964 = vmul.f32 %v916, 0.010416667
  %v965 = vmul.f32 %v917, 0.010416667
  %v966 = vmul.f32 %v918, 0.010416667
  %v967 = vmul.f32 %v919, 0.010416667
  %v968 = vmul.f32 %v920, 0.010416667
  %v969 = vmul.f32 %v921, 0.010416667
  %v970 = vmul.f32 %v922, 0.010416667
  %v971 = vmul.f32 %v923, 0.010416667
  %v972 = vmul.f32 %v924, 0.010416667
  %v973 = vmul.f32 %v925, 0.010416667
  %v974 = vmul.f32 %v926, 0.010416667
  %v975 = vmul.f32 %v927, 0.010416667
  %v976 = vmul.f32 %v928, 0.010416667
  %v977 = vmul.f32 %v929, 0.010416667
  %v978 = vmul.f32 %v930, 0.010416667
  %v979 = vmul.f32 %v931, 0.010416667
  %v980 = vmul.f32 %v932, 0.010416667
  %v981 = vmul.f32 %v933, 0.010416667
  %v982 = vmul.f32 %v934, 0.010416667
  %v983 = vmul.f32 %v935, 0.010416667
  %v984 = vmul.f32 %v936, 0.010416667
  %v985 = vmul.f32 %v937, 0.010416667
  %v986 = vmul.f32 %v938, 0.010416667
  %v987 = vmul.f32 %v939, 0.010416667
  %v988 = vmul.f32 %v940, 0.010416667
  %v989 = vmul.f32 %v941, 0.010416667
  %v990 = vmul.f32 %v942, 0.010416667
  %v991 = vmul.f32 %v943, 0.010416667
  %v992 = vfloor.f32 %v944
  %v993 = vfloor.f32 %v945
  %v994 = vfloor.f32 %v946
  %v995 = vfloor.f32 %v947
  %v996 = vfloor.f32 %v948
  %v997 = vfloor.f32 %v949
  %v998 = vfloor.f32 %v950
  %v999 = vfloor.f32 %v951
  %v1000 = vfloor.f32 %v952
  %v1001 = vfloor.f32 %v953
  %v1002 = vfloor.f32 %v954
  %v1003 = vfloor.f32 %v955
  %v1004 = vfloor.f32 %v956
  %v1005 = vfloor.f32 %v957
  %v1006 = vfloor.f32 %v958
  %v1007 = vfloor.f32 %v959
  %v1008 = vfloor.f32 %v960
  %v1009 = vfloor.f32 %v961
  %v1010 = vfloor.f32 %v962
  %v1011 = vfloor.f32 %v963
  %v1012 = vfloor.f32 %v964
  %v1013 = vfloor.f32 %v965
  %v1014 = vfloor.f32 %v966
  %v1015 = vfloor.f32 %v967
  %v1016 = vfloor.f32 %v968
  %v1017 = vfloor.f32 %v969
  %v1018 = vfloor.f32 %v970
  %v1019 = vfloor.f32 %v971
  %v1020 = vfloor.f32 %v972
  %v1021 = vfloor.f32 %v973
  %v1022 = vfloor.f32 %v974
  %v1023 = vfloor.f32 %v975
  %v1024 = vfloor.f32 %v976
  %v1025 = vfloor.f32 %v977
  %v1026 = vfloor.f32 %v978
  %v1027 = vfloor.f32 %v979
  %v1028 = vfloor.f32 %v980
  %v1029 = vfloor.f32 %v981
  %v1030 = vfloor.f32 %v982
  %v1031 = vfloor.f32 %v983
  %v1032 = vfloor.f32 %v984
  %v1033 = vfloor.f32 %v985
  %v1034 = vfloor.f32 %v986
  %v1035 = vfloor.f32 %v987
  %v1036 = vfloor.f32 %v988
  %v1037 = vfloor.f32 %v989
  %v1038 = vfloor.f32 %v990
  %v1039 = vfloor.f32 %v991
  %v1040 = vmul.f32 %v992, 96.0
  %v1041 = vmul.f32 %v993, 96.0
  %v1042 = vmul.f32 %v994, 96.0
  %v1043 = vmul.f32 %v995, 96.0
  %v1044 = vmul.f32 %v996, 96.0
  %v1045 = vmul.f32 %v997, 96.0
  %v1046 = vmul.f32 %v998, 96.0
  %v1047 = vmul.f32 %v999, 96.0
  %v1048 = vmul.f32 %v1000, 96.0
  %v1049 = vmul.f32 %v1001, 96.0
  %v1050 = vmul.f32 %v1002, 96.0
  %v1051 = vmul.f32 %v1003, 96.0
  %v1052 = vmul.f32 %v1004, 96.0
  %v1053 = vmul.f32 %v1005, 96.0
  %v1054 = vmul.f32 %v1006, 96.0
  %v1055 = vmul.f32 %v1007, 96.0
  %v1056 = vmul.f32 %v1008, 96.0
  %v1057 = vmul.f32 %v1009, 96.0
  %v1058 = vmul.f32 %v1010, 96.0
  %v1059 = vmul.f32 %v1011, 96.0
  %v1060 = vmul.f32 %v1012, 96.0
  %v1061 = vmul.f32 %v1013, 96.0
  %v1062 = vmul.f32 %v1014, 96.0
  %v1063 = vmul.f32 %v1015, 96.0
  %v1064 = vmul.f32 %v1016, 96.0
  %v1065 = vmul.f32 %v1017, 96.0
  %v1066 = vmul.f32 %v1018, 96.0
  %v1067 = vmul.f32 %v1019, 96.0
  %v1068 = vmul.f32 %v1020, 96.0
  %v1069 = vmul.f32 %v1021, 96.0
  %v1070 = vmul.f32 %v1022, 96.0
  %v1071 = vmul.f32 %v1023, 96.0
  %v1072 = vmul.f32 %v1024, 96.0
  %v1073 = vmul.f32 %v1025, 96.0
  %v1074 = vmul.f32 %v1026, 96.0
  %v1075 = vmul.f32 %v1027, 96.0
  %v1076 = vmul.f32 %v1028, 96.0
  %v1077 = vmul.f32 %v1029, 96.0
  %v1078 = vmul.f32 %v1030, 96.0
  %v1079 = vmul.f32 %v1031, 96.0
  %v1080 = vmul.f32 %v1032, 96.0
  %v1081 = vmul.f32 %v1033, 96.0
  %v1082 = vmul.f32 %v1034, 96.0
  %v1083 = vmul.f32 %v1035, 96.0
  %v1084 = vmul.f32 %v1036, 96.0
  %v1085 = vmul.f32 %v1037, 96.0
  %v1086 = vmul.f32 %v1038, 96.0
  %v1087 = vmul.f32 %v1039, 96.0
  %v1088 = vsub.f32 %v96, %v1040
  %v1089 = vsub.f32 %v97, %v1041
  %v1090 = vsub.f32 %v98, %v1042
  %v1091 = vsub.f32 %v99, %v1043
  %v1092 = vsub.f32 %v100, %v1044
  %v1093 = vsub.f32 %v101, %v1045
  %v1094 = vsub.f32 %v102, %v1046
  %v1095 = vsub.f32 %v103, %v1047
  %v1096 = vsub.f32 %v104, %v1048
  %v1097 = vsub.f32 %v105, %v1049
  %v1098 = vsub.f32 %v106, %v1050
  %v1099 = vsub.f32 %v107, %v1051
  %v1100 = vsub.f32 %v872, %v1052
  %v1101 = vsub.f32 %v873, %v1053
  %v1102 = vsub.f32 %v874, %v1054
  %v1103 = vsub.f32 %v875, %v1055
  %v1104 = vsub.f32 %v876, %v1056
  %v1105 = vsub.f32 %v877, %v1057
  %v1106 = vsub.f32 %v878, %v1058
  %v1107 = vsub.f32 %v879, %v1059
  %v1108 = vsub.f32 %v880, %v1060
  %v1109 = vsub.f32 %v881, %v1061
  %v1110 = vsub.f32 %v882, %v1062
  %v1111 = vsub.f32 %v883, %v1063
  %v1112 = vsub.f32 %v884, %v1064
  %v1113 = vsub.f32 %v885, %v1065
  %v1114 = vsub.f32 %v886, %v1066
  %v1115 = vsub.f32 %v887, %v1067
  %v1116 = vsub.f32 %v888, %v1068
  %v1117 = vsub.f32 %v889, %v1069
  %v1118 = vsub.f32 %v890, %v1070
  %v1119 = vsub.f32 %v891, %v1071
  %v1120 = vsub.f32 %v892, %v1072
  %v1121 = vsub.f32 %v893, %v1073
  %v1122 = vsub.f32 %v894, %v1074
  %v1123 = vsub.f32 %v895, %v1075
  %v1124 = vsub.f32 %v896, %v1076
  %v1125 = vsub.f32 %v897, %v1077
  %v1126 = vsub.f32 %v898, %v1078
  %v1127 = vsub.f32 %v899, %v1079
  %v1128 = vsub.f32 %v900, %v1080
  %v1129 = vsub.f32 %v901, %v1081
  %v1130 = vsub.f32 %v902, %v1082
  %v1131 = vsub.f32 %v903, %v1083
  %v1132 = vsub.f32 %v904, %v1084
  %v1133 = vsub.f32 %v905, %v1085
  %v1134 = vsub.f32 %v906, %v1086
  %v1135 = vsub.f32 %v907, %v1087
  %v1136 = vadd.f32 %v1088, 0.5
  %v1137 = vadd.f32 %v1089, 0.5
  %v1138 = vadd.f32 %v1090, 0.5
  %v1139 = vadd.f32 %v1091, 0.5
  %v1140 = vadd.f32 %v1092, 0.5
  %v1141 = vadd.f32 %v1093, 0.5
  %v1142 = vadd.f32 %v1094, 0.5
  %v1143 = vadd.f32 %v1095, 0.5
  %v1144 = vadd.f32 %v1096, 0.5
  %v1145 = vadd.f32 %v1097, 0.5
  %v1146 = vadd.f32 %v1098, 0.5
  %v1147 = vadd.f32 %v1099, 0.5
  %v1148 = vadd.f32 %v1100, 0.5
  %v1149 = vadd.f32 %v1101, 0.5
  %v1150 = vadd.f32 %v1102, 0.5
  %v1151 = vadd.f32 %v1103, 0.5
  %v1152 = vadd.f32 %v1104, 0.5
  %v1153 = vadd.f32 %v1105, 0.5
  %v1154 = vadd.f32 %v1106, 0.5
  %v1155 = vadd.f32 %v1107, 0.5
  %v1156 = vadd.f32 %v1108, 0.5
  %v1157 = vadd.f32 %v1109, 0.5
  %v1158 = vadd.f32 %v1110, 0.5
  %v1159 = vadd.f32 %v1111, 0.5
  %v1160 = vadd.f32 %v1112, 0.5
  %v1161 = vadd.f32 %v1113, 0.5
  %v1162 = vadd.f32 %v1114, 0.5
  %v1163 = vadd.f32 %v1115, 0.5
  %v1164 = vadd.f32 %v1116, 0.5
  %v1165 = vadd.f32 %v1117, 0.5
  %v1166 = vadd.f32 %v1118, 0.5
  %v1167 = vadd.f32 %v1119, 0.5
  %v1168 = vadd.f32 %v1120, 0.5
  %v1169 = vadd.f32 %v1121, 0.5
  %v1170 = vadd.f32 %v1122, 0.5
  %v1171 = vadd.f32 %v1123, 0.5
  %v1172 = vadd.f32 %v1124, 0.5
  %v1173 = vadd.f32 %v1125, 0.5
  %v1174 = vadd.f32 %v1126, 0.5
  %v1175 = vadd.f32 %v1127, 0.5
  %v1176 = vadd.f32 %v1128, 0.5
  %v1177 = vadd.f32 %v1129, 0.5
  %v1178 = vadd.f32 %v1130, 0.5
  %v1179 = vadd.f32 %v1131, 0.5
  %v1180 = vadd.f32 %v1132, 0.5
  %v1181 = vadd.f32 %v1133, 0.5
  %v1182 = vadd.f32 %v1134, 0.5
  %v1183 = vadd.f32 %v1135, 0.5
  %v1184 = vmul.f32 %v1136, 0.083333336
  %v1185 = vmul.f32 %v1137, 0.083333336
  %v1186 = vmul.f32 %v1138, 0.083333336
  %v1187 = vmul.f32 %v1139, 0.083333336
  %v1188 = vmul.f32 %v1140, 0.083333336
  %v1189 = vmul.f32 %v1141, 0.083333336
  %v1190 = vmul.f32 %v1142, 0.083333336
  %v1191 = vmul.f32 %v1143, 0.083333336
  %v1192 = vmul.f32 %v1144, 0.083333336
  %v1193 = vmul.f32 %v1145, 0.083333336
  %v1194 = vmul.f32 %v1146, 0.083333336
  %v1195 = vmul.f32 %v1147, 0.083333336
  %v1196 = vmul.f32 %v1148, 0.083333336
  %v1197 = vmul.f32 %v1149, 0.083333336
  %v1198 = vmul.f32 %v1150, 0.083333336
  %v1199 = vmul.f32 %v1151, 0.083333336
  %v1200 = vmul.f32 %v1152, 0.083333336
  %v1201 = vmul.f32 %v1153, 0.083333336
  %v1202 = vmul.f32 %v1154, 0.083333336
  %v1203 = vmul.f32 %v1155, 0.083333336
  %v1204 = vmul.f32 %v1156, 0.083333336
  %v1205 = vmul.f32 %v1157, 0.083333336
  %v1206 = vmul.f32 %v1158, 0.083333336
  %v1207 = vmul.f32 %v1159, 0.083333336
  %v1208 = vmul.f32 %v1160, 0.083333336
  %v1209 = vmul.f32 %v1161, 0.083333336
  %v1210 = vmul.f32 %v1162, 0.083333336
  %v1211 = vmul.f32 %v1163, 0.083333336
  %v1212 = vmul.f32 %v1164, 0.083333336
  %v1213 = vmul.f32 %v1165, 0.083333336
  %v1214 = vmul.f32 %v1166, 0.083333336
  %v1215 = vmul.f32 %v1167, 0.083333336
  %v1216 = vmul.f32 %v1168, 0.083333336
  %v1217 = vmul.f32 %v1169, 0.083333336
  %v1218 = vmul.f32 %v1170, 0.083333336
  %v1219 = vmul.f32 %v1171, 0.083333336
  %v1220 = vmul.f32 %v1172, 0.083333336
  %v1221 = vmul.f32 %v1173, 0.083333336
  %v1222 = vmul.f32 %v1174, 0.083333336
  %v1223 = vmul.f32 %v1175, 0.083333336
  %v1224 = vmul.f32 %v1176, 0.083333336
  %v1225 = vmul.f32 %v1177, 0.083333336
  %v1226 = vmul.f32 %v1178, 0.083333336
  %v1227 = vmul.f32 %v1179, 0.083333336
  %v1228 = vmul.f32 %v1180, 0.083333336
  %v1229 = vmul.f32 %v1181, 0.083333336
  %v1230 = vmul.f32 %v1182, 0.083333336
  %v1231 = vmul.f32 %v1183, 0.083333336
  %v1232 = vfloor.f32 %v1184
  %v1233 = vfloor.f32 %v1185
  %v1234 = vfloor.f32 %v1186
  %v1235 = vfloor.f32 %v1187
  %v1236 = vfloor.f32 %v1188
  %v1237 = vfloor.f32 %v1189
  %v1238 = vfloor.f32 %v1190
  %v1239 = vfloor.f32 %v1191
  %v1240 = vfloor.f32 %v1192
  %v1241 = vfloor.f32 %v1193
  %v1242 = vfloor.f32 %v1194
  %v1243 = vfloor.f32 %v1195
  %v1244 = vfloor.f32 %v1196
  %v1245 = vfloor.f32 %v1197
  %v1246 = vfloor.f32 %v1198
  %v1247 = vfloor.f32 %v1199
  %v1248 = vfloor.f32 %v1200
  %v1249 = vfloor.f32 %v1201
  %v1250 = vfloor.f32 %v1202
  %v1251 = vfloor.f32 %v1203
  %v1252 = vfloor.f32 %v1204
  %v1253 = vfloor.f32 %v1205
  %v1254 = vfloor.f32 %v1206
  %v1255 = vfloor.f32 %v1207
  %v1256 = vfloor.f32 %v1208
  %v1257 = vfloor.f32 %v1209
  %v1258 = vfloor.f32 %v1210
  %v1259 = vfloor.f32 %v1211
  %v1260 = vfloor.f32 %v1212
  %v1261 = vfloor.f32 %v1213
  %v1262 = vfloor.f32 %v1214
  %v1263 = vfloor.f32 %v1215
  %v1264 = vfloor.f32 %v1216
  %v1265 = vfloor.f32 %v1217
  %v1266 = vfloor.f32 %v1218
  %v1267 = vfloor.f32 %v1219
  %v1268 = vfloor.f32 %v1220
  %v1269 = vfloor.f32 %v1221
  %v1270 = vfloor.f32 %v1222
  %v1271 = vfloor.f32 %v1223
  %v1272 = vfloor.f32 %v1224
  %v1273 = vfloor.f32 %v1225
  %v1274 = vfloor.f32 %v1226
  %v1275 = vfloor.f32 %v1227
  %v1276 = vfloor.f32 %v1228
  %v1277 = vfloor.f32 %v1229
  %v1278 = vfloor.f32 %v1230
  %v1279 = vfloor.f32 %v1231
  %vm1280 = vcmp.eq.f32.partialorder %v1232, %v149
  %vm1281 = vcmp.eq.f32.partialorder %v1233, %v149
  %vm1282 = vcmp.eq.f32.partialorder %v1234, %v149
  %vm1283 = vcmp.eq.f32.partialorder %v1235, %v149
  %vm1284 = vcmp.eq.f32.partialorder %v1236, %v149
  %vm1285 = vcmp.eq.f32.partialorder %v1237, %v149
  %vm1286 = vcmp.eq.f32.partialorder %v1238, %v149
  %vm1287 = vcmp.eq.f32.partialorder %v1239, %v149
  %vm1288 = vcmp.eq.f32.partialorder %v1240, %v149
  %vm1289 = vcmp.eq.f32.partialorder %v1241, %v149
  %vm1290 = vcmp.eq.f32.partialorder %v1242, %v149
  %vm1291 = vcmp.eq.f32.partialorder %v1243, %v149
  %vm1292 = vcmp.eq.f32.partialorder %v1244, %v149
  %vm1293 = vcmp.eq.f32.partialorder %v1245, %v149
  %vm1294 = vcmp.eq.f32.partialorder %v1246, %v149
  %vm1295 = vcmp.eq.f32.partialorder %v1247, %v149
  %vm1296 = vcmp.eq.f32.partialorder %v1248, %v149
  %vm1297 = vcmp.eq.f32.partialorder %v1249, %v149
  %vm1298 = vcmp.eq.f32.partialorder %v1250, %v149
  %vm1299 = vcmp.eq.f32.partialorder %v1251, %v149
  %vm1300 = vcmp.eq.f32.partialorder %v1252, %v149
  %vm1301 = vcmp.eq.f32.partialorder %v1253, %v149
  %vm1302 = vcmp.eq.f32.partialorder %v1254, %v149
  %vm1303 = vcmp.eq.f32.partialorder %v1255, %v149
  %vm1304 = vcmp.eq.f32.partialorder %v1256, %v149
  %vm1305 = vcmp.eq.f32.partialorder %v1257, %v149
  %vm1306 = vcmp.eq.f32.partialorder %v1258, %v149
  %vm1307 = vcmp.eq.f32.partialorder %v1259, %v149
  %vm1308 = vcmp.eq.f32.partialorder %v1260, %v149
  %vm1309 = vcmp.eq.f32.partialorder %v1261, %v149
  %vm1310 = vcmp.eq.f32.partialorder %v1262, %v149
  %vm1311 = vcmp.eq.f32.partialorder %v1263, %v149
  %vm1312 = vcmp.eq.f32.partialorder %v1264, %v149
  %vm1313 = vcmp.eq.f32.partialorder %v1265, %v149
  %vm1314 = vcmp.eq.f32.partialorder %v1266, %v149
  %vm1315 = vcmp.eq.f32.partialorder %v1267, %v149
  %vm1316 = vcmp.eq.f32.partialorder %v1268, %v149
  %vm1317 = vcmp.eq.f32.partialorder %v1269, %v149
  %vm1318 = vcmp.eq.f32.partialorder %v1270, %v149
  %vm1319 = vcmp.eq.f32.partialorder %v1271, %v149
  %vm1320 = vcmp.eq.f32.partialorder %v1272, %v149
  %vm1321 = vcmp.eq.f32.partialorder %v1273, %v149
  %vm1322 = vcmp.eq.f32.partialorder %v1274, %v149
  %vm1323 = vcmp.eq.f32.partialorder %v1275, %v149
  %vm1324 = vcmp.eq.f32.partialorder %v1276, %v149
  %vm1325 = vcmp.eq.f32.partialorder %v1277, %v149
  %vm1326 = vcmp.eq.f32.partialorder %v1278, %v149
  %vm1327 = vcmp.eq.f32.partialorder %v1279, %v149
  %v1328 = vsel %vm1280, %v788, -1e+30
  %v1329 = vsel %vm1281, %v789, -1e+30
  %v1330 = vsel %vm1282, %v790, -1e+30
  %v1331 = vsel %vm1283, %v791, -1e+30
  %v1332 = vsel %vm1284, %v792, -1e+30
  %v1333 = vsel %vm1285, %v793, -1e+30
  %v1334 = vsel %vm1286, %v794, -1e+30
  %v1335 = vsel %vm1287, %v795, -1e+30
  %v1336 = vsel %vm1288, %v796, -1e+30
  %v1337 = vsel %vm1289, %v797, -1e+30
  %v1338 = vsel %vm1290, %v798, -1e+30
  %v1339 = vsel %vm1291, %v799, -1e+30
  %v1340 = vsel %vm1292, %v800, -1e+30
  %v1341 = vsel %vm1293, %v801, -1e+30
  %v1342 = vsel %vm1294, %v802, -1e+30
  %v1343 = vsel %vm1295, %v803, -1e+30
  %v1344 = vsel %vm1296, %v804, -1e+30
  %v1345 = vsel %vm1297, %v805, -1e+30
  %v1346 = vsel %vm1298, %v806, -1e+30
  %v1347 = vsel %vm1299, %v807, -1e+30
  %v1348 = vsel %vm1300, %v808, -1e+30
  %v1349 = vsel %vm1301, %v809, -1e+30
  %v1350 = vsel %vm1302, %v810, -1e+30
  %v1351 = vsel %vm1303, %v811, -1e+30
  %v1352 = vsel %vm1304, %v812, -1e+30
  %v1353 = vsel %vm1305, %v813, -1e+30
  %v1354 = vsel %vm1306, %v814, -1e+30
  %v1355 = vsel %vm1307, %v815, -1e+30
  %v1356 = vsel %vm1308, %v816, -1e+30
  %v1357 = vsel %vm1309, %v817, -1e+30
  %v1358 = vsel %vm1310, %v818, -1e+30
  %v1359 = vsel %vm1311, %v819, -1e+30
  %v1360 = vsel %vm1312, %v820, -1e+30
  %v1361 = vsel %vm1313, %v821, -1e+30
  %v1362 = vsel %vm1314, %v822, -1e+30
  %v1363 = vsel %vm1315, %v823, -1e+30
  %v1364 = vsel %vm1316, %v824, -1e+30
  %v1365 = vsel %vm1317, %v825, -1e+30
  %v1366 = vsel %vm1318, %v826, -1e+30
  %v1367 = vsel %vm1319, %v827, -1e+30
  %v1368 = vsel %vm1320, %v828, -1e+30
  %v1369 = vsel %vm1321, %v829, -1e+30
  %v1370 = vsel %vm1322, %v830, -1e+30
  %v1371 = vsel %vm1323, %v831, -1e+30
  %v1372 = vsel %vm1324, %v832, -1e+30
  %v1373 = vsel %vm1325, %v833, -1e+30
  %v1374 = vsel %vm1326, %v834, -1e+30
  %v1375 = vsel %vm1327, %v835, -1e+30
  %vm1376 = vcmask 785408
  %v1377 = vsel %vm1376, %v1328, -inf
  %1378 = vmax.xlane.f32.xlu0 %v1377
  %v1379 = vpop.xlane.xlu0 %1378
  %v1380 = vsel %vm1376, %v1329, -inf
  %1381 = vmax.xlane.f32.xlu0 %v1380
  %v1382 = vpop.xlane.xlu0 %1381
  %v1383 = vsel %vm1376, %v1330, -inf
  %1384 = vmax.xlane.f32.xlu0 %v1383
  %v1385 = vpop.xlane.xlu0 %1384
  %v1386 = vsel %vm1376, %v1331, -inf
  %1387 = vmax.xlane.f32.xlu0 %v1386
  %v1388 = vpop.xlane.xlu0 %1387
  %v1389 = vsel %vm1376, %v1332, -inf
  %1390 = vmax.xlane.f32.xlu0 %v1389
  %v1391 = vpop.xlane.xlu0 %1390
  %v1392 = vsel %vm1376, %v1333, -inf
  %1393 = vmax.xlane.f32.xlu0 %v1392
  %v1394 = vpop.xlane.xlu0 %1393
  %v1395 = vsel %vm1376, %v1334, -inf
  %1396 = vmax.xlane.f32.xlu0 %v1395
  %v1397 = vpop.xlane.xlu0 %1396
  %v1398 = vsel %vm1376, %v1335, -inf
  %1399 = vmax.xlane.f32.xlu0 %v1398
  %v1400 = vpop.xlane.xlu0 %1399
  %v1401 = vsel %vm1376, %v1336, -inf
  %1402 = vmax.xlane.f32.xlu0 %v1401
  %v1403 = vpop.xlane.xlu0 %1402
  %v1404 = vsel %vm1376, %v1337, -inf
  %1405 = vmax.xlane.f32.xlu0 %v1404
  %v1406 = vpop.xlane.xlu0 %1405
  %v1407 = vsel %vm1376, %v1338, -inf
  %1408 = vmax.xlane.f32.xlu0 %v1407
  %v1409 = vpop.xlane.xlu0 %1408
  %v1410 = vsel %vm1376, %v1339, -inf
  %1411 = vmax.xlane.f32.xlu0 %v1410
  %v1412 = vpop.xlane.xlu0 %1411
  %v1413 = vsel %vm1376, %v1340, -inf
  %1414 = vmax.xlane.f32.xlu0 %v1413
  %v1415 = vpop.xlane.xlu0 %1414
  %v1416 = vsel %vm1376, %v1341, -inf
  %1417 = vmax.xlane.f32.xlu0 %v1416
  %v1418 = vpop.xlane.xlu0 %1417
  %v1419 = vsel %vm1376, %v1342, -inf
  %1420 = vmax.xlane.f32.xlu0 %v1419
  %v1421 = vpop.xlane.xlu0 %1420
  %v1422 = vsel %vm1376, %v1343, -inf
  %1423 = vmax.xlane.f32.xlu0 %v1422
  %v1424 = vpop.xlane.xlu0 %1423
  %v1425 = vsel %vm1376, %v1344, -inf
  %1426 = vmax.xlane.f32.xlu0 %v1425
  %v1427 = vpop.xlane.xlu0 %1426
  %v1428 = vsel %vm1376, %v1345, -inf
  %1429 = vmax.xlane.f32.xlu0 %v1428
  %v1430 = vpop.xlane.xlu0 %1429
  %v1431 = vsel %vm1376, %v1346, -inf
  %1432 = vmax.xlane.f32.xlu0 %v1431
  %v1433 = vpop.xlane.xlu0 %1432
  %v1434 = vsel %vm1376, %v1347, -inf
  %1435 = vmax.xlane.f32.xlu0 %v1434
  %v1436 = vpop.xlane.xlu0 %1435
  %v1437 = vsel %vm1376, %v1348, -inf
  %1438 = vmax.xlane.f32.xlu0 %v1437
  %v1439 = vpop.xlane.xlu0 %1438
  %v1440 = vsel %vm1376, %v1349, -inf
  %1441 = vmax.xlane.f32.xlu0 %v1440
  %v1442 = vpop.xlane.xlu0 %1441
  %v1443 = vsel %vm1376, %v1350, -inf
  %1444 = vmax.xlane.f32.xlu0 %v1443
  %v1445 = vpop.xlane.xlu0 %1444
  %v1446 = vsel %vm1376, %v1351, -inf
  %1447 = vmax.xlane.f32.xlu0 %v1446
  %v1448 = vpop.xlane.xlu0 %1447
  %v1449 = vsel %vm1376, %v1352, -inf
  %1450 = vmax.xlane.f32.xlu0 %v1449
  %v1451 = vpop.xlane.xlu0 %1450
  %v1452 = vsel %vm1376, %v1353, -inf
  %1453 = vmax.xlane.f32.xlu0 %v1452
  %v1454 = vpop.xlane.xlu0 %1453
  %v1455 = vsel %vm1376, %v1354, -inf
  %1456 = vmax.xlane.f32.xlu0 %v1455
  %v1457 = vpop.xlane.xlu0 %1456
  %v1458 = vsel %vm1376, %v1355, -inf
  %1459 = vmax.xlane.f32.xlu0 %v1458
  %v1460 = vpop.xlane.xlu0 %1459
  %v1461 = vsel %vm1376, %v1356, -inf
  %1462 = vmax.xlane.f32.xlu0 %v1461
  %v1463 = vpop.xlane.xlu0 %1462
  %v1464 = vsel %vm1376, %v1357, -inf
  %1465 = vmax.xlane.f32.xlu0 %v1464
  %v1466 = vpop.xlane.xlu0 %1465
  %v1467 = vsel %vm1376, %v1358, -inf
  %1468 = vmax.xlane.f32.xlu0 %v1467
  %v1469 = vpop.xlane.xlu0 %1468
  %v1470 = vsel %vm1376, %v1359, -inf
  %1471 = vmax.xlane.f32.xlu0 %v1470
  %v1472 = vpop.xlane.xlu0 %1471
  %v1473 = vsel %vm1376, %v1360, -inf
  %1474 = vmax.xlane.f32.xlu0 %v1473
  %v1475 = vpop.xlane.xlu0 %1474
  %v1476 = vsel %vm1376, %v1361, -inf
  %1477 = vmax.xlane.f32.xlu0 %v1476
  %v1478 = vpop.xlane.xlu0 %1477
  %v1479 = vsel %vm1376, %v1362, -inf
  %1480 = vmax.xlane.f32.xlu0 %v1479
  %v1481 = vpop.xlane.xlu0 %1480
  %v1482 = vsel %vm1376, %v1363, -inf
  %1483 = vmax.xlane.f32.xlu0 %v1482
  %v1484 = vpop.xlane.xlu0 %1483
  %v1485 = vsel %vm1376, %v1364, -inf
  %1486 = vmax.xlane.f32.xlu0 %v1485
  %v1487 = vpop.xlane.xlu0 %1486
  %v1488 = vsel %vm1376, %v1365, -inf
  %1489 = vmax.xlane.f32.xlu0 %v1488
  %v1490 = vpop.xlane.xlu0 %1489
  %v1491 = vsel %vm1376, %v1366, -inf
  %1492 = vmax.xlane.f32.xlu0 %v1491
  %v1493 = vpop.xlane.xlu0 %1492
  %v1494 = vsel %vm1376, %v1367, -inf
  %1495 = vmax.xlane.f32.xlu0 %v1494
  %v1496 = vpop.xlane.xlu0 %1495
  %v1497 = vsel %vm1376, %v1368, -inf
  %1498 = vmax.xlane.f32.xlu0 %v1497
  %v1499 = vpop.xlane.xlu0 %1498
  %v1500 = vsel %vm1376, %v1369, -inf
  %1501 = vmax.xlane.f32.xlu0 %v1500
  %v1502 = vpop.xlane.xlu0 %1501
  %v1503 = vsel %vm1376, %v1370, -inf
  %1504 = vmax.xlane.f32.xlu0 %v1503
  %v1505 = vpop.xlane.xlu0 %1504
  %v1506 = vsel %vm1376, %v1371, -inf
  %1507 = vmax.xlane.f32.xlu0 %v1506
  %v1508 = vpop.xlane.xlu0 %1507
  %v1509 = vsel %vm1376, %v1372, -inf
  %1510 = vmax.xlane.f32.xlu0 %v1509
  %v1511 = vpop.xlane.xlu0 %1510
  %v1512 = vsel %vm1376, %v1373, -inf
  %1513 = vmax.xlane.f32.xlu0 %v1512
  %v1514 = vpop.xlane.xlu0 %1513
  %v1515 = vsel %vm1376, %v1374, -inf
  %1516 = vmax.xlane.f32.xlu0 %v1515
  %v1517 = vpop.xlane.xlu0 %1516
  %v1518 = vsel %vm1376, %v1375, -inf
  %1519 = vmax.xlane.f32.xlu0 %v1518
  %v1520 = vpop.xlane.xlu0 %1519
  %v1521 = vsub.f32 %v1328, %v1379
  %v1522 = vsub.f32 %v1329, %v1382
  %v1523 = vsub.f32 %v1330, %v1385
  %v1524 = vsub.f32 %v1331, %v1388
  %v1525 = vsub.f32 %v1332, %v1391
  %v1526 = vsub.f32 %v1333, %v1394
  %v1527 = vsub.f32 %v1334, %v1397
  %v1528 = vsub.f32 %v1335, %v1400
  %v1529 = vsub.f32 %v1336, %v1403
  %v1530 = vsub.f32 %v1337, %v1406
  %v1531 = vsub.f32 %v1338, %v1409
  %v1532 = vsub.f32 %v1339, %v1412
  %v1533 = vsub.f32 %v1340, %v1415
  %v1534 = vsub.f32 %v1341, %v1418
  %v1535 = vsub.f32 %v1342, %v1421
  %v1536 = vsub.f32 %v1343, %v1424
  %v1537 = vsub.f32 %v1344, %v1427
  %v1538 = vsub.f32 %v1345, %v1430
  %v1539 = vsub.f32 %v1346, %v1433
  %v1540 = vsub.f32 %v1347, %v1436
  %v1541 = vsub.f32 %v1348, %v1439
  %v1542 = vsub.f32 %v1349, %v1442
  %v1543 = vsub.f32 %v1350, %v1445
  %v1544 = vsub.f32 %v1351, %v1448
  %v1545 = vsub.f32 %v1352, %v1451
  %v1546 = vsub.f32 %v1353, %v1454
  %v1547 = vsub.f32 %v1354, %v1457
  %v1548 = vsub.f32 %v1355, %v1460
  %v1549 = vsub.f32 %v1356, %v1463
  %v1550 = vsub.f32 %v1357, %v1466
  %v1551 = vsub.f32 %v1358, %v1469
  %v1552 = vsub.f32 %v1359, %v1472
  %v1553 = vsub.f32 %v1360, %v1475
  %v1554 = vsub.f32 %v1361, %v1478
  %v1555 = vsub.f32 %v1362, %v1481
  %v1556 = vsub.f32 %v1363, %v1484
  %v1557 = vsub.f32 %v1364, %v1487
  %v1558 = vsub.f32 %v1365, %v1490
  %v1559 = vsub.f32 %v1366, %v1493
  %v1560 = vsub.f32 %v1367, %v1496
  %v1561 = vsub.f32 %v1368, %v1499
  %v1562 = vsub.f32 %v1369, %v1502
  %v1563 = vsub.f32 %v1370, %v1505
  %v1564 = vsub.f32 %v1371, %v1508
  %v1565 = vsub.f32 %v1372, %v1511
  %v1566 = vsub.f32 %v1373, %v1514
  %v1567 = vsub.f32 %v1374, %v1517
  %v1568 = vsub.f32 %v1375, %v1520
  %v1569 = vmul.f32 %v1521, 1.442695
  %v1570 = vpow.pop %v1569
  %v1571 = vmul.f32 %v1522, 1.442695
  %v1572 = vpow.pop %v1571
  %v1573 = vmul.f32 %v1523, 1.442695
  %v1574 = vpow.pop %v1573
  %v1575 = vmul.f32 %v1524, 1.442695
  %v1576 = vpow.pop %v1575
  %v1577 = vmul.f32 %v1525, 1.442695
  %v1578 = vpow.pop %v1577
  %v1579 = vmul.f32 %v1526, 1.442695
  %v1580 = vpow.pop %v1579
  %v1581 = vmul.f32 %v1527, 1.442695
  %v1582 = vpow.pop %v1581
  %v1583 = vmul.f32 %v1528, 1.442695
  %v1584 = vpow.pop %v1583
  %v1585 = vmul.f32 %v1529, 1.442695
  %v1586 = vpow.pop %v1585
  %v1587 = vmul.f32 %v1530, 1.442695
  %v1588 = vpow.pop %v1587
  %v1589 = vmul.f32 %v1531, 1.442695
  %v1590 = vpow.pop %v1589
  %v1591 = vmul.f32 %v1532, 1.442695
  %v1592 = vpow.pop %v1591
  %v1593 = vmul.f32 %v1533, 1.442695
  %v1594 = vpow.pop %v1593
  %v1595 = vmul.f32 %v1534, 1.442695
  %v1596 = vpow.pop %v1595
  %v1597 = vmul.f32 %v1535, 1.442695
  %v1598 = vpow.pop %v1597
  %v1599 = vmul.f32 %v1536, 1.442695
  %v1600 = vpow.pop %v1599
  %v1601 = vmul.f32 %v1537, 1.442695
  %v1602 = vpow.pop %v1601
  %v1603 = vmul.f32 %v1538, 1.442695
  %v1604 = vpow.pop %v1603
  %v1605 = vmul.f32 %v1539, 1.442695
  %v1606 = vpow.pop %v1605
  %v1607 = vmul.f32 %v1540, 1.442695
  %v1608 = vpow.pop %v1607
  %v1609 = vmul.f32 %v1541, 1.442695
  %v1610 = vpow.pop %v1609
  %v1611 = vmul.f32 %v1542, 1.442695
  %v1612 = vpow.pop %v1611
  %v1613 = vmul.f32 %v1543, 1.442695
  %v1614 = vpow.pop %v1613
  %v1615 = vmul.f32 %v1544, 1.442695
  %v1616 = vpow.pop %v1615
  %v1617 = vmul.f32 %v1545, 1.442695
  %v1618 = vpow.pop %v1617
  %v1619 = vmul.f32 %v1546, 1.442695
  %v1620 = vpow.pop %v1619
  %v1621 = vmul.f32 %v1547, 1.442695
  %v1622 = vpow.pop %v1621
  %v1623 = vmul.f32 %v1548, 1.442695
  %v1624 = vpow.pop %v1623
  %v1625 = vmul.f32 %v1549, 1.442695
  %v1626 = vpow.pop %v1625
  %v1627 = vmul.f32 %v1550, 1.442695
  %v1628 = vpow.pop %v1627
  %v1629 = vmul.f32 %v1551, 1.442695
  %v1630 = vpow.pop %v1629
  %v1631 = vmul.f32 %v1552, 1.442695
  %v1632 = vpow.pop %v1631
  %v1633 = vmul.f32 %v1553, 1.442695
  %v1634 = vpow.pop %v1633
  %v1635 = vmul.f32 %v1554, 1.442695
  %v1636 = vpow.pop %v1635
  %v1637 = vmul.f32 %v1555, 1.442695
  %v1638 = vpow.pop %v1637
  %v1639 = vmul.f32 %v1556, 1.442695
  %v1640 = vpow.pop %v1639
  %v1641 = vmul.f32 %v1557, 1.442695
  %v1642 = vpow.pop %v1641
  %v1643 = vmul.f32 %v1558, 1.442695
  %v1644 = vpow.pop %v1643
  %v1645 = vmul.f32 %v1559, 1.442695
  %v1646 = vpow.pop %v1645
  %v1647 = vmul.f32 %v1560, 1.442695
  %v1648 = vpow.pop %v1647
  %v1649 = vmul.f32 %v1561, 1.442695
  %v1650 = vpow.pop %v1649
  %v1651 = vmul.f32 %v1562, 1.442695
  %v1652 = vpow.pop %v1651
  %v1653 = vmul.f32 %v1563, 1.442695
  %v1654 = vpow.pop %v1653
  %v1655 = vmul.f32 %v1564, 1.442695
  %v1656 = vpow.pop %v1655
  %v1657 = vmul.f32 %v1565, 1.442695
  %v1658 = vpow.pop %v1657
  %v1659 = vmul.f32 %v1566, 1.442695
  %v1660 = vpow.pop %v1659
  %v1661 = vmul.f32 %v1567, 1.442695
  %v1662 = vpow.pop %v1661
  %v1663 = vmul.f32 %v1568, 1.442695
  %v1664 = vpow.pop %v1663
  %v1665 = vsel %vm1376, %v1570, 0.0
  %1666 = vadd.xlane.f32.xlu0 %v1665
  %v1667 = vpop.xlane.xlu0 %1666
  %v1668 = vsel %vm1376, %v1572, 0.0
  %1669 = vadd.xlane.f32.xlu0 %v1668
  %v1670 = vpop.xlane.xlu0 %1669
  %v1671 = vsel %vm1376, %v1574, 0.0
  %1672 = vadd.xlane.f32.xlu0 %v1671
  %v1673 = vpop.xlane.xlu0 %1672
  %v1674 = vsel %vm1376, %v1576, 0.0
  %1675 = vadd.xlane.f32.xlu0 %v1674
  %v1676 = vpop.xlane.xlu0 %1675
  %v1677 = vsel %vm1376, %v1578, 0.0
  %1678 = vadd.xlane.f32.xlu0 %v1677
  %v1679 = vpop.xlane.xlu0 %1678
  %v1680 = vsel %vm1376, %v1580, 0.0
  %1681 = vadd.xlane.f32.xlu0 %v1680
  %v1682 = vpop.xlane.xlu0 %1681
  %v1683 = vsel %vm1376, %v1582, 0.0
  %1684 = vadd.xlane.f32.xlu0 %v1683
  %v1685 = vpop.xlane.xlu0 %1684
  %v1686 = vsel %vm1376, %v1584, 0.0
  %1687 = vadd.xlane.f32.xlu0 %v1686
  %v1688 = vpop.xlane.xlu0 %1687
  %v1689 = vsel %vm1376, %v1586, 0.0
  %1690 = vadd.xlane.f32.xlu0 %v1689
  %v1691 = vpop.xlane.xlu0 %1690
  %v1692 = vsel %vm1376, %v1588, 0.0
  %1693 = vadd.xlane.f32.xlu0 %v1692
  %v1694 = vpop.xlane.xlu0 %1693
  %v1695 = vsel %vm1376, %v1590, 0.0
  %1696 = vadd.xlane.f32.xlu0 %v1695
  %v1697 = vpop.xlane.xlu0 %1696
  %v1698 = vsel %vm1376, %v1592, 0.0
  %1699 = vadd.xlane.f32.xlu0 %v1698
  %v1700 = vpop.xlane.xlu0 %1699
  %v1701 = vsel %vm1376, %v1594, 0.0
  %1702 = vadd.xlane.f32.xlu0 %v1701
  %v1703 = vpop.xlane.xlu0 %1702
  %v1704 = vsel %vm1376, %v1596, 0.0
  %1705 = vadd.xlane.f32.xlu0 %v1704
  %v1706 = vpop.xlane.xlu0 %1705
  %v1707 = vsel %vm1376, %v1598, 0.0
  %1708 = vadd.xlane.f32.xlu0 %v1707
  %v1709 = vpop.xlane.xlu0 %1708
  %v1710 = vsel %vm1376, %v1600, 0.0
  %1711 = vadd.xlane.f32.xlu0 %v1710
  %v1712 = vpop.xlane.xlu0 %1711
  %v1713 = vsel %vm1376, %v1602, 0.0
  %1714 = vadd.xlane.f32.xlu0 %v1713
  %v1715 = vpop.xlane.xlu0 %1714
  %v1716 = vsel %vm1376, %v1604, 0.0
  %1717 = vadd.xlane.f32.xlu0 %v1716
  %v1718 = vpop.xlane.xlu0 %1717
  %v1719 = vsel %vm1376, %v1606, 0.0
  %1720 = vadd.xlane.f32.xlu0 %v1719
  %v1721 = vpop.xlane.xlu0 %1720
  %v1722 = vsel %vm1376, %v1608, 0.0
  %1723 = vadd.xlane.f32.xlu0 %v1722
  %v1724 = vpop.xlane.xlu0 %1723
  %v1725 = vsel %vm1376, %v1610, 0.0
  %1726 = vadd.xlane.f32.xlu0 %v1725
  %v1727 = vpop.xlane.xlu0 %1726
  %v1728 = vsel %vm1376, %v1612, 0.0
  %1729 = vadd.xlane.f32.xlu0 %v1728
  %v1730 = vpop.xlane.xlu0 %1729
  %v1731 = vsel %vm1376, %v1614, 0.0
  %1732 = vadd.xlane.f32.xlu0 %v1731
  %v1733 = vpop.xlane.xlu0 %1732
  %v1734 = vsel %vm1376, %v1616, 0.0
  %1735 = vadd.xlane.f32.xlu0 %v1734
  %v1736 = vpop.xlane.xlu0 %1735
  %v1737 = vsel %vm1376, %v1618, 0.0
  %1738 = vadd.xlane.f32.xlu0 %v1737
  %v1739 = vpop.xlane.xlu0 %1738
  %v1740 = vsel %vm1376, %v1620, 0.0
  %1741 = vadd.xlane.f32.xlu0 %v1740
  %v1742 = vpop.xlane.xlu0 %1741
  %v1743 = vsel %vm1376, %v1622, 0.0
  %1744 = vadd.xlane.f32.xlu0 %v1743
  %v1745 = vpop.xlane.xlu0 %1744
  %v1746 = vsel %vm1376, %v1624, 0.0
  %1747 = vadd.xlane.f32.xlu0 %v1746
  %v1748 = vpop.xlane.xlu0 %1747
  %v1749 = vsel %vm1376, %v1626, 0.0
  %1750 = vadd.xlane.f32.xlu0 %v1749
  %v1751 = vpop.xlane.xlu0 %1750
  %v1752 = vsel %vm1376, %v1628, 0.0
  %1753 = vadd.xlane.f32.xlu0 %v1752
  %v1754 = vpop.xlane.xlu0 %1753
  %v1755 = vsel %vm1376, %v1630, 0.0
  %1756 = vadd.xlane.f32.xlu0 %v1755
  %v1757 = vpop.xlane.xlu0 %1756
  %v1758 = vsel %vm1376, %v1632, 0.0
  %1759 = vadd.xlane.f32.xlu0 %v1758
  %v1760 = vpop.xlane.xlu0 %1759
  %v1761 = vsel %vm1376, %v1634, 0.0
  %1762 = vadd.xlane.f32.xlu0 %v1761
  %v1763 = vpop.xlane.xlu0 %1762
  %v1764 = vsel %vm1376, %v1636, 0.0
  %1765 = vadd.xlane.f32.xlu0 %v1764
  %v1766 = vpop.xlane.xlu0 %1765
  %v1767 = vsel %vm1376, %v1638, 0.0
  %1768 = vadd.xlane.f32.xlu0 %v1767
  %v1769 = vpop.xlane.xlu0 %1768
  %v1770 = vsel %vm1376, %v1640, 0.0
  %1771 = vadd.xlane.f32.xlu0 %v1770
  %v1772 = vpop.xlane.xlu0 %1771
  %v1773 = vsel %vm1376, %v1642, 0.0
  %1774 = vadd.xlane.f32.xlu0 %v1773
  %v1775 = vpop.xlane.xlu0 %1774
  %v1776 = vsel %vm1376, %v1644, 0.0
  %1777 = vadd.xlane.f32.xlu0 %v1776
  %v1778 = vpop.xlane.xlu0 %1777
  %v1779 = vsel %vm1376, %v1646, 0.0
  %1780 = vadd.xlane.f32.xlu0 %v1779
  %v1781 = vpop.xlane.xlu0 %1780
  %v1782 = vsel %vm1376, %v1648, 0.0
  %1783 = vadd.xlane.f32.xlu0 %v1782
  %v1784 = vpop.xlane.xlu0 %1783
  %v1785 = vsel %vm1376, %v1650, 0.0
  %1786 = vadd.xlane.f32.xlu0 %v1785
  %v1787 = vpop.xlane.xlu0 %1786
  %v1788 = vsel %vm1376, %v1652, 0.0
  %1789 = vadd.xlane.f32.xlu0 %v1788
  %v1790 = vpop.xlane.xlu0 %1789
  %v1791 = vsel %vm1376, %v1654, 0.0
  %1792 = vadd.xlane.f32.xlu0 %v1791
  %v1793 = vpop.xlane.xlu0 %1792
  %v1794 = vsel %vm1376, %v1656, 0.0
  %1795 = vadd.xlane.f32.xlu0 %v1794
  %v1796 = vpop.xlane.xlu0 %1795
  %v1797 = vsel %vm1376, %v1658, 0.0
  %1798 = vadd.xlane.f32.xlu0 %v1797
  %v1799 = vpop.xlane.xlu0 %1798
  %v1800 = vsel %vm1376, %v1660, 0.0
  %1801 = vadd.xlane.f32.xlu0 %v1800
  %v1802 = vpop.xlane.xlu0 %1801
  %v1803 = vsel %vm1376, %v1662, 0.0
  %1804 = vadd.xlane.f32.xlu0 %v1803
  %v1805 = vpop.xlane.xlu0 %1804
  %v1806 = vsel %vm1376, %v1664, 0.0
  %1807 = vadd.xlane.f32.xlu0 %v1806
  %v1808 = vpop.xlane.xlu0 %1807
  %v1809 = vrcp.pop %v1667
  %v1810 = vmul.f32 1.0, %v1809
  %v1811 = vrcp.pop %v1670
  %v1812 = vmul.f32 1.0, %v1811
  %v1813 = vrcp.pop %v1673
  %v1814 = vmul.f32 1.0, %v1813
  %v1815 = vrcp.pop %v1676
  %v1816 = vmul.f32 1.0, %v1815
  %v1817 = vrcp.pop %v1679
  %v1818 = vmul.f32 1.0, %v1817
  %v1819 = vrcp.pop %v1682
  %v1820 = vmul.f32 1.0, %v1819
  %v1821 = vrcp.pop %v1685
  %v1822 = vmul.f32 1.0, %v1821
  %v1823 = vrcp.pop %v1688
  %v1824 = vmul.f32 1.0, %v1823
  %v1825 = vrcp.pop %v1691
  %v1826 = vmul.f32 1.0, %v1825
  %v1827 = vrcp.pop %v1694
  %v1828 = vmul.f32 1.0, %v1827
  %v1829 = vrcp.pop %v1697
  %v1830 = vmul.f32 1.0, %v1829
  %v1831 = vrcp.pop %v1700
  %v1832 = vmul.f32 1.0, %v1831
  %v1833 = vrcp.pop %v1703
  %v1834 = vmul.f32 1.0, %v1833
  %v1835 = vrcp.pop %v1706
  %v1836 = vmul.f32 1.0, %v1835
  %v1837 = vrcp.pop %v1709
  %v1838 = vmul.f32 1.0, %v1837
  %v1839 = vrcp.pop %v1712
  %v1840 = vmul.f32 1.0, %v1839
  %v1841 = vrcp.pop %v1715
  %v1842 = vmul.f32 1.0, %v1841
  %v1843 = vrcp.pop %v1718
  %v1844 = vmul.f32 1.0, %v1843
  %v1845 = vrcp.pop %v1721
  %v1846 = vmul.f32 1.0, %v1845
  %v1847 = vrcp.pop %v1724
  %v1848 = vmul.f32 1.0, %v1847
  %v1849 = vrcp.pop %v1727
  %v1850 = vmul.f32 1.0, %v1849
  %v1851 = vrcp.pop %v1730
  %v1852 = vmul.f32 1.0, %v1851
  %v1853 = vrcp.pop %v1733
  %v1854 = vmul.f32 1.0, %v1853
  %v1855 = vrcp.pop %v1736
  %v1856 = vmul.f32 1.0, %v1855
  %v1857 = vrcp.pop %v1739
  %v1858 = vmul.f32 1.0, %v1857
  %v1859 = vrcp.pop %v1742
  %v1860 = vmul.f32 1.0, %v1859
  %v1861 = vrcp.pop %v1745
  %v1862 = vmul.f32 1.0, %v1861
  %v1863 = vrcp.pop %v1748
  %v1864 = vmul.f32 1.0, %v1863
  %v1865 = vrcp.pop %v1751
  %v1866 = vmul.f32 1.0, %v1865
  %v1867 = vrcp.pop %v1754
  %v1868 = vmul.f32 1.0, %v1867
  %v1869 = vrcp.pop %v1757
  %v1870 = vmul.f32 1.0, %v1869
  %v1871 = vrcp.pop %v1760
  %v1872 = vmul.f32 1.0, %v1871
  %v1873 = vrcp.pop %v1763
  %v1874 = vmul.f32 1.0, %v1873
  %v1875 = vrcp.pop %v1766
  %v1876 = vmul.f32 1.0, %v1875
  %v1877 = vrcp.pop %v1769
  %v1878 = vmul.f32 1.0, %v1877
  %v1879 = vrcp.pop %v1772
  %v1880 = vmul.f32 1.0, %v1879
  %v1881 = vrcp.pop %v1775
  %v1882 = vmul.f32 1.0, %v1881
  %v1883 = vrcp.pop %v1778
  %v1884 = vmul.f32 1.0, %v1883
  %v1885 = vrcp.pop %v1781
  %v1886 = vmul.f32 1.0, %v1885
  %v1887 = vrcp.pop %v1784
  %v1888 = vmul.f32 1.0, %v1887
  %v1889 = vrcp.pop %v1787
  %v1890 = vmul.f32 1.0, %v1889
  %v1891 = vrcp.pop %v1790
  %v1892 = vmul.f32 1.0, %v1891
  %v1893 = vrcp.pop %v1793
  %v1894 = vmul.f32 1.0, %v1893
  %v1895 = vrcp.pop %v1796
  %v1896 = vmul.f32 1.0, %v1895
  %v1897 = vrcp.pop %v1799
  %v1898 = vmul.f32 1.0, %v1897
  %v1899 = vrcp.pop %v1802
  %v1900 = vmul.f32 1.0, %v1899
  %v1901 = vrcp.pop %v1805
  %v1902 = vmul.f32 1.0, %v1901
  %v1903 = vrcp.pop %v1808
  %v1904 = vmul.f32 1.0, %v1903
  %v1905 = vmul.f32 %v1570, %v1810
  %v1906 = vmul.f32 %v1572, %v1812
  %v1907 = vmul.f32 %v1574, %v1814
  %v1908 = vmul.f32 %v1576, %v1816
  %v1909 = vmul.f32 %v1578, %v1818
  %v1910 = vmul.f32 %v1580, %v1820
  %v1911 = vmul.f32 %v1582, %v1822
  %v1912 = vmul.f32 %v1584, %v1824
  %v1913 = vmul.f32 %v1586, %v1826
  %v1914 = vmul.f32 %v1588, %v1828
  %v1915 = vmul.f32 %v1590, %v1830
  %v1916 = vmul.f32 %v1592, %v1832
  %v1917 = vmul.f32 %v1594, %v1834
  %v1918 = vmul.f32 %v1596, %v1836
  %v1919 = vmul.f32 %v1598, %v1838
  %v1920 = vmul.f32 %v1600, %v1840
  %v1921 = vmul.f32 %v1602, %v1842
  %v1922 = vmul.f32 %v1604, %v1844
  %v1923 = vmul.f32 %v1606, %v1846
  %v1924 = vmul.f32 %v1608, %v1848
  %v1925 = vmul.f32 %v1610, %v1850
  %v1926 = vmul.f32 %v1612, %v1852
  %v1927 = vmul.f32 %v1614, %v1854
  %v1928 = vmul.f32 %v1616, %v1856
  %v1929 = vmul.f32 %v1618, %v1858
  %v1930 = vmul.f32 %v1620, %v1860
  %v1931 = vmul.f32 %v1622, %v1862
  %v1932 = vmul.f32 %v1624, %v1864
  %v1933 = vmul.f32 %v1626, %v1866
  %v1934 = vmul.f32 %v1628, %v1868
  %v1935 = vmul.f32 %v1630, %v1870
  %v1936 = vmul.f32 %v1632, %v1872
  %v1937 = vmul.f32 %v1634, %v1874
  %v1938 = vmul.f32 %v1636, %v1876
  %v1939 = vmul.f32 %v1638, %v1878
  %v1940 = vmul.f32 %v1640, %v1880
  %v1941 = vmul.f32 %v1642, %v1882
  %v1942 = vmul.f32 %v1644, %v1884
  %v1943 = vmul.f32 %v1646, %v1886
  %v1944 = vmul.f32 %v1648, %v1888
  %v1945 = vmul.f32 %v1650, %v1890
  %v1946 = vmul.f32 %v1652, %v1892
  %v1947 = vmul.f32 %v1654, %v1894
  %v1948 = vmul.f32 %v1656, %v1896
  %v1949 = vmul.f32 %v1658, %v1898
  %v1950 = vmul.f32 %v1660, %v1900
  %v1951 = vmul.f32 %v1662, %v1902
  %v1952 = vmul.f32 %v1664, %v1904
  %v1954 = vsel %vm1376, %v1905, 0
  %v1957 = vsel %vm1376, %v1906, 0
  %v1960 = vsel %vm1376, %v1907, 0
  %v1963 = vsel %vm1376, %v1908, 0
  %v1966 = vsel %vm1376, %v1909, 0
  %v1969 = vsel %vm1376, %v1910, 0
  %v1972 = vsel %vm1376, %v1911, 0
  %v1975 = vsel %vm1376, %v1912, 0
  %v1978 = vsel %vm1376, %v1913, 0
  %v1981 = vsel %vm1376, %v1914, 0
  %v1984 = vsel %vm1376, %v1915, 0
  %v1987 = vsel %vm1376, %v1916, 0
  %v1990 = vsel %vm1376, %v1917, 0
  %v1993 = vsel %vm1376, %v1918, 0
  %v1996 = vsel %vm1376, %v1919, 0
  %v1999 = vsel %vm1376, %v1920, 0
  %v2002 = vsel %vm1376, %v1921, 0
  %v2005 = vsel %vm1376, %v1922, 0
  %v2008 = vsel %vm1376, %v1923, 0
  %v2011 = vsel %vm1376, %v1924, 0
  %v2014 = vsel %vm1376, %v1925, 0
  %v2017 = vsel %vm1376, %v1926, 0
  %v2020 = vsel %vm1376, %v1927, 0
  %v2023 = vsel %vm1376, %v1928, 0
  %v2026 = vsel %vm1376, %v1929, 0
  %v2029 = vsel %vm1376, %v1930, 0
  %v2032 = vsel %vm1376, %v1931, 0
  %v2035 = vsel %vm1376, %v1932, 0
  %v2038 = vsel %vm1376, %v1933, 0
  %v2041 = vsel %vm1376, %v1934, 0
  %v2044 = vsel %vm1376, %v1935, 0
  %v2047 = vsel %vm1376, %v1936, 0
  %v2050 = vsel %vm1376, %v1937, 0
  %v2053 = vsel %vm1376, %v1938, 0
  %v2056 = vsel %vm1376, %v1939, 0
  %v2059 = vsel %vm1376, %v1940, 0
  %v2062 = vsel %vm1376, %v1941, 0
  %v2065 = vsel %vm1376, %v1942, 0
  %v2068 = vsel %vm1376, %v1943, 0
  %v2071 = vsel %vm1376, %v1944, 0
  %v2074 = vsel %vm1376, %v1945, 0
  %v2077 = vsel %vm1376, %v1946, 0
  %v2080 = vsel %vm1376, %v1947, 0
  %v2083 = vsel %vm1376, %v1948, 0
  %v2086 = vsel %vm1376, %v1949, 0
  %v2089 = vsel %vm1376, %v1950, 0
  %v2092 = vsel %vm1376, %v1951, 0
  %v2095 = vsel %vm1376, %v1952, 0
  %2097 = vmatprep.subr.mxu0 0.0
  %2098 = vmatpush1.msra.mxu0 %v14
  %2099 = vmatprep.subr.mxu0 0.0
  %2100 = vmatpush1.msra.mxu0 %v15
  %2101 = vmatprep.subr.mxu0 0.0
  %2102 = vmatpush1.msra.mxu0 %v16
  %2103 = vmatprep.subr.mxu0 0.0
  %2104 = vmatpush1.msra.mxu0 %v17
  %2105 = vmatprep.subr.mxu0 0.0
  %2106 = vmatpush1.msra.mxu0 %v18
  %2107 = vmatprep.subr.mxu0 0.0
  %2108 = vmatpush1.msra.mxu0 %v19
  %2109 = vmatprep.subr.mxu0 0.0
  %2110 = vmatpush1.msra.mxu0 %v20
  %2111 = vmatprep.subr.mxu0 0.0
  %2112 = vmatpush1.msra.mxu0 %v21
  %2113 = vmatprep.subr.mxu0 0.0
  %2114 = vmatpush1.msra.mxu0 %v22
  %2115 = vmatprep.subr.mxu0 0.0
  %2116 = vmatpush1.msra.mxu0 %v23
  %2117 = vmatprep.subr.mxu0 0.0
  %2118 = vmatpush1.msra.mxu0 %v24
  %2119 = vmatprep.subr.mxu0 0.0
  %2120 = vmatpush1.msra.mxu0 %v25
  %2121 = vmatprep.subr.mxu0 0.0
  %2122 = vmatpush1.msra.mxu0 0.0
  %2123 = vmatprep.subr.mxu0 0.0
  %2124 = vmatpush1.msra.mxu0 0.0
  %2125 = vmatprep.subr.mxu0 0.0
  %2126 = vmatpush1.msra.mxu0 0.0
  %2127 = vmatprep.subr.mxu0 0.0
  %2128 = vmatpush1.msra.mxu0 0.0
  %2129 = vmatprep.subr.mxu0 0.0
  %2130 = vmatpush1.msra.mxu0 0.0
  %2131 = vmatprep.subr.mxu0 0.0
  %2132 = vmatpush1.msra.mxu0 0.0
  %2133 = vmatprep.subr.mxu0 0.0
  %2134 = vmatpush1.msra.mxu0 0.0
  %2135 = vmatprep.subr.mxu0 0.0
  %2136 = vmatpush1.msra.mxu0 0.0
  %2137 = vmatprep.subr.mxu0 0.0
  %2138 = vmatpush1.msra.mxu0 0.0
  %2139 = vmatprep.subr.mxu0 0.0
  %2140 = vmatpush1.msra.mxu0 0.0
  %2141 = vmatprep.subr.mxu0 0.0
  %2142 = vmatpush1.msra.mxu0 0.0
  %2143 = vmatprep.subr.mxu0 0.0
  %2144 = vmatpush1.msra.mxu0 0.0
  %2145 = vmatprep.subr.mxu0 0.0
  %2146 = vmatpush1.msra.mxu0 0.0
  %2147 = vmatprep.subr.mxu0 0.0
  %2148 = vmatpush1.msra.mxu0 0.0
  %2149 = vmatprep.subr.mxu0 0.0
  %2150 = vmatpush1.msra.mxu0 0.0
  %2151 = vmatprep.subr.mxu0 0.0
  %2152 = vmatpush1.msra.mxu0 0.0
  %2153 = vmatprep.subr.mxu0 0.0
  %2154 = vmatpush1.msra.mxu0 0.0
  %2155 = vmatprep.subr.mxu0 0.0
  %2156 = vmatpush1.msra.mxu0 0.0
  %2157 = vmatprep.subr.mxu0 0.0
  %2158 = vmatpush1.msra.mxu0 0.0
  %2159 = vmatprep.subr.mxu0 0.0
  %2160 = vmatpush1.msra.mxu0 0.0
  %2161 = vmatprep.mubr.f32.mxu0 0.0
  %2162 = vmatmul.mubr.f32.gmra.mrb[0].mxu0 %v1954
  %v2163 = vpop.f32.mrb[0].mxu0
  %v2164 = vadd.f32 0.0, %v2163
  %v2165 = vpop.f32.mrb[0].mxu0
  %2166 = vmatprep.mubr.f32.mxu0 0.0
  %2167 = vmatmul.mubr.f32.gmra.mrb[0].mxu0 %v1957
  %v2168 = vpop.f32.mrb[0].mxu0
  %v2169 = vadd.f32 0.0, %v2168
  %v2170 = vpop.f32.mrb[0].mxu0
  %2171 = vmatprep.mubr.f32.mxu0 0.0
  %2172 = vmatmul.mubr.f32.gmra.mrb[0].mxu0 %v1960
  %v2173 = vpop.f32.mrb[0].mxu0
  %v2174 = vadd.f32 0.0, %v2173
  %v2175 = vpop.f32.mrb[0].mxu0
  %2176 = vmatprep.mubr.f32.mxu0 0.0
  %2177 = vmatmul.mubr.f32.gmra.mrb[0].mxu0 %v1963
  %v2178 = vpop.f32.mrb[0].mxu0
  %v2179 = vadd.f32 0.0, %v2178
  %v2180 = vpop.f32.mrb[0].mxu0
  %2181 = vmatprep.mubr.f32.mxu0 0.0
  %2182 = vmatmul.mubr.f32.gmra.mrb[0].mxu0 %v1966
  %v2183 = vpop.f32.mrb[0].mxu0
  %v2184 = vadd.f32 0.0, %v2183
  %v2185 = vpop.f32.mrb[0].mxu0
  %2186 = vmatprep.mubr.f32.mxu0 0.0
  %2187 = vmatmul.mubr.f32.gmra.mrb[0].mxu0 %v1969
  %v2188 = vpop.f32.mrb[0].mxu0
  %v2189 = vadd.f32 0.0, %v2188
  %v2190 = vpop.f32.mrb[0].mxu0
  %2191 = vmatprep.mubr.f32.mxu0 0.0
  %2192 = vmatmul.mubr.f32.gmra.mrb[0].mxu0 %v1972
  %v2193 = vpop.f32.mrb[0].mxu0
  %v2194 = vadd.f32 0.0, %v2193
  %v2195 = vpop.f32.mrb[0].mxu0
  %2196 = vmatprep.mubr.f32.mxu0 0.0
  %2197 = vmatmul.mubr.f32.gmra.mrb[0].mxu0 %v1975
  %v2198 = vpop.f32.mrb[0].mxu0
  %v2199 = vadd.f32 0.0, %v2198
  %v2200 = vpop.f32.mrb[0].mxu0
  %2201 = vmatprep.mubr.f32.mxu0 0.0
  %2202 = vmatmul.mubr.f32.gmra.mrb[0].mxu0 %v1978
  %v2203 = vpop.f32.mrb[0].mxu0
  %v2204 = vadd.f32 0.0, %v2203
  %v2205 = vpop.f32.mrb[0].mxu0
  %2206 = vmatprep.mubr.f32.mxu0 0.0
  %2207 = vmatmul.mubr.f32.gmra.mrb[0].mxu0 %v1981
  %v2208 = vpop.f32.mrb[0].mxu0
  %v2209 = vadd.f32 0.0, %v2208
  %v2210 = vpop.f32.mrb[0].mxu0
  %2211 = vmatprep.mubr.f32.mxu0 0.0
  %2212 = vmatmul.mubr.f32.gmra.mrb[0].mxu0 %v1984
  %v2213 = vpop.f32.mrb[0].mxu0
  %v2214 = vadd.f32 0.0, %v2213
  %v2215 = vpop.f32.mrb[0].mxu0
  %2216 = vmatprep.mubr.f32.mxu0 0.0
  %2217 = vmatmul.mubr.f32.gmra.mrb[0].mxu0 %v1987
  %v2218 = vpop.f32.mrb[0].mxu0
  %v2219 = vadd.f32 0.0, %v2218
  %v2220 = vpop.f32.mrb[0].mxu0
  %2221 = vmatprep.mubr.f32.mxu0 0.0
  %2222 = vmatmul.mubr.f32.gmra.mrb[0].mxu0 %v1990
  %v2223 = vpop.f32.mrb[0].mxu0
  %v2224 = vadd.f32 0.0, %v2223
  %v2225 = vpop.f32.mrb[0].mxu0
  %2226 = vmatprep.mubr.f32.mxu0 0.0
  %2227 = vmatmul.mubr.f32.gmra.mrb[0].mxu0 %v1993
  %v2228 = vpop.f32.mrb[0].mxu0
  %v2229 = vadd.f32 0.0, %v2228
  %v2230 = vpop.f32.mrb[0].mxu0
  %2231 = vmatprep.mubr.f32.mxu0 0.0
  %2232 = vmatmul.mubr.f32.gmra.mrb[0].mxu0 %v1996
  %v2233 = vpop.f32.mrb[0].mxu0
  %v2234 = vadd.f32 0.0, %v2233
  %v2235 = vpop.f32.mrb[0].mxu0
  %2236 = vmatprep.mubr.f32.mxu0 0.0
  %2237 = vmatmul.mubr.f32.gmra.mrb[0].mxu0 %v1999
  %v2238 = vpop.f32.mrb[0].mxu0
  %v2239 = vadd.f32 0.0, %v2238
  %v2240 = vpop.f32.mrb[0].mxu0
  %2241 = vmatprep.mubr.f32.mxu0 0.0
  %2242 = vmatmul.mubr.f32.gmra.mrb[0].mxu0 %v2002
  %v2243 = vpop.f32.mrb[0].mxu0
  %v2244 = vadd.f32 0.0, %v2243
  %v2245 = vpop.f32.mrb[0].mxu0
  %2246 = vmatprep.mubr.f32.mxu0 0.0
  %2247 = vmatmul.mubr.f32.gmra.mrb[0].mxu0 %v2005
  %v2248 = vpop.f32.mrb[0].mxu0
  %v2249 = vadd.f32 0.0, %v2248
  %v2250 = vpop.f32.mrb[0].mxu0
  %2251 = vmatprep.mubr.f32.mxu0 0.0
  %2252 = vmatmul.mubr.f32.gmra.mrb[0].mxu0 %v2008
  %v2253 = vpop.f32.mrb[0].mxu0
  %v2254 = vadd.f32 0.0, %v2253
  %v2255 = vpop.f32.mrb[0].mxu0
  %2256 = vmatprep.mubr.f32.mxu0 0.0
  %2257 = vmatmul.mubr.f32.gmra.mrb[0].mxu0 %v2011
  %v2258 = vpop.f32.mrb[0].mxu0
  %v2259 = vadd.f32 0.0, %v2258
  %v2260 = vpop.f32.mrb[0].mxu0
  %2261 = vmatprep.mubr.f32.mxu0 0.0
  %2262 = vmatmul.mubr.f32.gmra.mrb[0].mxu0 %v2014
  %v2263 = vpop.f32.mrb[0].mxu0
  %v2264 = vadd.f32 0.0, %v2263
  %v2265 = vpop.f32.mrb[0].mxu0
  %2266 = vmatprep.mubr.f32.mxu0 0.0
  %2267 = vmatmul.mubr.f32.gmra.mrb[0].mxu0 %v2017
  %v2268 = vpop.f32.mrb[0].mxu0
  %v2269 = vadd.f32 0.0, %v2268
  %v2270 = vpop.f32.mrb[0].mxu0
  %2271 = vmatprep.mubr.f32.mxu0 0.0
  %2272 = vmatmul.mubr.f32.gmra.mrb[0].mxu0 %v2020
  %v2273 = vpop.f32.mrb[0].mxu0
  %v2274 = vadd.f32 0.0, %v2273
  %v2275 = vpop.f32.mrb[0].mxu0
  %2276 = vmatprep.mubr.f32.mxu0 0.0
  %2277 = vmatmul.mubr.f32.gmra.mrb[0].mxu0 %v2023
  %v2278 = vpop.f32.mrb[0].mxu0
  %v2279 = vadd.f32 0.0, %v2278
  %v2280 = vpop.f32.mrb[0].mxu0
  %2281 = vmatprep.mubr.f32.mxu0 0.0
  %2282 = vmatmul.mubr.f32.gmra.mrb[0].mxu0 %v2026
  %v2283 = vpop.f32.mrb[0].mxu0
  %v2284 = vadd.f32 0.0, %v2283
  %v2285 = vpop.f32.mrb[0].mxu0
  %2286 = vmatprep.mubr.f32.mxu0 0.0
  %2287 = vmatmul.mubr.f32.gmra.mrb[0].mxu0 %v2029
  %v2288 = vpop.f32.mrb[0].mxu0
  %v2289 = vadd.f32 0.0, %v2288
  %v2290 = vpop.f32.mrb[0].mxu0
  %2291 = vmatprep.mubr.f32.mxu0 0.0
  %2292 = vmatmul.mubr.f32.gmra.mrb[0].mxu0 %v2032
  %v2293 = vpop.f32.mrb[0].mxu0
  %v2294 = vadd.f32 0.0, %v2293
  %v2295 = vpop.f32.mrb[0].mxu0
  %2296 = vmatprep.mubr.f32.mxu0 0.0
  %2297 = vmatmul.mubr.f32.gmra.mrb[0].mxu0 %v2035
  %v2298 = vpop.f32.mrb[0].mxu0
  %v2299 = vadd.f32 0.0, %v2298
  %v2300 = vpop.f32.mrb[0].mxu0
  %2301 = vmatprep.mubr.f32.mxu0 0.0
  %2302 = vmatmul.mubr.f32.gmra.mrb[0].mxu0 %v2038
  %v2303 = vpop.f32.mrb[0].mxu0
  %v2304 = vadd.f32 0.0, %v2303
  %v2305 = vpop.f32.mrb[0].mxu0
  %2306 = vmatprep.mubr.f32.mxu0 0.0
  %2307 = vmatmul.mubr.f32.gmra.mrb[0].mxu0 %v2041
  %v2308 = vpop.f32.mrb[0].mxu0
  %v2309 = vadd.f32 0.0, %v2308
  %v2310 = vpop.f32.mrb[0].mxu0
  %2311 = vmatprep.mubr.f32.mxu0 0.0
  %2312 = vmatmul.mubr.f32.gmra.mrb[0].mxu0 %v2044
  %v2313 = vpop.f32.mrb[0].mxu0
  %v2314 = vadd.f32 0.0, %v2313
  %v2315 = vpop.f32.mrb[0].mxu0
  %2316 = vmatprep.mubr.f32.mxu0 0.0
  %2317 = vmatmul.mubr.f32.gmra.mrb[0].mxu0 %v2047
  %v2318 = vpop.f32.mrb[0].mxu0
  %v2319 = vadd.f32 0.0, %v2318
  %v2320 = vpop.f32.mrb[0].mxu0
  %2321 = vmatprep.mubr.f32.mxu0 0.0
  %2322 = vmatmul.mubr.f32.gmra.mrb[0].mxu0 %v2050
  %v2323 = vpop.f32.mrb[0].mxu0
  %v2324 = vadd.f32 0.0, %v2323
  %v2325 = vpop.f32.mrb[0].mxu0
  %2326 = vmatprep.mubr.f32.mxu0 0.0
  %2327 = vmatmul.mubr.f32.gmra.mrb[0].mxu0 %v2053
  %v2328 = vpop.f32.mrb[0].mxu0
  %v2329 = vadd.f32 0.0, %v2328
  %v2330 = vpop.f32.mrb[0].mxu0
  %2331 = vmatprep.mubr.f32.mxu0 0.0
  %2332 = vmatmul.mubr.f32.gmra.mrb[0].mxu0 %v2056
  %v2333 = vpop.f32.mrb[0].mxu0
  %v2334 = vadd.f32 0.0, %v2333
  %v2335 = vpop.f32.mrb[0].mxu0
  %2336 = vmatprep.mubr.f32.mxu0 0.0
  %2337 = vmatmul.mubr.f32.gmra.mrb[0].mxu0 %v2059
  %v2338 = vpop.f32.mrb[0].mxu0
  %v2339 = vadd.f32 0.0, %v2338
  %v2340 = vpop.f32.mrb[0].mxu0
  %2341 = vmatprep.mubr.f32.mxu0 0.0
  %2342 = vmatmul.mubr.f32.gmra.mrb[0].mxu0 %v2062
  %v2343 = vpop.f32.mrb[0].mxu0
  %v2344 = vadd.f32 0.0, %v2343
  %v2345 = vpop.f32.mrb[0].mxu0
  %2346 = vmatprep.mubr.f32.mxu0 0.0
  %2347 = vmatmul.mubr.f32.gmra.mrb[0].mxu0 %v2065
  %v2348 = vpop.f32.mrb[0].mxu0
  %v2349 = vadd.f32 0.0, %v2348
  %v2350 = vpop.f32.mrb[0].mxu0
  %2351 = vmatprep.mubr.f32.mxu0 0.0
  %2352 = vmatmul.mubr.f32.gmra.mrb[0].mxu0 %v2068
  %v2353 = vpop.f32.mrb[0].mxu0
  %v2354 = vadd.f32 0.0, %v2353
  %v2355 = vpop.f32.mrb[0].mxu0
  %2356 = vmatprep.mubr.f32.mxu0 0.0
  %2357 = vmatmul.mubr.f32.gmra.mrb[0].mxu0 %v2071
  %v2358 = vpop.f32.mrb[0].mxu0
  %v2359 = vadd.f32 0.0, %v2358
  %v2360 = vpop.f32.mrb[0].mxu0
  %2361 = vmatprep.mubr.f32.mxu0 0.0
  %2362 = vmatmul.mubr.f32.gmra.mrb[0].mxu0 %v2074
  %v2363 = vpop.f32.mrb[0].mxu0
  %v2364 = vadd.f32 0.0, %v2363
  %v2365 = vpop.f32.mrb[0].mxu0
  %2366 = vmatprep.mubr.f32.mxu0 0.0
  %2367 = vmatmul.mubr.f32.gmra.mrb[0].mxu0 %v2077
  %v2368 = vpop.f32.mrb[0].mxu0
  %v2369 = vadd.f32 0.0, %v2368
  %v2370 = vpop.f32.mrb[0].mxu0
  %2371 = vmatprep.mubr.f32.mxu0 0.0
  %2372 = vmatmul.mubr.f32.gmra.mrb[0].mxu0 %v2080
  %v2373 = vpop.f32.mrb[0].mxu0
  %v2374 = vadd.f32 0.0, %v2373
  %v2375 = vpop.f32.mrb[0].mxu0
  %2376 = vmatprep.mubr.f32.mxu0 0.0
  %2377 = vmatmul.mubr.f32.gmra.mrb[0].mxu0 %v2083
  %v2378 = vpop.f32.mrb[0].mxu0
  %v2379 = vadd.f32 0.0, %v2378
  %v2380 = vpop.f32.mrb[0].mxu0
  %2381 = vmatprep.mubr.f32.mxu0 0.0
  %2382 = vmatmul.mubr.f32.gmra.mrb[0].mxu0 %v2086
  %v2383 = vpop.f32.mrb[0].mxu0
  %v2384 = vadd.f32 0.0, %v2383
  %v2385 = vpop.f32.mrb[0].mxu0
  %2386 = vmatprep.mubr.f32.mxu0 0.0
  %2387 = vmatmul.mubr.f32.gmra.mrb[0].mxu0 %v2089
  %v2388 = vpop.f32.mrb[0].mxu0
  %v2389 = vadd.f32 0.0, %v2388
  %v2390 = vpop.f32.mrb[0].mxu0
  %2391 = vmatprep.mubr.f32.mxu0 0.0
  %2392 = vmatmul.mubr.f32.gmra.mrb[0].mxu0 %v2092
  %v2393 = vpop.f32.mrb[0].mxu0
  %v2394 = vadd.f32 0.0, %v2393
  %v2395 = vpop.f32.mrb[0].mxu0
  %2396 = vmatprep.mubr.f32.mxu0 0.0
  %2397 = vmatmul.mubr.f32.gmra.mrb[0].mxu0 %v2095
  %v2398 = vpop.f32.mrb[0].mxu0
  %v2399 = vadd.f32 0.0, %v2398
  %v2400 = vpop.f32.mrb[0].mxu0
  %2401 = vdwg.mxu0
  %v2403 = vsel %vm230, %v2224, 0
  %v2406 = vsel %vm230, %v2229, 0
  %v2409 = vsel %vm230, %v2234, 0
  %v2412 = vsel %vm230, %v2239, 0
  %v2415 = vsel %vm230, %v2244, 0
  %v2418 = vsel %vm230, %v2249, 0
  %v2421 = vsel %vm230, %v2254, 0
  %v2424 = vsel %vm230, %v2259, 0
  %v2427 = vsel %vm230, %v2264, 0
  %v2430 = vsel %vm230, %v2269, 0
  %v2433 = vsel %vm230, %v2274, 0
  %v2436 = vsel %vm230, %v2279, 0
  %2438 = vmatprep.subr.mxu0 0.0
  %2439 = vmatpush1.msra.mxu0 %v55
  %2440 = vmatprep.subr.mxu0 0.0
  %2441 = vmatpush1.msra.mxu0 %v56
  %2442 = vmatprep.subr.mxu0 0.0
  %2443 = vmatpush1.msra.mxu0 %v57
  %2444 = vmatprep.subr.mxu0 0.0
  %2445 = vmatpush1.msra.mxu0 %v58
  %2446 = vmatprep.subr.mxu0 0.0
  %2447 = vmatpush1.msra.mxu0 0.0
  %2448 = vmatprep.subr.mxu0 0.0
  %2449 = vmatpush1.msra.mxu0 0.0
  %2450 = vmatprep.subr.mxu0 0.0
  %2451 = vmatpush1.msra.mxu0 0.0
  %2452 = vmatprep.subr.mxu0 0.0
  %2453 = vmatpush1.msra.mxu0 0.0
  %2454 = vmatprep.subr.mxu0 0.0
  %2455 = vmatpush1.msra.mxu0 0.0
  %2456 = vmatprep.subr.mxu0 0.0
  %2457 = vmatpush1.msra.mxu0 0.0
  %2458 = vmatprep.subr.mxu0 0.0
  %2459 = vmatpush1.msra.mxu0 0.0
  %2460 = vmatprep.subr.mxu0 0.0
  %2461 = vmatpush1.msra.mxu0 0.0
  %2462 = vmatprep.subr.mxu0 0.0
  %2463 = vmatpush1.msra.mxu0 0.0
  %2464 = vmatprep.subr.mxu0 0.0
  %2465 = vmatpush1.msra.mxu0 0.0
  %2466 = vmatprep.subr.mxu0 0.0
  %2467 = vmatpush1.msra.mxu0 0.0
  %2468 = vmatprep.subr.mxu0 0.0
  %2469 = vmatpush1.msra.mxu0 0.0
  %2470 = vmatprep.subr.mxu0 0.0
  %2471 = vmatpush1.msra.mxu0 0.0
  %2472 = vmatprep.subr.mxu0 0.0
  %2473 = vmatpush1.msra.mxu0 0.0
  %2474 = vmatprep.subr.mxu0 0.0
  %2475 = vmatpush1.msra.mxu0 0.0
  %2476 = vmatprep.subr.mxu0 0.0
  %2477 = vmatpush1.msra.mxu0 0.0
  %2478 = vmatprep.subr.mxu0 0.0
  %2479 = vmatpush1.msra.mxu0 0.0
  %2480 = vmatprep.subr.mxu0 0.0
  %2481 = vmatpush1.msra.mxu0 0.0
  %2482 = vmatprep.subr.mxu0 0.0
  %2483 = vmatpush1.msra.mxu0 0.0
  %2484 = vmatprep.subr.mxu0 0.0
  %2485 = vmatpush1.msra.mxu0 0.0
  %2486 = vmatprep.subr.mxu0 0.0
  %2487 = vmatpush1.msra.mxu0 0.0
  %2488 = vmatprep.subr.mxu0 0.0
  %2489 = vmatpush1.msra.mxu0 0.0
  %2490 = vmatprep.subr.mxu0 0.0
  %2491 = vmatpush1.msra.mxu0 0.0
  %2492 = vmatprep.subr.mxu0 0.0
  %2493 = vmatpush1.msra.mxu0 0.0
  %2494 = vmatprep.subr.mxu0 0.0
  %2495 = vmatpush1.msra.mxu0 0.0
  %2496 = vmatprep.subr.mxu0 0.0
  %2497 = vmatpush1.msra.mxu0 0.0
  %2498 = vmatprep.subr.mxu0 0.0
  %2499 = vmatpush1.msra.mxu0 0.0
  %2500 = vmatprep.subr.mxu0 0.0
  %2501 = vmatpush1.msra.mxu0 0.0
  %2502 = vmatprep.mubr.f32.mxu0 0.0
  %2503 = vmatmul.mubr.f32.gmra.mrb[0].mxu0 %v2403
  %v2504 = vpop.f32.mrb[0].mxu0
  %v2505 = vadd.f32 0.0, %v2504
  %v2506 = vpop.f32.mrb[0].mxu0
  %2507 = vmatprep.mubr.f32.mxu0 0.0
  %2508 = vmatmul.mubr.f32.gmra.mrb[0].mxu0 %v2406
  %v2509 = vpop.f32.mrb[0].mxu0
  %v2510 = vadd.f32 0.0, %v2509
  %v2511 = vpop.f32.mrb[0].mxu0
  %2512 = vmatprep.mubr.f32.mxu0 0.0
  %2513 = vmatmul.mubr.f32.gmra.mrb[0].mxu0 %v2409
  %v2514 = vpop.f32.mrb[0].mxu0
  %v2515 = vadd.f32 0.0, %v2514
  %v2516 = vpop.f32.mrb[0].mxu0
  %2517 = vmatprep.mubr.f32.mxu0 0.0
  %2518 = vmatmul.mubr.f32.gmra.mrb[0].mxu0 %v2412
  %v2519 = vpop.f32.mrb[0].mxu0
  %v2520 = vadd.f32 0.0, %v2519
  %v2521 = vpop.f32.mrb[0].mxu0
  %2522 = vmatprep.mubr.f32.mxu0 0.0
  %2523 = vmatmul.mubr.f32.gmra.mrb[0].mxu0 %v2415
  %v2524 = vpop.f32.mrb[0].mxu0
  %v2525 = vadd.f32 0.0, %v2524
  %v2526 = vpop.f32.mrb[0].mxu0
  %2527 = vmatprep.mubr.f32.mxu0 0.0
  %2528 = vmatmul.mubr.f32.gmra.mrb[0].mxu0 %v2418
  %v2529 = vpop.f32.mrb[0].mxu0
  %v2530 = vadd.f32 0.0, %v2529
  %v2531 = vpop.f32.mrb[0].mxu0
  %2532 = vmatprep.mubr.f32.mxu0 0.0
  %2533 = vmatmul.mubr.f32.gmra.mrb[0].mxu0 %v2421
  %v2534 = vpop.f32.mrb[0].mxu0
  %v2535 = vadd.f32 0.0, %v2534
  %v2536 = vpop.f32.mrb[0].mxu0
  %2537 = vmatprep.mubr.f32.mxu0 0.0
  %2538 = vmatmul.mubr.f32.gmra.mrb[0].mxu0 %v2424
  %v2539 = vpop.f32.mrb[0].mxu0
  %v2540 = vadd.f32 0.0, %v2539
  %v2541 = vpop.f32.mrb[0].mxu0
  %2542 = vmatprep.mubr.f32.mxu0 0.0
  %2543 = vmatmul.mubr.f32.gmra.mrb[0].mxu0 %v2427
  %v2544 = vpop.f32.mrb[0].mxu0
  %v2545 = vadd.f32 0.0, %v2544
  %v2546 = vpop.f32.mrb[0].mxu0
  %2547 = vmatprep.mubr.f32.mxu0 0.0
  %2548 = vmatmul.mubr.f32.gmra.mrb[0].mxu0 %v2430
  %v2549 = vpop.f32.mrb[0].mxu0
  %v2550 = vadd.f32 0.0, %v2549
  %v2551 = vpop.f32.mrb[0].mxu0
  %2552 = vmatprep.mubr.f32.mxu0 0.0
  %2553 = vmatmul.mubr.f32.gmra.mrb[0].mxu0 %v2433
  %v2554 = vpop.f32.mrb[0].mxu0
  %v2555 = vadd.f32 0.0, %v2554
  %v2556 = vpop.f32.mrb[0].mxu0
  %2557 = vmatprep.mubr.f32.mxu0 0.0
  %2558 = vmatmul.mubr.f32.gmra.mrb[0].mxu0 %v2436
  %v2559 = vpop.f32.mrb[0].mxu0
  %v2560 = vadd.f32 0.0, %v2559
  %v2561 = vpop.f32.mrb[0].mxu0
  %2562 = vdwg.mxu0
  %v2564 = vsel %vm230, %v2164, 0
  %v2567 = vsel %vm230, %v2169, 0
  %v2570 = vsel %vm230, %v2174, 0
  %v2573 = vsel %vm230, %v2179, 0
  %v2576 = vsel %vm230, %v2184, 0
  %v2579 = vsel %vm230, %v2189, 0
  %v2582 = vsel %vm230, %v2194, 0
  %v2585 = vsel %vm230, %v2199, 0
  %v2588 = vsel %vm230, %v2204, 0
  %v2591 = vsel %vm230, %v2209, 0
  %v2594 = vsel %vm230, %v2214, 0
  %v2597 = vsel %vm230, %v2219, 0
  %2599 = vmatprep.subr.mxu0 0.0
  %2600 = vmatpush1.msra.mxu0 %v51
  %2601 = vmatprep.subr.mxu0 0.0
  %2602 = vmatpush1.msra.mxu0 %v52
  %2603 = vmatprep.subr.mxu0 0.0
  %2604 = vmatpush1.msra.mxu0 %v53
  %2605 = vmatprep.subr.mxu0 0.0
  %2606 = vmatpush1.msra.mxu0 %v54
  %2607 = vmatprep.subr.mxu0 0.0
  %2608 = vmatpush1.msra.mxu0 0.0
  %2609 = vmatprep.subr.mxu0 0.0
  %2610 = vmatpush1.msra.mxu0 0.0
  %2611 = vmatprep.subr.mxu0 0.0
  %2612 = vmatpush1.msra.mxu0 0.0
  %2613 = vmatprep.subr.mxu0 0.0
  %2614 = vmatpush1.msra.mxu0 0.0
  %2615 = vmatprep.subr.mxu0 0.0
  %2616 = vmatpush1.msra.mxu0 0.0
  %2617 = vmatprep.subr.mxu0 0.0
  %2618 = vmatpush1.msra.mxu0 0.0
  %2619 = vmatprep.subr.mxu0 0.0
  %2620 = vmatpush1.msra.mxu0 0.0
  %2621 = vmatprep.subr.mxu0 0.0
  %2622 = vmatpush1.msra.mxu0 0.0
  %2623 = vmatprep.subr.mxu0 0.0
  %2624 = vmatpush1.msra.mxu0 0.0
  %2625 = vmatprep.subr.mxu0 0.0
  %2626 = vmatpush1.msra.mxu0 0.0
  %2627 = vmatprep.subr.mxu0 0.0
  %2628 = vmatpush1.msra.mxu0 0.0
  %2629 = vmatprep.subr.mxu0 0.0
  %2630 = vmatpush1.msra.mxu0 0.0
  %2631 = vmatprep.subr.mxu0 0.0
  %2632 = vmatpush1.msra.mxu0 0.0
  %2633 = vmatprep.subr.mxu0 0.0
  %2634 = vmatpush1.msra.mxu0 0.0
  %2635 = vmatprep.subr.mxu0 0.0
  %2636 = vmatpush1.msra.mxu0 0.0
  %2637 = vmatprep.subr.mxu0 0.0
  %2638 = vmatpush1.msra.mxu0 0.0
  %2639 = vmatprep.subr.mxu0 0.0
  %2640 = vmatpush1.msra.mxu0 0.0
  %2641 = vmatprep.subr.mxu0 0.0
  %2642 = vmatpush1.msra.mxu0 0.0
  %2643 = vmatprep.subr.mxu0 0.0
  %2644 = vmatpush1.msra.mxu0 0.0
  %2645 = vmatprep.subr.mxu0 0.0
  %2646 = vmatpush1.msra.mxu0 0.0
  %2647 = vmatprep.subr.mxu0 0.0
  %2648 = vmatpush1.msra.mxu0 0.0
  %2649 = vmatprep.subr.mxu0 0.0
  %2650 = vmatpush1.msra.mxu0 0.0
  %2651 = vmatprep.subr.mxu0 0.0
  %2652 = vmatpush1.msra.mxu0 0.0
  %2653 = vmatprep.subr.mxu0 0.0
  %2654 = vmatpush1.msra.mxu0 0.0
  %2655 = vmatprep.subr.mxu0 0.0
  %2656 = vmatpush1.msra.mxu0 0.0
  %2657 = vmatprep.subr.mxu0 0.0
  %2658 = vmatpush1.msra.mxu0 0.0
  %2659 = vmatprep.subr.mxu0 0.0
  %2660 = vmatpush1.msra.mxu0 0.0
  %2661 = vmatprep.subr.mxu0 0.0
  %2662 = vmatpush1.msra.mxu0 0.0
  %2663 = vmatprep.mubr.f32.mxu0 0.0
  %2664 = vmatmul.mubr.f32.gmra.mrb[0].mxu0 %v2564
  %v2665 = vpop.f32.mrb[0].mxu0
  %v2666 = vadd.f32 %v2505, %v2665
  %v2667 = vpop.f32.mrb[0].mxu0
  %2668 = vmatprep.mubr.f32.mxu0 0.0
  %2669 = vmatmul.mubr.f32.gmra.mrb[0].mxu0 %v2567
  %v2670 = vpop.f32.mrb[0].mxu0
  %v2671 = vadd.f32 %v2510, %v2670
  %v2672 = vpop.f32.mrb[0].mxu0
  %2673 = vmatprep.mubr.f32.mxu0 0.0
  %2674 = vmatmul.mubr.f32.gmra.mrb[0].mxu0 %v2570
  %v2675 = vpop.f32.mrb[0].mxu0
  %v2676 = vadd.f32 %v2515, %v2675
  %v2677 = vpop.f32.mrb[0].mxu0
  %2678 = vmatprep.mubr.f32.mxu0 0.0
  %2679 = vmatmul.mubr.f32.gmra.mrb[0].mxu0 %v2573
  %v2680 = vpop.f32.mrb[0].mxu0
  %v2681 = vadd.f32 %v2520, %v2680
  %v2682 = vpop.f32.mrb[0].mxu0
  %2683 = vmatprep.mubr.f32.mxu0 0.0
  %2684 = vmatmul.mubr.f32.gmra.mrb[0].mxu0 %v2576
  %v2685 = vpop.f32.mrb[0].mxu0
  %v2686 = vadd.f32 %v2525, %v2685
  %v2687 = vpop.f32.mrb[0].mxu0
  %2688 = vmatprep.mubr.f32.mxu0 0.0
  %2689 = vmatmul.mubr.f32.gmra.mrb[0].mxu0 %v2579
  %v2690 = vpop.f32.mrb[0].mxu0
  %v2691 = vadd.f32 %v2530, %v2690
  %v2692 = vpop.f32.mrb[0].mxu0
  %2693 = vmatprep.mubr.f32.mxu0 0.0
  %2694 = vmatmul.mubr.f32.gmra.mrb[0].mxu0 %v2582
  %v2695 = vpop.f32.mrb[0].mxu0
  %v2696 = vadd.f32 %v2535, %v2695
  %v2697 = vpop.f32.mrb[0].mxu0
  %2698 = vmatprep.mubr.f32.mxu0 0.0
  %2699 = vmatmul.mubr.f32.gmra.mrb[0].mxu0 %v2585
  %v2700 = vpop.f32.mrb[0].mxu0
  %v2701 = vadd.f32 %v2540, %v2700
  %v2702 = vpop.f32.mrb[0].mxu0
  %2703 = vmatprep.mubr.f32.mxu0 0.0
  %2704 = vmatmul.mubr.f32.gmra.mrb[0].mxu0 %v2588
  %v2705 = vpop.f32.mrb[0].mxu0
  %v2706 = vadd.f32 %v2545, %v2705
  %v2707 = vpop.f32.mrb[0].mxu0
  %2708 = vmatprep.mubr.f32.mxu0 0.0
  %2709 = vmatmul.mubr.f32.gmra.mrb[0].mxu0 %v2591
  %v2710 = vpop.f32.mrb[0].mxu0
  %v2711 = vadd.f32 %v2550, %v2710
  %v2712 = vpop.f32.mrb[0].mxu0
  %2713 = vmatprep.mubr.f32.mxu0 0.0
  %2714 = vmatmul.mubr.f32.gmra.mrb[0].mxu0 %v2594
  %v2715 = vpop.f32.mrb[0].mxu0
  %v2716 = vadd.f32 %v2555, %v2715
  %v2717 = vpop.f32.mrb[0].mxu0
  %2718 = vmatprep.mubr.f32.mxu0 0.0
  %2719 = vmatmul.mubr.f32.gmra.mrb[0].mxu0 %v2597
  %v2720 = vpop.f32.mrb[0].mxu0
  %v2721 = vadd.f32 %v2560, %v2720
  %v2722 = vpop.f32.mrb[0].mxu0
  %2723 = vdwg.mxu0
  %v2725 = vsel %vm230, %v2284, 0
  %v2728 = vsel %vm230, %v2289, 0
  %v2731 = vsel %vm230, %v2294, 0
  %v2734 = vsel %vm230, %v2299, 0
  %v2737 = vsel %vm230, %v2304, 0
  %v2740 = vsel %vm230, %v2309, 0
  %v2743 = vsel %vm230, %v2314, 0
  %v2746 = vsel %vm230, %v2319, 0
  %v2749 = vsel %vm230, %v2324, 0
  %v2752 = vsel %vm230, %v2329, 0
  %v2755 = vsel %vm230, %v2334, 0
  %v2758 = vsel %vm230, %v2339, 0
  %2760 = vmatprep.subr.mxu0 0.0
  %2761 = vmatpush1.msra.mxu0 %v59
  %2762 = vmatprep.subr.mxu0 0.0
  %2763 = vmatpush1.msra.mxu0 %v60
  %2764 = vmatprep.subr.mxu0 0.0
  %2765 = vmatpush1.msra.mxu0 %v61
  %2766 = vmatprep.subr.mxu0 0.0
  %2767 = vmatpush1.msra.mxu0 %v62
  %2768 = vmatprep.subr.mxu0 0.0
  %2769 = vmatpush1.msra.mxu0 0.0
  %2770 = vmatprep.subr.mxu0 0.0
  %2771 = vmatpush1.msra.mxu0 0.0
  %2772 = vmatprep.subr.mxu0 0.0
  %2773 = vmatpush1.msra.mxu0 0.0
  %2774 = vmatprep.subr.mxu0 0.0
  %2775 = vmatpush1.msra.mxu0 0.0
  %2776 = vmatprep.subr.mxu0 0.0
  %2777 = vmatpush1.msra.mxu0 0.0
  %2778 = vmatprep.subr.mxu0 0.0
  %2779 = vmatpush1.msra.mxu0 0.0
  %2780 = vmatprep.subr.mxu0 0.0
  %2781 = vmatpush1.msra.mxu0 0.0
  %2782 = vmatprep.subr.mxu0 0.0
  %2783 = vmatpush1.msra.mxu0 0.0
  %2784 = vmatprep.subr.mxu0 0.0
  %2785 = vmatpush1.msra.mxu0 0.0
  %2786 = vmatprep.subr.mxu0 0.0
  %2787 = vmatpush1.msra.mxu0 0.0
  %2788 = vmatprep.subr.mxu0 0.0
  %2789 = vmatpush1.msra.mxu0 0.0
  %2790 = vmatprep.subr.mxu0 0.0
  %2791 = vmatpush1.msra.mxu0 0.0
  %2792 = vmatprep.subr.mxu0 0.0
  %2793 = vmatpush1.msra.mxu0 0.0
  %2794 = vmatprep.subr.mxu0 0.0
  %2795 = vmatpush1.msra.mxu0 0.0
  %2796 = vmatprep.subr.mxu0 0.0
  %2797 = vmatpush1.msra.mxu0 0.0
  %2798 = vmatprep.subr.mxu0 0.0
  %2799 = vmatpush1.msra.mxu0 0.0
  %2800 = vmatprep.subr.mxu0 0.0
  %2801 = vmatpush1.msra.mxu0 0.0
  %2802 = vmatprep.subr.mxu0 0.0
  %2803 = vmatpush1.msra.mxu0 0.0
  %2804 = vmatprep.subr.mxu0 0.0
  %2805 = vmatpush1.msra.mxu0 0.0
  %2806 = vmatprep.subr.mxu0 0.0
  %2807 = vmatpush1.msra.mxu0 0.0
  %2808 = vmatprep.subr.mxu0 0.0
  %2809 = vmatpush1.msra.mxu0 0.0
  %2810 = vmatprep.subr.mxu0 0.0
  %2811 = vmatpush1.msra.mxu0 0.0
  %2812 = vmatprep.subr.mxu0 0.0
  %2813 = vmatpush1.msra.mxu0 0.0
  %2814 = vmatprep.subr.mxu0 0.0
  %2815 = vmatpush1.msra.mxu0 0.0
  %2816 = vmatprep.subr.mxu0 0.0
  %2817 = vmatpush1.msra.mxu0 0.0
  %2818 = vmatprep.subr.mxu0 0.0
  %2819 = vmatpush1.msra.mxu0 0.0
  %2820 = vmatprep.subr.mxu0 0.0
  %2821 = vmatpush1.msra.mxu0 0.0
  %2822 = vmatprep.subr.mxu0 0.0
  %2823 = vmatpush1.msra.mxu0 0.0
  %2824 = vmatprep.mubr.f32.mxu0 0.0
  %2825 = vmatmul.mubr.f32.gmra.mrb[0].mxu0 %v2725
  %v2826 = vpop.f32.mrb[0].mxu0
  %v2827 = vadd.f32 0.0, %v2826
  %v2828 = vpop.f32.mrb[0].mxu0
  %2829 = vmatprep.mubr.f32.mxu0 0.0
  %2830 = vmatmul.mubr.f32.gmra.mrb[0].mxu0 %v2728
  %v2831 = vpop.f32.mrb[0].mxu0
  %v2832 = vadd.f32 0.0, %v2831
  %v2833 = vpop.f32.mrb[0].mxu0
  %2834 = vmatprep.mubr.f32.mxu0 0.0
  %2835 = vmatmul.mubr.f32.gmra.mrb[0].mxu0 %v2731
  %v2836 = vpop.f32.mrb[0].mxu0
  %v2837 = vadd.f32 0.0, %v2836
  %v2838 = vpop.f32.mrb[0].mxu0
  %2839 = vmatprep.mubr.f32.mxu0 0.0
  %2840 = vmatmul.mubr.f32.gmra.mrb[0].mxu0 %v2734
  %v2841 = vpop.f32.mrb[0].mxu0
  %v2842 = vadd.f32 0.0, %v2841
  %v2843 = vpop.f32.mrb[0].mxu0
  %2844 = vmatprep.mubr.f32.mxu0 0.0
  %2845 = vmatmul.mubr.f32.gmra.mrb[0].mxu0 %v2737
  %v2846 = vpop.f32.mrb[0].mxu0
  %v2847 = vadd.f32 0.0, %v2846
  %v2848 = vpop.f32.mrb[0].mxu0
  %2849 = vmatprep.mubr.f32.mxu0 0.0
  %2850 = vmatmul.mubr.f32.gmra.mrb[0].mxu0 %v2740
  %v2851 = vpop.f32.mrb[0].mxu0
  %v2852 = vadd.f32 0.0, %v2851
  %v2853 = vpop.f32.mrb[0].mxu0
  %2854 = vmatprep.mubr.f32.mxu0 0.0
  %2855 = vmatmul.mubr.f32.gmra.mrb[0].mxu0 %v2743
  %v2856 = vpop.f32.mrb[0].mxu0
  %v2857 = vadd.f32 0.0, %v2856
  %v2858 = vpop.f32.mrb[0].mxu0
  %2859 = vmatprep.mubr.f32.mxu0 0.0
  %2860 = vmatmul.mubr.f32.gmra.mrb[0].mxu0 %v2746
  %v2861 = vpop.f32.mrb[0].mxu0
  %v2862 = vadd.f32 0.0, %v2861
  %v2863 = vpop.f32.mrb[0].mxu0
  %2864 = vmatprep.mubr.f32.mxu0 0.0
  %2865 = vmatmul.mubr.f32.gmra.mrb[0].mxu0 %v2749
  %v2866 = vpop.f32.mrb[0].mxu0
  %v2867 = vadd.f32 0.0, %v2866
  %v2868 = vpop.f32.mrb[0].mxu0
  %2869 = vmatprep.mubr.f32.mxu0 0.0
  %2870 = vmatmul.mubr.f32.gmra.mrb[0].mxu0 %v2752
  %v2871 = vpop.f32.mrb[0].mxu0
  %v2872 = vadd.f32 0.0, %v2871
  %v2873 = vpop.f32.mrb[0].mxu0
  %2874 = vmatprep.mubr.f32.mxu0 0.0
  %2875 = vmatmul.mubr.f32.gmra.mrb[0].mxu0 %v2755
  %v2876 = vpop.f32.mrb[0].mxu0
  %v2877 = vadd.f32 0.0, %v2876
  %v2878 = vpop.f32.mrb[0].mxu0
  %2879 = vmatprep.mubr.f32.mxu0 0.0
  %2880 = vmatmul.mubr.f32.gmra.mrb[0].mxu0 %v2758
  %v2881 = vpop.f32.mrb[0].mxu0
  %v2882 = vadd.f32 0.0, %v2881
  %v2883 = vpop.f32.mrb[0].mxu0
  %2884 = vdwg.mxu0
  %v2885 = vadd.f32 %v2666, %v2827
  %v2886 = vadd.f32 %v2671, %v2832
  %v2887 = vadd.f32 %v2676, %v2837
  %v2888 = vadd.f32 %v2681, %v2842
  %v2889 = vadd.f32 %v2686, %v2847
  %v2890 = vadd.f32 %v2691, %v2852
  %v2891 = vadd.f32 %v2696, %v2857
  %v2892 = vadd.f32 %v2701, %v2862
  %v2893 = vadd.f32 %v2706, %v2867
  %v2894 = vadd.f32 %v2711, %v2872
  %v2895 = vadd.f32 %v2716, %v2877
  %v2896 = vadd.f32 %v2721, %v2882
  %v2898 = vsel %vm230, %v2344, 0
  %v2901 = vsel %vm230, %v2349, 0
  %v2904 = vsel %vm230, %v2354, 0
  %v2907 = vsel %vm230, %v2359, 0
  %v2910 = vsel %vm230, %v2364, 0
  %v2913 = vsel %vm230, %v2369, 0
  %v2916 = vsel %vm230, %v2374, 0
  %v2919 = vsel %vm230, %v2379, 0
  %v2922 = vsel %vm230, %v2384, 0
  %v2925 = vsel %vm230, %v2389, 0
  %v2928 = vsel %vm230, %v2394, 0
  %v2931 = vsel %vm230, %v2399, 0
  %2933 = vmatprep.subr.mxu0 0.0
  %2934 = vmatpush1.msra.mxu0 %v63
  %2935 = vmatprep.subr.mxu0 0.0
  %2936 = vmatpush1.msra.mxu0 %v64
  %2937 = vmatprep.subr.mxu0 0.0
  %2938 = vmatpush1.msra.mxu0 %v65
  %2939 = vmatprep.subr.mxu0 0.0
  %2940 = vmatpush1.msra.mxu0 %v66
  %2941 = vmatprep.subr.mxu0 0.0
  %2942 = vmatpush1.msra.mxu0 0.0
  %2943 = vmatprep.subr.mxu0 0.0
  %2944 = vmatpush1.msra.mxu0 0.0
  %2945 = vmatprep.subr.mxu0 0.0
  %2946 = vmatpush1.msra.mxu0 0.0
  %2947 = vmatprep.subr.mxu0 0.0
  %2948 = vmatpush1.msra.mxu0 0.0
  %2949 = vmatprep.subr.mxu0 0.0
  %2950 = vmatpush1.msra.mxu0 0.0
  %2951 = vmatprep.subr.mxu0 0.0
  %2952 = vmatpush1.msra.mxu0 0.0
  %2953 = vmatprep.subr.mxu0 0.0
  %2954 = vmatpush1.msra.mxu0 0.0
  %2955 = vmatprep.subr.mxu0 0.0
  %2956 = vmatpush1.msra.mxu0 0.0
  %2957 = vmatprep.subr.mxu0 0.0
  %2958 = vmatpush1.msra.mxu0 0.0
  %2959 = vmatprep.subr.mxu0 0.0
  %2960 = vmatpush1.msra.mxu0 0.0
  %2961 = vmatprep.subr.mxu0 0.0
  %2962 = vmatpush1.msra.mxu0 0.0
  %2963 = vmatprep.subr.mxu0 0.0
  %2964 = vmatpush1.msra.mxu0 0.0
  %2965 = vmatprep.subr.mxu0 0.0
  %2966 = vmatpush1.msra.mxu0 0.0
  %2967 = vmatprep.subr.mxu0 0.0
  %2968 = vmatpush1.msra.mxu0 0.0
  %2969 = vmatprep.subr.mxu0 0.0
  %2970 = vmatpush1.msra.mxu0 0.0
  %2971 = vmatprep.subr.mxu0 0.0
  %2972 = vmatpush1.msra.mxu0 0.0
  %2973 = vmatprep.subr.mxu0 0.0
  %2974 = vmatpush1.msra.mxu0 0.0
  %2975 = vmatprep.subr.mxu0 0.0
  %2976 = vmatpush1.msra.mxu0 0.0
  %2977 = vmatprep.subr.mxu0 0.0
  %2978 = vmatpush1.msra.mxu0 0.0
  %2979 = vmatprep.subr.mxu0 0.0
  %2980 = vmatpush1.msra.mxu0 0.0
  %2981 = vmatprep.subr.mxu0 0.0
  %2982 = vmatpush1.msra.mxu0 0.0
  %2983 = vmatprep.subr.mxu0 0.0
  %2984 = vmatpush1.msra.mxu0 0.0
  %2985 = vmatprep.subr.mxu0 0.0
  %2986 = vmatpush1.msra.mxu0 0.0
  %2987 = vmatprep.subr.mxu0 0.0
  %2988 = vmatpush1.msra.mxu0 0.0
  %2989 = vmatprep.subr.mxu0 0.0
  %2990 = vmatpush1.msra.mxu0 0.0
  %2991 = vmatprep.subr.mxu0 0.0
  %2992 = vmatpush1.msra.mxu0 0.0
  %2993 = vmatprep.subr.mxu0 0.0
  %2994 = vmatpush1.msra.mxu0 0.0
  %2995 = vmatprep.subr.mxu0 0.0
  %2996 = vmatpush1.msra.mxu0 0.0
  %2997 = vmatprep.mubr.f32.mxu0 0.0
  %2998 = vmatmul.mubr.f32.gmra.mrb[0].mxu0 %v2898
  %v2999 = vpop.f32.mrb[0].mxu0
  %v3000 = vadd.f32 0.0, %v2999
  %v3001 = vpop.f32.mrb[0].mxu0
  %3002 = vmatprep.mubr.f32.mxu0 0.0
  %3003 = vmatmul.mubr.f32.gmra.mrb[0].mxu0 %v2901
  %v3004 = vpop.f32.mrb[0].mxu0
  %v3005 = vadd.f32 0.0, %v3004
  %v3006 = vpop.f32.mrb[0].mxu0
  %3007 = vmatprep.mubr.f32.mxu0 0.0
  %3008 = vmatmul.mubr.f32.gmra.mrb[0].mxu0 %v2904
  %v3009 = vpop.f32.mrb[0].mxu0
  %v3010 = vadd.f32 0.0, %v3009
  %v3011 = vpop.f32.mrb[0].mxu0
  %3012 = vmatprep.mubr.f32.mxu0 0.0
  %3013 = vmatmul.mubr.f32.gmra.mrb[0].mxu0 %v2907
  %v3014 = vpop.f32.mrb[0].mxu0
  %v3015 = vadd.f32 0.0, %v3014
  %v3016 = vpop.f32.mrb[0].mxu0
  %3017 = vmatprep.mubr.f32.mxu0 0.0
  %3018 = vmatmul.mubr.f32.gmra.mrb[0].mxu0 %v2910
  %v3019 = vpop.f32.mrb[0].mxu0
  %v3020 = vadd.f32 0.0, %v3019
  %v3021 = vpop.f32.mrb[0].mxu0
  %3022 = vmatprep.mubr.f32.mxu0 0.0
  %3023 = vmatmul.mubr.f32.gmra.mrb[0].mxu0 %v2913
  %v3024 = vpop.f32.mrb[0].mxu0
  %v3025 = vadd.f32 0.0, %v3024
  %v3026 = vpop.f32.mrb[0].mxu0
  %3027 = vmatprep.mubr.f32.mxu0 0.0
  %3028 = vmatmul.mubr.f32.gmra.mrb[0].mxu0 %v2916
  %v3029 = vpop.f32.mrb[0].mxu0
  %v3030 = vadd.f32 0.0, %v3029
  %v3031 = vpop.f32.mrb[0].mxu0
  %3032 = vmatprep.mubr.f32.mxu0 0.0
  %3033 = vmatmul.mubr.f32.gmra.mrb[0].mxu0 %v2919
  %v3034 = vpop.f32.mrb[0].mxu0
  %v3035 = vadd.f32 0.0, %v3034
  %v3036 = vpop.f32.mrb[0].mxu0
  %3037 = vmatprep.mubr.f32.mxu0 0.0
  %3038 = vmatmul.mubr.f32.gmra.mrb[0].mxu0 %v2922
  %v3039 = vpop.f32.mrb[0].mxu0
  %v3040 = vadd.f32 0.0, %v3039
  %v3041 = vpop.f32.mrb[0].mxu0
  %3042 = vmatprep.mubr.f32.mxu0 0.0
  %3043 = vmatmul.mubr.f32.gmra.mrb[0].mxu0 %v2925
  %v3044 = vpop.f32.mrb[0].mxu0
  %v3045 = vadd.f32 0.0, %v3044
  %v3046 = vpop.f32.mrb[0].mxu0
  %3047 = vmatprep.mubr.f32.mxu0 0.0
  %3048 = vmatmul.mubr.f32.gmra.mrb[0].mxu0 %v2928
  %v3049 = vpop.f32.mrb[0].mxu0
  %v3050 = vadd.f32 0.0, %v3049
  %v3051 = vpop.f32.mrb[0].mxu0
  %3052 = vmatprep.mubr.f32.mxu0 0.0
  %3053 = vmatmul.mubr.f32.gmra.mrb[0].mxu0 %v2931
  %v3054 = vpop.f32.mrb[0].mxu0
  %v3055 = vadd.f32 0.0, %v3054
  %v3056 = vpop.f32.mrb[0].mxu0
  %3057 = vdwg.mxu0
  %v3058 = vadd.f32 %v2885, %v3000
  %v3059 = vadd.f32 %v2886, %v3005
  %v3060 = vadd.f32 %v2887, %v3010
  %v3061 = vadd.f32 %v2888, %v3015
  %v3062 = vadd.f32 %v2889, %v3020
  %v3063 = vadd.f32 %v2890, %v3025
  %v3064 = vadd.f32 %v2891, %v3030
  %v3065 = vadd.f32 %v2892, %v3035
  %v3066 = vadd.f32 %v2893, %v3040
  %v3067 = vadd.f32 %v2894, %v3045
  %v3068 = vadd.f32 %v2895, %v3050
  %v3069 = vadd.f32 %v2896, %v3055
  %v3070 = vmul.f32 %v3058, 0.25
  %v3071 = vmul.f32 %v3059, 0.25
  %v3072 = vmul.f32 %v3060, 0.25
  %v3073 = vmul.f32 %v3061, 0.25
  %v3074 = vmul.f32 %v3062, 0.25
  %v3075 = vmul.f32 %v3063, 0.25
  %v3076 = vmul.f32 %v3064, 0.25
  %v3077 = vmul.f32 %v3065, 0.25
  %v3078 = vmul.f32 %v3066, 0.25
  %v3079 = vmul.f32 %v3067, 0.25
  %v3080 = vmul.f32 %v3068, 0.25
  %v3081 = vmul.f32 %v3069, 0.25
  %v3082 = vadd.f32 %v3070, %v79
  %v3083 = vadd.f32 %v3071, %v79
  %v3084 = vadd.f32 %v3072, %v79
  %v3085 = vadd.f32 %v3073, %v79
  %v3086 = vadd.f32 %v3074, %v79
  %v3087 = vadd.f32 %v3075, %v79
  %v3088 = vadd.f32 %v3076, %v79
  %v3089 = vadd.f32 %v3077, %v79
  %v3090 = vadd.f32 %v3078, %v79
  %v3091 = vadd.f32 %v3079, %v79
  %v3092 = vadd.f32 %v3080, %v79
  %v3093 = vadd.f32 %v3081, %v79
  %vm3094 = vcmp.gt.f32.partialorder %v3082, 0.0
  %vm3095 = vcmp.gt.f32.partialorder %v3083, 0.0
  %vm3096 = vcmp.gt.f32.partialorder %v3084, 0.0
  %vm3097 = vcmp.gt.f32.partialorder %v3085, 0.0
  %vm3098 = vcmp.gt.f32.partialorder %v3086, 0.0
  %vm3099 = vcmp.gt.f32.partialorder %v3087, 0.0
  %vm3100 = vcmp.gt.f32.partialorder %v3088, 0.0
  %vm3101 = vcmp.gt.f32.partialorder %v3089, 0.0
  %vm3102 = vcmp.gt.f32.partialorder %v3090, 0.0
  %vm3103 = vcmp.gt.f32.partialorder %v3091, 0.0
  %vm3104 = vcmp.gt.f32.partialorder %v3092, 0.0
  %vm3105 = vcmp.gt.f32.partialorder %v3093, 0.0
  %v3106 = vmul.f32 %v3082, 0.2
  %v3107 = vmul.f32 %v3083, 0.2
  %v3108 = vmul.f32 %v3084, 0.2
  %v3109 = vmul.f32 %v3085, 0.2
  %v3110 = vmul.f32 %v3086, 0.2
  %v3111 = vmul.f32 %v3087, 0.2
  %v3112 = vmul.f32 %v3088, 0.2
  %v3113 = vmul.f32 %v3089, 0.2
  %v3114 = vmul.f32 %v3090, 0.2
  %v3115 = vmul.f32 %v3091, 0.2
  %v3116 = vmul.f32 %v3092, 0.2
  %v3117 = vmul.f32 %v3093, 0.2
  %v3118 = vsel %vm3094, %v3082, %v3106
  %v3119 = vsel %vm3095, %v3083, %v3107
  %v3120 = vsel %vm3096, %v3084, %v3108
  %v3121 = vsel %vm3097, %v3085, %v3109
  %v3122 = vsel %vm3098, %v3086, %v3110
  %v3123 = vsel %vm3099, %v3087, %v3111
  %v3124 = vsel %vm3100, %v3088, %v3112
  %v3125 = vsel %vm3101, %v3089, %v3113
  %v3126 = vsel %vm3102, %v3090, %v3114
  %v3127 = vsel %vm3103, %v3091, %v3115
  %v3128 = vsel %vm3104, %v3092, %v3116
  %v3129 = vsel %vm3105, %v3093, %v3117
  %3130 = vxpose.xlu0.b32.start [1/16] %v3118, 128
  %3131 = vxpose.xlu0.b32.cont [2/16] %v3119, 128
  %3132 = vxpose.xlu0.b32.cont [3/16] %v3120, 128
  %3133 = vxpose.xlu0.b32.cont [4/16] %v3121, 128
  %3134 = vxpose.xlu0.b32.cont [5/16] %v3122, 128
  %3135 = vxpose.xlu0.b32.cont [6/16] %v3123, 128
  %3136 = vxpose.xlu0.b32.cont [7/16] %v3124, 128
  %3137 = vxpose.xlu0.b32.cont [8/16] %v3125, 128
  %3138 = vxpose.xlu0.b32.cont [9/16] %v3126, 128
  %3139 = vxpose.xlu0.b32.cont [10/16] %v3127, 128
  %3140 = vxpose.xlu0.b32.cont [11/16] %v3128, 128
  %3141 = vxpose.xlu0.b32.cont [12/16] %v3129, 128
  %3142 = vxpose.xlu0.b32.cont [13/16] 0.0, 128
  %3143 = vxpose.xlu0.b32.cont [14/16] 0.0, 128
  %3144 = vxpose.xlu0.b32.cont [15/16] 0.0, 128
  %3145 = vxpose.xlu0.b32.end [16/16] 0.0, 128
  %v3146 = vpop.trf.xlu0
  %v3147 = vpop.trf.xlu0
  %v3148 = vpop.trf.xlu0
  %v3149 = vpop.trf.xlu0
  %v3150 = vpop.trf.xlu0
  %v3151 = vpop.trf.xlu0
  %v3152 = vpop.trf.xlu0
  %v3153 = vpop.trf.xlu0
  %v3154 = vpop.trf.xlu0
  %v3155 = vpop.trf.xlu0
  %v3156 = vpop.trf.xlu0
  %v3157 = vpop.trf.xlu0
  %v3158 = vpop.trf.xlu0
  %v3159 = vpop.trf.xlu0
  %v3160 = vpop.trf.xlu0
  %v3161 = vpop.trf.xlu0
  %v3162 = vadd.f32 %v3146, %v228
  %v3163 = vadd.f32 %v3147, %v229
  %vm3164 = vcmask 97280
  %v3166 = vsel %vm3164, %v210, 0
  %v3169 = vsel %vm3164, %v211, 0
  %v3172 = vsel %vm3164, %v212, 0
  %v3175 = vsel %vm3164, %v213, 0
  %v3178 = vsel %vm3164, %v214, 0
  %v3181 = vsel %vm3164, %v215, 0
  %v3184 = vsel %vm3164, %v216, 0
  %v3187 = vsel %vm3164, %v217, 0
  %v3190 = vsel %vm3164, %v218, 0
  %v3193 = vsel %vm3164, %v219, 0
  %v3196 = vsel %vm3164, %v220, 0
  %v3199 = vsel %vm3164, %v221, 0
  %vm3201 = vcmask 1043456
  %v3203 = vsel %vm3201, %v3163, 0
  %3205 = vmatprep.subr.mxu0 0.0
  %3206 = vmatpush1.msra.mxu0 %v3162
  %3207 = vmatprep.subr.mxu0 0.0
  %3208 = vmatpush1.msra.mxu0 %v3203
  %3209 = vmatprep.subr.mxu0 0.0
  %3210 = vmatpush1.msra.mxu0 0.0
  %3211 = vmatprep.subr.mxu0 0.0
  %3212 = vmatpush1.msra.mxu0 0.0
  %3213 = vmatprep.subr.mxu0 0.0
  %3214 = vmatpush1.msra.mxu0 0.0
  %3215 = vmatprep.subr.mxu0 0.0
  %3216 = vmatpush1.msra.mxu0 0.0
  %3217 = vmatprep.subr.mxu0 0.0
  %3218 = vmatpush1.msra.mxu0 0.0
  %3219 = vmatprep.subr.mxu0 0.0
  %3220 = vmatpush1.msra.mxu0 0.0
  %3221 = vmatprep.subr.mxu0 0.0
  %3222 = vmatpush1.msra.mxu0 0.0
  %3223 = vmatprep.subr.mxu0 0.0
  %3224 = vmatpush1.msra.mxu0 0.0
  %3225 = vmatprep.subr.mxu0 0.0
  %3226 = vmatpush1.msra.mxu0 0.0
  %3227 = vmatprep.subr.mxu0 0.0
  %3228 = vmatpush1.msra.mxu0 0.0
  %3229 = vmatprep.subr.mxu0 0.0
  %3230 = vmatpush1.msra.mxu0 0.0
  %3231 = vmatprep.subr.mxu0 0.0
  %3232 = vmatpush1.msra.mxu0 0.0
  %3233 = vmatprep.subr.mxu0 0.0
  %3234 = vmatpush1.msra.mxu0 0.0
  %3235 = vmatprep.subr.mxu0 0.0
  %3236 = vmatpush1.msra.mxu0 0.0
  %3237 = vmatprep.subr.mxu0 0.0
  %3238 = vmatpush1.msra.mxu0 0.0
  %3239 = vmatprep.subr.mxu0 0.0
  %3240 = vmatpush1.msra.mxu0 0.0
  %3241 = vmatprep.subr.mxu0 0.0
  %3242 = vmatpush1.msra.mxu0 0.0
  %3243 = vmatprep.subr.mxu0 0.0
  %3244 = vmatpush1.msra.mxu0 0.0
  %3245 = vmatprep.subr.mxu0 0.0
  %3246 = vmatpush1.msra.mxu0 0.0
  %3247 = vmatprep.subr.mxu0 0.0
  %3248 = vmatpush1.msra.mxu0 0.0
  %3249 = vmatprep.subr.mxu0 0.0
  %3250 = vmatpush1.msra.mxu0 0.0
  %3251 = vmatprep.subr.mxu0 0.0
  %3252 = vmatpush1.msra.mxu0 0.0
  %3253 = vmatprep.subr.mxu0 0.0
  %3254 = vmatpush1.msra.mxu0 0.0
  %3255 = vmatprep.subr.mxu0 0.0
  %3256 = vmatpush1.msra.mxu0 0.0
  %3257 = vmatprep.subr.mxu0 0.0
  %3258 = vmatpush1.msra.mxu0 0.0
  %3259 = vmatprep.subr.mxu0 0.0
  %3260 = vmatpush1.msra.mxu0 0.0
  %3261 = vmatprep.subr.mxu0 0.0
  %3262 = vmatpush1.msra.mxu0 0.0
  %3263 = vmatprep.subr.mxu0 0.0
  %3264 = vmatpush1.msra.mxu0 0.0
  %3265 = vmatprep.subr.mxu0 0.0
  %3266 = vmatpush1.msra.mxu0 0.0
  %3267 = vmatprep.subr.mxu0 0.0
  %3268 = vmatpush1.msra.mxu0 0.0
  %3269 = vmatprep.mubr.f32.mxu0 0.0
  %3270 = vmatmul.mubr.f32.gmra.mrb[0].mxu0 %v3166
  %v3271 = vpop.f32.mrb[0].mxu0
  %v3272 = vadd.f32 0.0, %v3271
  %v3273 = vpop.f32.mrb[0].mxu0
  %3274 = vmatprep.mubr.f32.mxu0 0.0
  %3275 = vmatmul.mubr.f32.gmra.mrb[0].mxu0 %v3169
  %v3276 = vpop.f32.mrb[0].mxu0
  %v3277 = vadd.f32 0.0, %v3276
  %v3278 = vpop.f32.mrb[0].mxu0
  %3279 = vmatprep.mubr.f32.mxu0 0.0
  %3280 = vmatmul.mubr.f32.gmra.mrb[0].mxu0 %v3172
  %v3281 = vpop.f32.mrb[0].mxu0
  %v3282 = vadd.f32 0.0, %v3281
  %v3283 = vpop.f32.mrb[0].mxu0
  %3284 = vmatprep.mubr.f32.mxu0 0.0
  %3285 = vmatmul.mubr.f32.gmra.mrb[0].mxu0 %v3175
  %v3286 = vpop.f32.mrb[0].mxu0
  %v3287 = vadd.f32 0.0, %v3286
  %v3288 = vpop.f32.mrb[0].mxu0
  %3289 = vmatprep.mubr.f32.mxu0 0.0
  %3290 = vmatmul.mubr.f32.gmra.mrb[0].mxu0 %v3178
  %v3291 = vpop.f32.mrb[0].mxu0
  %v3292 = vadd.f32 0.0, %v3291
  %v3293 = vpop.f32.mrb[0].mxu0
  %3294 = vmatprep.mubr.f32.mxu0 0.0
  %3295 = vmatmul.mubr.f32.gmra.mrb[0].mxu0 %v3181
  %v3296 = vpop.f32.mrb[0].mxu0
  %v3297 = vadd.f32 0.0, %v3296
  %v3298 = vpop.f32.mrb[0].mxu0
  %3299 = vmatprep.mubr.f32.mxu0 0.0
  %3300 = vmatmul.mubr.f32.gmra.mrb[0].mxu0 %v3184
  %v3301 = vpop.f32.mrb[0].mxu0
  %v3302 = vadd.f32 0.0, %v3301
  %v3303 = vpop.f32.mrb[0].mxu0
  %3304 = vmatprep.mubr.f32.mxu0 0.0
  %3305 = vmatmul.mubr.f32.gmra.mrb[0].mxu0 %v3187
  %v3306 = vpop.f32.mrb[0].mxu0
  %v3307 = vadd.f32 0.0, %v3306
  %v3308 = vpop.f32.mrb[0].mxu0
  %3309 = vmatprep.mubr.f32.mxu0 0.0
  %3310 = vmatmul.mubr.f32.gmra.mrb[0].mxu0 %v3190
  %v3311 = vpop.f32.mrb[0].mxu0
  %v3312 = vadd.f32 0.0, %v3311
  %v3313 = vpop.f32.mrb[0].mxu0
  %3314 = vmatprep.mubr.f32.mxu0 0.0
  %3315 = vmatmul.mubr.f32.gmra.mrb[0].mxu0 %v3193
  %v3316 = vpop.f32.mrb[0].mxu0
  %v3317 = vadd.f32 0.0, %v3316
  %v3318 = vpop.f32.mrb[0].mxu0
  %3319 = vmatprep.mubr.f32.mxu0 0.0
  %3320 = vmatmul.mubr.f32.gmra.mrb[0].mxu0 %v3196
  %v3321 = vpop.f32.mrb[0].mxu0
  %v3322 = vadd.f32 0.0, %v3321
  %v3323 = vpop.f32.mrb[0].mxu0
  %3324 = vmatprep.mubr.f32.mxu0 0.0
  %3325 = vmatmul.mubr.f32.gmra.mrb[0].mxu0 %v3199
  %v3326 = vpop.f32.mrb[0].mxu0
  %v3327 = vadd.f32 0.0, %v3326
  %v3328 = vpop.f32.mrb[0].mxu0
  %3329 = vdwg.mxu0
  %v3330 = vsel %vm150, %v3272, 0.0
  %v3331 = vsel %vm151, %v3277, 0.0
  %v3332 = vsel %vm152, %v3282, 0.0
  %v3333 = vsel %vm153, %v3287, 0.0
  %v3334 = vsel %vm154, %v3292, 0.0
  %v3335 = vsel %vm155, %v3297, 0.0
  %v3336 = vsel %vm156, %v3302, 0.0
  %v3337 = vsel %vm157, %v3307, 0.0
  %v3338 = vsel %vm158, %v3312, 0.0
  %v3339 = vsel %vm159, %v3317, 0.0
  %v3340 = vsel %vm160, %v3322, 0.0
  %v3341 = vsel %vm161, %v3327, 0.0
  %3343 = vset.pattern.permute.xlu0 2
  %3344 = vperm.xlu0 %3343, %v71
  %v3345 = vpop.permute.xlu0 %3344
  %3348 = vset.pattern.permute.xlu0 2
  %3349 = vperm.xlu0 %3348, %v72
  %v3350 = vpop.permute.xlu0 %3349
  %3353 = vset.pattern.permute.xlu0 2
  %3354 = vperm.xlu0 %3353, %v73
  %v3355 = vpop.permute.xlu0 %3354
  %3358 = vset.pattern.permute.xlu0 2
  %3359 = vperm.xlu0 %3358, %v74
  %v3360 = vpop.permute.xlu0 %3359
  %3363 = vset.pattern.permute.xlu0 2
  %3364 = vperm.xlu0 %3363, %v75
  %v3365 = vpop.permute.xlu0 %3364
  %3368 = vset.pattern.permute.xlu0 2
  %3369 = vperm.xlu0 %3368, %v76
  %v3370 = vpop.permute.xlu0 %3369
  %3373 = vset.pattern.permute.xlu0 2
  %3374 = vperm.xlu0 %3373, %v77
  %v3375 = vpop.permute.xlu0 %3374
  %3378 = vset.pattern.permute.xlu0 2
  %3379 = vperm.xlu0 %3378, %v78
  %v3380 = vpop.permute.xlu0 %3379
  %vm3382 = vcmask 15360
  %v3383 = vsel %vm3382, %v71, 0
  %v3385 = vsel %vm3382, %v72, 0
  %v3387 = vsel %vm3382, %v73, 0
  %v3389 = vsel %vm3382, %v74, 0
  %v3391 = vsel %vm3382, %v75, 0
  %v3393 = vsel %vm3382, %v76, 0
  %v3395 = vsel %vm3382, %v77, 0
  %v3397 = vsel %vm3382, %v78, 0
  %vm3399 = vcmask 1041408
  %v3401 = vsel %vm3399, %v26, 0
  %3403 = vmatprep.subr.mxu0 0.0
  %3404 = vmatpush1.msra.mxu0 %v3401
  %3405 = vmatprep.subr.mxu0 0.0
  %3406 = vmatpush1.msra.mxu0 0.0
  %3407 = vmatprep.subr.mxu0 0.0
  %3408 = vmatpush1.msra.mxu0 0.0
  %3409 = vmatprep.subr.mxu0 0.0
  %3410 = vmatpush1.msra.mxu0 0.0
  %3411 = vmatprep.subr.mxu0 0.0
  %3412 = vmatpush1.msra.mxu0 0.0
  %3413 = vmatprep.subr.mxu0 0.0
  %3414 = vmatpush1.msra.mxu0 0.0
  %3415 = vmatprep.subr.mxu0 0.0
  %3416 = vmatpush1.msra.mxu0 0.0
  %3417 = vmatprep.subr.mxu0 0.0
  %3418 = vmatpush1.msra.mxu0 0.0
  %3419 = vmatprep.subr.mxu0 0.0
  %3420 = vmatpush1.msra.mxu0 0.0
  %3421 = vmatprep.subr.mxu0 0.0
  %3422 = vmatpush1.msra.mxu0 0.0
  %3423 = vmatprep.subr.mxu0 0.0
  %3424 = vmatpush1.msra.mxu0 0.0
  %3425 = vmatprep.subr.mxu0 0.0
  %3426 = vmatpush1.msra.mxu0 0.0
  %3427 = vmatprep.subr.mxu0 0.0
  %3428 = vmatpush1.msra.mxu0 0.0
  %3429 = vmatprep.subr.mxu0 0.0
  %3430 = vmatpush1.msra.mxu0 0.0
  %3431 = vmatprep.subr.mxu0 0.0
  %3432 = vmatpush1.msra.mxu0 0.0
  %3433 = vmatprep.subr.mxu0 0.0
  %3434 = vmatpush1.msra.mxu0 0.0
  %3435 = vmatprep.subr.mxu0 0.0
  %3436 = vmatpush1.msra.mxu0 0.0
  %3437 = vmatprep.subr.mxu0 0.0
  %3438 = vmatpush1.msra.mxu0 0.0
  %3439 = vmatprep.subr.mxu0 0.0
  %3440 = vmatpush1.msra.mxu0 0.0
  %3441 = vmatprep.subr.mxu0 0.0
  %3442 = vmatpush1.msra.mxu0 0.0
  %3443 = vmatprep.subr.mxu0 0.0
  %3444 = vmatpush1.msra.mxu0 0.0
  %3445 = vmatprep.subr.mxu0 0.0
  %3446 = vmatpush1.msra.mxu0 0.0
  %3447 = vmatprep.subr.mxu0 0.0
  %3448 = vmatpush1.msra.mxu0 0.0
  %3449 = vmatprep.subr.mxu0 0.0
  %3450 = vmatpush1.msra.mxu0 0.0
  %3451 = vmatprep.subr.mxu0 0.0
  %3452 = vmatpush1.msra.mxu0 0.0
  %3453 = vmatprep.subr.mxu0 0.0
  %3454 = vmatpush1.msra.mxu0 0.0
  %3455 = vmatprep.subr.mxu0 0.0
  %3456 = vmatpush1.msra.mxu0 0.0
  %3457 = vmatprep.subr.mxu0 0.0
  %3458 = vmatpush1.msra.mxu0 0.0
  %3459 = vmatprep.subr.mxu0 0.0
  %3460 = vmatpush1.msra.mxu0 0.0
  %3461 = vmatprep.subr.mxu0 0.0
  %3462 = vmatpush1.msra.mxu0 0.0
  %3463 = vmatprep.subr.mxu0 0.0
  %3464 = vmatpush1.msra.mxu0 0.0
  %3465 = vmatprep.subr.mxu0 0.0
  %3466 = vmatpush1.msra.mxu0 0.0
  %3467 = vmatprep.mubr.f32.mxu0 0.0
  %3468 = vmatmul.mubr.f32.gmra.mrb[0].mxu0 %v3383
  %v3469 = vpop.f32.mrb[0].mxu0
  %v3470 = vadd.f32 %v3345, %v3469
  %v3471 = vpop.f32.mrb[0].mxu0
  %3472 = vmatprep.mubr.f32.mxu0 0.0
  %3473 = vmatmul.mubr.f32.gmra.mrb[0].mxu0 %v3385
  %v3474 = vpop.f32.mrb[0].mxu0
  %v3475 = vadd.f32 %v3350, %v3474
  %v3476 = vpop.f32.mrb[0].mxu0
  %3477 = vmatprep.mubr.f32.mxu0 0.0
  %3478 = vmatmul.mubr.f32.gmra.mrb[0].mxu0 %v3387
  %v3479 = vpop.f32.mrb[0].mxu0
  %v3480 = vadd.f32 %v3355, %v3479
  %v3481 = vpop.f32.mrb[0].mxu0
  %3482 = vmatprep.mubr.f32.mxu0 0.0
  %3483 = vmatmul.mubr.f32.gmra.mrb[0].mxu0 %v3389
  %v3484 = vpop.f32.mrb[0].mxu0
  %v3485 = vadd.f32 %v3360, %v3484
  %v3486 = vpop.f32.mrb[0].mxu0
  %3487 = vmatprep.mubr.f32.mxu0 0.0
  %3488 = vmatmul.mubr.f32.gmra.mrb[0].mxu0 %v3391
  %v3489 = vpop.f32.mrb[0].mxu0
  %v3490 = vadd.f32 %v3365, %v3489
  %v3491 = vpop.f32.mrb[0].mxu0
  %3492 = vmatprep.mubr.f32.mxu0 0.0
  %3493 = vmatmul.mubr.f32.gmra.mrb[0].mxu0 %v3393
  %v3494 = vpop.f32.mrb[0].mxu0
  %v3495 = vadd.f32 %v3370, %v3494
  %v3496 = vpop.f32.mrb[0].mxu0
  %3497 = vmatprep.mubr.f32.mxu0 0.0
  %3498 = vmatmul.mubr.f32.gmra.mrb[0].mxu0 %v3395
  %v3499 = vpop.f32.mrb[0].mxu0
  %v3500 = vadd.f32 %v3375, %v3499
  %v3501 = vpop.f32.mrb[0].mxu0
  %3502 = vmatprep.mubr.f32.mxu0 0.0
  %3503 = vmatmul.mubr.f32.gmra.mrb[0].mxu0 %v3397
  %v3504 = vpop.f32.mrb[0].mxu0
  %v3505 = vadd.f32 %v3380, %v3504
  %v3506 = vpop.f32.mrb[0].mxu0
  %3507 = vdwg.mxu0
  %v3508 = vmax.f32 %v3470, 0.0
  %v3509 = vmax.f32 %v3475, 0.0
  %v3510 = vmax.f32 %v3480, 0.0
  %v3511 = vmax.f32 %v3485, 0.0
  %v3512 = vmax.f32 %v3490, 0.0
  %v3513 = vmax.f32 %v3495, 0.0
  %v3514 = vmax.f32 %v3500, 0.0
  %v3515 = vmax.f32 %v3505, 0.0
  %3516 = vset.pattern.permute.xlu0 3
  %3517 = vperm.xlu0 %3516, %v71
  %v3518 = vpop.permute.xlu0 %3517
  %3520 = vset.pattern.permute.xlu0 3
  %3521 = vperm.xlu0 %3520, %v72
  %v3522 = vpop.permute.xlu0 %3521
  %3524 = vset.pattern.permute.xlu0 3
  %3525 = vperm.xlu0 %3524, %v73
  %v3526 = vpop.permute.xlu0 %3525
  %3528 = vset.pattern.permute.xlu0 3
  %3529 = vperm.xlu0 %3528, %v74
  %v3530 = vpop.permute.xlu0 %3529
  %3532 = vset.pattern.permute.xlu0 3
  %3533 = vperm.xlu0 %3532, %v75
  %v3534 = vpop.permute.xlu0 %3533
  %3536 = vset.pattern.permute.xlu0 3
  %3537 = vperm.xlu0 %3536, %v76
  %v3538 = vpop.permute.xlu0 %3537
  %3540 = vset.pattern.permute.xlu0 3
  %3541 = vperm.xlu0 %3540, %v77
  %v3542 = vpop.permute.xlu0 %3541
  %3544 = vset.pattern.permute.xlu0 3
  %3545 = vperm.xlu0 %3544, %v78
  %v3546 = vpop.permute.xlu0 %3545
  %vm3548 = vcmask 523264
  %v3550 = vsel %vm3548, %v43, 0
  %v3553 = vsel %vm3548, %v44, 0
  %v3556 = vsel %vm3548, %v45, 0
  %v3559 = vsel %vm3548, %v46, 0
  %v3562 = vsel %vm3548, %v47, 0
  %v3565 = vsel %vm3548, %v48, 0
  %v3568 = vsel %vm3548, %v49, 0
  %v3571 = vsel %vm3548, %v50, 0
  %3573 = vmatprep.subr.mxu0 0.0
  %3574 = vmatpush1.msra.mxu0 %v3508
  %3575 = vmatprep.subr.mxu0 0.0
  %3576 = vmatpush1.msra.mxu0 %v3509
  %3577 = vmatprep.subr.mxu0 0.0
  %3578 = vmatpush1.msra.mxu0 %v3510
  %3579 = vmatprep.subr.mxu0 0.0
  %3580 = vmatpush1.msra.mxu0 %v3511
  %3581 = vmatprep.subr.mxu0 0.0
  %3582 = vmatpush1.msra.mxu0 %v3512
  %3583 = vmatprep.subr.mxu0 0.0
  %3584 = vmatpush1.msra.mxu0 %v3513
  %3585 = vmatprep.subr.mxu0 0.0
  %3586 = vmatpush1.msra.mxu0 %v3514
  %3587 = vmatprep.subr.mxu0 0.0
  %3588 = vmatpush1.msra.mxu0 %v3515
  %3589 = vmatprep.subr.mxu0 0.0
  %3590 = vmatpush1.msra.mxu0 0.0
  %3591 = vmatprep.subr.mxu0 0.0
  %3592 = vmatpush1.msra.mxu0 0.0
  %3593 = vmatprep.subr.mxu0 0.0
  %3594 = vmatpush1.msra.mxu0 0.0
  %3595 = vmatprep.subr.mxu0 0.0
  %3596 = vmatpush1.msra.mxu0 0.0
  %3597 = vmatprep.subr.mxu0 0.0
  %3598 = vmatpush1.msra.mxu0 0.0
  %3599 = vmatprep.subr.mxu0 0.0
  %3600 = vmatpush1.msra.mxu0 0.0
  %3601 = vmatprep.subr.mxu0 0.0
  %3602 = vmatpush1.msra.mxu0 0.0
  %3603 = vmatprep.subr.mxu0 0.0
  %3604 = vmatpush1.msra.mxu0 0.0
  %3605 = vmatprep.subr.mxu0 0.0
  %3606 = vmatpush1.msra.mxu0 0.0
  %3607 = vmatprep.subr.mxu0 0.0
  %3608 = vmatpush1.msra.mxu0 0.0
  %3609 = vmatprep.subr.mxu0 0.0
  %3610 = vmatpush1.msra.mxu0 0.0
  %3611 = vmatprep.subr.mxu0 0.0
  %3612 = vmatpush1.msra.mxu0 0.0
  %3613 = vmatprep.subr.mxu0 0.0
  %3614 = vmatpush1.msra.mxu0 0.0
  %3615 = vmatprep.subr.mxu0 0.0
  %3616 = vmatpush1.msra.mxu0 0.0
  %3617 = vmatprep.subr.mxu0 0.0
  %3618 = vmatpush1.msra.mxu0 0.0
  %3619 = vmatprep.subr.mxu0 0.0
  %3620 = vmatpush1.msra.mxu0 0.0
  %3621 = vmatprep.subr.mxu0 0.0
  %3622 = vmatpush1.msra.mxu0 0.0
  %3623 = vmatprep.subr.mxu0 0.0
  %3624 = vmatpush1.msra.mxu0 0.0
  %3625 = vmatprep.subr.mxu0 0.0
  %3626 = vmatpush1.msra.mxu0 0.0
  %3627 = vmatprep.subr.mxu0 0.0
  %3628 = vmatpush1.msra.mxu0 0.0
  %3629 = vmatprep.subr.mxu0 0.0
  %3630 = vmatpush1.msra.mxu0 0.0
  %3631 = vmatprep.subr.mxu0 0.0
  %3632 = vmatpush1.msra.mxu0 0.0
  %3633 = vmatprep.subr.mxu0 0.0
  %3634 = vmatpush1.msra.mxu0 0.0
  %3635 = vmatprep.subr.mxu0 0.0
  %3636 = vmatpush1.msra.mxu0 0.0
  %3637 = vmatprep.mubr.f32.mxu0 0.0
  %3638 = vmatmul.mubr.f32.gmra.mrb[0].mxu0 %v3550
  %v3639 = vpop.f32.mrb[0].mxu0
  %v3640 = vadd.f32 %v3518, %v3639
  %v3641 = vpop.f32.mrb[0].mxu0
  %3642 = vmatprep.mubr.f32.mxu0 0.0
  %3643 = vmatmul.mubr.f32.gmra.mrb[0].mxu0 %v3553
  %v3644 = vpop.f32.mrb[0].mxu0
  %v3645 = vadd.f32 %v3522, %v3644
  %v3646 = vpop.f32.mrb[0].mxu0
  %3647 = vmatprep.mubr.f32.mxu0 0.0
  %3648 = vmatmul.mubr.f32.gmra.mrb[0].mxu0 %v3556
  %v3649 = vpop.f32.mrb[0].mxu0
  %v3650 = vadd.f32 %v3526, %v3649
  %v3651 = vpop.f32.mrb[0].mxu0
  %3652 = vmatprep.mubr.f32.mxu0 0.0
  %3653 = vmatmul.mubr.f32.gmra.mrb[0].mxu0 %v3559
  %v3654 = vpop.f32.mrb[0].mxu0
  %v3655 = vadd.f32 %v3530, %v3654
  %v3656 = vpop.f32.mrb[0].mxu0
  %3657 = vmatprep.mubr.f32.mxu0 0.0
  %3658 = vmatmul.mubr.f32.gmra.mrb[0].mxu0 %v3562
  %v3659 = vpop.f32.mrb[0].mxu0
  %v3660 = vadd.f32 %v3534, %v3659
  %v3661 = vpop.f32.mrb[0].mxu0
  %3662 = vmatprep.mubr.f32.mxu0 0.0
  %3663 = vmatmul.mubr.f32.gmra.mrb[0].mxu0 %v3565
  %v3664 = vpop.f32.mrb[0].mxu0
  %v3665 = vadd.f32 %v3538, %v3664
  %v3666 = vpop.f32.mrb[0].mxu0
  %3667 = vmatprep.mubr.f32.mxu0 0.0
  %3668 = vmatmul.mubr.f32.gmra.mrb[0].mxu0 %v3568
  %v3669 = vpop.f32.mrb[0].mxu0
  %v3670 = vadd.f32 %v3542, %v3669
  %v3671 = vpop.f32.mrb[0].mxu0
  %3672 = vmatprep.mubr.f32.mxu0 0.0
  %3673 = vmatmul.mubr.f32.gmra.mrb[0].mxu0 %v3571
  %v3674 = vpop.f32.mrb[0].mxu0
  %v3675 = vadd.f32 %v3546, %v3674
  %v3676 = vpop.f32.mrb[0].mxu0
  %3677 = vdwg.mxu0
  %v3679 = vsel %vm1376, %v3640, 0
  %v3682 = vsel %vm1376, %v3645, 0
  %v3685 = vsel %vm1376, %v3650, 0
  %v3688 = vsel %vm1376, %v3655, 0
  %v3691 = vsel %vm1376, %v3660, 0
  %v3694 = vsel %vm1376, %v3665, 0
  %v3697 = vsel %vm1376, %v3670, 0
  %v3700 = vsel %vm1376, %v3675, 0
  %3702 = vmatprep.subr.mxu0 0.0
  %3703 = vmatpush1.msra.mxu0 %v3330
  %3704 = vmatprep.subr.mxu0 0.0
  %3705 = vmatpush1.msra.mxu0 %v3331
  %3706 = vmatprep.subr.mxu0 0.0
  %3707 = vmatpush1.msra.mxu0 %v3332
  %3708 = vmatprep.subr.mxu0 0.0
  %3709 = vmatpush1.msra.mxu0 %v3333
  %3710 = vmatprep.subr.mxu0 0.0
  %3711 = vmatpush1.msra.mxu0 %v3334
  %3712 = vmatprep.subr.mxu0 0.0
  %3713 = vmatpush1.msra.mxu0 %v3335
  %3714 = vmatprep.subr.mxu0 0.0
  %3715 = vmatpush1.msra.mxu0 %v3336
  %3716 = vmatprep.subr.mxu0 0.0
  %3717 = vmatpush1.msra.mxu0 %v3337
  %3718 = vmatprep.subr.mxu0 0.0
  %3719 = vmatpush1.msra.mxu0 %v3338
  %3720 = vmatprep.subr.mxu0 0.0
  %3721 = vmatpush1.msra.mxu0 %v3339
  %3722 = vmatprep.subr.mxu0 0.0
  %3723 = vmatpush1.msra.mxu0 %v3340
  %3724 = vmatprep.subr.mxu0 0.0
  %3725 = vmatpush1.msra.mxu0 %v3341
  %3726 = vmatprep.subr.mxu0 0.0
  %3727 = vmatpush1.msra.mxu0 0.0
  %3728 = vmatprep.subr.mxu0 0.0
  %3729 = vmatpush1.msra.mxu0 0.0
  %3730 = vmatprep.subr.mxu0 0.0
  %3731 = vmatpush1.msra.mxu0 0.0
  %3732 = vmatprep.subr.mxu0 0.0
  %3733 = vmatpush1.msra.mxu0 0.0
  %3734 = vmatprep.subr.mxu0 0.0
  %3735 = vmatpush1.msra.mxu0 0.0
  %3736 = vmatprep.subr.mxu0 0.0
  %3737 = vmatpush1.msra.mxu0 0.0
  %3738 = vmatprep.subr.mxu0 0.0
  %3739 = vmatpush1.msra.mxu0 0.0
  %3740 = vmatprep.subr.mxu0 0.0
  %3741 = vmatpush1.msra.mxu0 0.0
  %3742 = vmatprep.subr.mxu0 0.0
  %3743 = vmatpush1.msra.mxu0 0.0
  %3744 = vmatprep.subr.mxu0 0.0
  %3745 = vmatpush1.msra.mxu0 0.0
  %3746 = vmatprep.subr.mxu0 0.0
  %3747 = vmatpush1.msra.mxu0 0.0
  %3748 = vmatprep.subr.mxu0 0.0
  %3749 = vmatpush1.msra.mxu0 0.0
  %3750 = vmatprep.subr.mxu0 0.0
  %3751 = vmatpush1.msra.mxu0 0.0
  %3752 = vmatprep.subr.mxu0 0.0
  %3753 = vmatpush1.msra.mxu0 0.0
  %3754 = vmatprep.subr.mxu0 0.0
  %3755 = vmatpush1.msra.mxu0 0.0
  %3756 = vmatprep.subr.mxu0 0.0
  %3757 = vmatpush1.msra.mxu0 0.0
  %3758 = vmatprep.subr.mxu0 0.0
  %3759 = vmatpush1.msra.mxu0 0.0
  %3760 = vmatprep.subr.mxu0 0.0
  %3761 = vmatpush1.msra.mxu0 0.0
  %3762 = vmatprep.subr.mxu0 0.0
  %3763 = vmatpush1.msra.mxu0 0.0
  %3764 = vmatprep.subr.mxu0 0.0
  %3765 = vmatpush1.msra.mxu0 0.0
  %3766 = vmatprep.mubr.f32.mxu0 0.0
  %3767 = vmatmul.mubr.f32.gmra.mrb[0].mxu0 %v3679
  %v3768 = vpop.f32.mrb[0].mxu0
  %v3769 = vadd.f32 0.0, %v3768
  %v3770 = vpop.f32.mrb[0].mxu0
  %3771 = vmatprep.mubr.f32.mxu0 0.0
  %3772 = vmatmul.mubr.f32.gmra.mrb[0].mxu0 %v3682
  %v3773 = vpop.f32.mrb[0].mxu0
  %v3774 = vadd.f32 0.0, %v3773
  %v3775 = vpop.f32.mrb[0].mxu0
  %3776 = vmatprep.mubr.f32.mxu0 0.0
  %3777 = vmatmul.mubr.f32.gmra.mrb[0].mxu0 %v3685
  %v3778 = vpop.f32.mrb[0].mxu0
  %v3779 = vadd.f32 0.0, %v3778
  %v3780 = vpop.f32.mrb[0].mxu0
  %3781 = vmatprep.mubr.f32.mxu0 0.0
  %3782 = vmatmul.mubr.f32.gmra.mrb[0].mxu0 %v3688
  %v3783 = vpop.f32.mrb[0].mxu0
  %v3784 = vadd.f32 0.0, %v3783
  %v3785 = vpop.f32.mrb[0].mxu0
  %3786 = vmatprep.mubr.f32.mxu0 0.0
  %3787 = vmatmul.mubr.f32.gmra.mrb[0].mxu0 %v3691
  %v3788 = vpop.f32.mrb[0].mxu0
  %v3789 = vadd.f32 0.0, %v3788
  %v3790 = vpop.f32.mrb[0].mxu0
  %3791 = vmatprep.mubr.f32.mxu0 0.0
  %3792 = vmatmul.mubr.f32.gmra.mrb[0].mxu0 %v3694
  %v3793 = vpop.f32.mrb[0].mxu0
  %v3794 = vadd.f32 0.0, %v3793
  %v3795 = vpop.f32.mrb[0].mxu0
  %3796 = vmatprep.mubr.f32.mxu0 0.0
  %3797 = vmatmul.mubr.f32.gmra.mrb[0].mxu0 %v3697
  %v3798 = vpop.f32.mrb[0].mxu0
  %v3799 = vadd.f32 0.0, %v3798
  %v3800 = vpop.f32.mrb[0].mxu0
  %3801 = vmatprep.mubr.f32.mxu0 0.0
  %3802 = vmatmul.mubr.f32.gmra.mrb[0].mxu0 %v3700
  %v3803 = vpop.f32.mrb[0].mxu0
  %v3804 = vadd.f32 0.0, %v3803
  %v3805 = vpop.f32.mrb[0].mxu0
  %3806 = vdwg.mxu0
  %v3807 = vsel %vm1376, %v3769, 0.0
  %3808 = vadd.xlane.f32.xlu0 %v3807
  %v3809 = vpop.xlane.xlu0 %3808
  %v3810 = vsel %vm1376, %v3774, 0.0
  %3811 = vadd.xlane.f32.xlu0 %v3810
  %v3812 = vpop.xlane.xlu0 %3811
  %v3813 = vsel %vm1376, %v3779, 0.0
  %3814 = vadd.xlane.f32.xlu0 %v3813
  %v3815 = vpop.xlane.xlu0 %3814
  %v3816 = vsel %vm1376, %v3784, 0.0
  %3817 = vadd.xlane.f32.xlu0 %v3816
  %v3818 = vpop.xlane.xlu0 %3817
  %v3819 = vsel %vm1376, %v3789, 0.0
  %3820 = vadd.xlane.f32.xlu0 %v3819
  %v3821 = vpop.xlane.xlu0 %3820
  %v3822 = vsel %vm1376, %v3794, 0.0
  %3823 = vadd.xlane.f32.xlu0 %v3822
  %v3824 = vpop.xlane.xlu0 %3823
  %v3825 = vsel %vm1376, %v3799, 0.0
  %3826 = vadd.xlane.f32.xlu0 %v3825
  %v3827 = vpop.xlane.xlu0 %3826
  %v3828 = vsel %vm1376, %v3804, 0.0
  %3829 = vadd.xlane.f32.xlu0 %v3828
  %v3830 = vpop.xlane.xlu0 %3829
  %v3831 = vmul.f32 %v3809, 0.010416667
  %v3832 = vmul.f32 %v3812, 0.010416667
  %v3833 = vmul.f32 %v3815, 0.010416667
  %v3834 = vmul.f32 %v3818, 0.010416667
  %v3835 = vmul.f32 %v3821, 0.010416667
  %v3836 = vmul.f32 %v3824, 0.010416667
  %v3837 = vmul.f32 %v3827, 0.010416667
  %v3838 = vmul.f32 %v3830, 0.010416667
  %v3839 = vsub.f32 %v3769, %v3831
  %v3840 = vsub.f32 %v3774, %v3832
  %v3841 = vsub.f32 %v3779, %v3833
  %v3842 = vsub.f32 %v3784, %v3834
  %v3843 = vsub.f32 %v3789, %v3835
  %v3844 = vsub.f32 %v3794, %v3836
  %v3845 = vsub.f32 %v3799, %v3837
  %v3846 = vsub.f32 %v3804, %v3838
  %v3847 = vmul.f32 %v3839, %v3839
  %v3848 = vmul.f32 %v3840, %v3840
  %v3849 = vmul.f32 %v3841, %v3841
  %v3850 = vmul.f32 %v3842, %v3842
  %v3851 = vmul.f32 %v3843, %v3843
  %v3852 = vmul.f32 %v3844, %v3844
  %v3853 = vmul.f32 %v3845, %v3845
  %v3854 = vmul.f32 %v3846, %v3846
  %v3855 = vsel %vm1376, %v3847, 0.0
  %3856 = vadd.xlane.f32.xlu0 %v3855
  %v3857 = vpop.xlane.xlu0 %3856
  %v3858 = vsel %vm1376, %v3848, 0.0
  %3859 = vadd.xlane.f32.xlu0 %v3858
  %v3860 = vpop.xlane.xlu0 %3859
  %v3861 = vsel %vm1376, %v3849, 0.0
  %3862 = vadd.xlane.f32.xlu0 %v3861
  %v3863 = vpop.xlane.xlu0 %3862
  %v3864 = vsel %vm1376, %v3850, 0.0
  %3865 = vadd.xlane.f32.xlu0 %v3864
  %v3866 = vpop.xlane.xlu0 %3865
  %v3867 = vsel %vm1376, %v3851, 0.0
  %3868 = vadd.xlane.f32.xlu0 %v3867
  %v3869 = vpop.xlane.xlu0 %3868
  %v3870 = vsel %vm1376, %v3852, 0.0
  %3871 = vadd.xlane.f32.xlu0 %v3870
  %v3872 = vpop.xlane.xlu0 %3871
  %v3873 = vsel %vm1376, %v3853, 0.0
  %3874 = vadd.xlane.f32.xlu0 %v3873
  %v3875 = vpop.xlane.xlu0 %3874
  %v3876 = vsel %vm1376, %v3854, 0.0
  %3877 = vadd.xlane.f32.xlu0 %v3876
  %v3878 = vpop.xlane.xlu0 %3877
  %v3879 = vmul.f32 %v3857, 0.010416667
  %v3880 = vmul.f32 %v3860, 0.010416667
  %v3881 = vmul.f32 %v3863, 0.010416667
  %v3882 = vmul.f32 %v3866, 0.010416667
  %v3883 = vmul.f32 %v3869, 0.010416667
  %v3884 = vmul.f32 %v3872, 0.010416667
  %v3885 = vmul.f32 %v3875, 0.010416667
  %v3886 = vmul.f32 %v3878, 0.010416667
  %v3887 = vadd.f32 %v3879, 1e-05
  %v3888 = vadd.f32 %v3880, 1e-05
  %v3889 = vadd.f32 %v3881, 1e-05
  %v3890 = vadd.f32 %v3882, 1e-05
  %v3891 = vadd.f32 %v3883, 1e-05
  %v3892 = vadd.f32 %v3884, 1e-05
  %v3893 = vadd.f32 %v3885, 1e-05
  %v3894 = vadd.f32 %v3886, 1e-05
  %v3895 = vrsqrt.pop %v3887
  %v3896 = vrsqrt.pop %v3888
  %v3897 = vrsqrt.pop %v3889
  %v3898 = vrsqrt.pop %v3890
  %v3899 = vrsqrt.pop %v3891
  %v3900 = vrsqrt.pop %v3892
  %v3901 = vrsqrt.pop %v3893
  %v3902 = vrsqrt.pop %v3894
  %v3903 = vmul.f32 %v3839, %v3895
  %v3904 = vmul.f32 %v3840, %v3896
  %v3905 = vmul.f32 %v3841, %v3897
  %v3906 = vmul.f32 %v3842, %v3898
  %v3907 = vmul.f32 %v3843, %v3899
  %v3908 = vmul.f32 %v3844, %v3900
  %v3909 = vmul.f32 %v3845, %v3901
  %v3910 = vmul.f32 %v3846, %v3902
  %3911 = vset.pattern.permute.xlu0 4
  %3912 = vperm.xlu0 %3911, %v71
  %v3913 = vpop.permute.xlu0 %3912
  %3915 = vset.pattern.permute.xlu0 4
  %3916 = vperm.xlu0 %3915, %v72
  %v3917 = vpop.permute.xlu0 %3916
  %3919 = vset.pattern.permute.xlu0 4
  %3920 = vperm.xlu0 %3919, %v73
  %v3921 = vpop.permute.xlu0 %3920
  %3923 = vset.pattern.permute.xlu0 4
  %3924 = vperm.xlu0 %3923, %v74
  %v3925 = vpop.permute.xlu0 %3924
  %3927 = vset.pattern.permute.xlu0 4
  %3928 = vperm.xlu0 %3927, %v75
  %v3929 = vpop.permute.xlu0 %3928
  %3931 = vset.pattern.permute.xlu0 4
  %3932 = vperm.xlu0 %3931, %v76
  %v3933 = vpop.permute.xlu0 %3932
  %3935 = vset.pattern.permute.xlu0 4
  %3936 = vperm.xlu0 %3935, %v77
  %v3937 = vpop.permute.xlu0 %3936
  %3939 = vset.pattern.permute.xlu0 4
  %3940 = vperm.xlu0 %3939, %v78
  %v3941 = vpop.permute.xlu0 %3940
  %v3943 = vmul.f32 %v3903, %v3913
  %v3944 = vmul.f32 %v3904, %v3917
  %v3945 = vmul.f32 %v3905, %v3921
  %v3946 = vmul.f32 %v3906, %v3925
  %v3947 = vmul.f32 %v3907, %v3929
  %v3948 = vmul.f32 %v3908, %v3933
  %v3949 = vmul.f32 %v3909, %v3937
  %v3950 = vmul.f32 %v3910, %v3941
  %3951 = vset.pattern.permute.xlu0 5
  %3952 = vperm.xlu0 %3951, %v71
  %v3953 = vpop.permute.xlu0 %3952
  %3955 = vset.pattern.permute.xlu0 5
  %3956 = vperm.xlu0 %3955, %v72
  %v3957 = vpop.permute.xlu0 %3956
  %3959 = vset.pattern.permute.xlu0 5
  %3960 = vperm.xlu0 %3959, %v73
  %v3961 = vpop.permute.xlu0 %3960
  %3963 = vset.pattern.permute.xlu0 5
  %3964 = vperm.xlu0 %3963, %v74
  %v3965 = vpop.permute.xlu0 %3964
  %3967 = vset.pattern.permute.xlu0 5
  %3968 = vperm.xlu0 %3967, %v75
  %v3969 = vpop.permute.xlu0 %3968
  %3971 = vset.pattern.permute.xlu0 5
  %3972 = vperm.xlu0 %3971, %v76
  %v3973 = vpop.permute.xlu0 %3972
  %3975 = vset.pattern.permute.xlu0 5
  %3976 = vperm.xlu0 %3975, %v77
  %v3977 = vpop.permute.xlu0 %3976
  %3979 = vset.pattern.permute.xlu0 5
  %3980 = vperm.xlu0 %3979, %v78
  %v3981 = vpop.permute.xlu0 %3980
  %v3983 = vadd.f32 %v3943, %v3953
  %v3984 = vadd.f32 %v3944, %v3957
  %v3985 = vadd.f32 %v3945, %v3961
  %v3986 = vadd.f32 %v3946, %v3965
  %v3987 = vadd.f32 %v3947, %v3969
  %v3988 = vadd.f32 %v3948, %v3973
  %v3989 = vadd.f32 %v3949, %v3977
  %v3990 = vadd.f32 %v3950, %v3981
  %vm3991 = vcmp.gt.f32.partialorder %v3983, 0.0
  %vm3992 = vcmp.gt.f32.partialorder %v3984, 0.0
  %vm3993 = vcmp.gt.f32.partialorder %v3985, 0.0
  %vm3994 = vcmp.gt.f32.partialorder %v3986, 0.0
  %vm3995 = vcmp.gt.f32.partialorder %v3987, 0.0
  %vm3996 = vcmp.gt.f32.partialorder %v3988, 0.0
  %vm3997 = vcmp.gt.f32.partialorder %v3989, 0.0
  %vm3998 = vcmp.gt.f32.partialorder %v3990, 0.0
  %v3999 = vmul.f32 %v3983, 0.25
  %v4000 = vmul.f32 %v3984, 0.25
  %v4001 = vmul.f32 %v3985, 0.25
  %v4002 = vmul.f32 %v3986, 0.25
  %v4003 = vmul.f32 %v3987, 0.25
  %v4004 = vmul.f32 %v3988, 0.25
  %v4005 = vmul.f32 %v3989, 0.25
  %v4006 = vmul.f32 %v3990, 0.25
  %v4007 = vsel %vm3991, %v3983, %v3999
  %v4008 = vsel %vm3992, %v3984, %v4000
  %v4009 = vsel %vm3993, %v3985, %v4001
  %v4010 = vsel %vm3994, %v3986, %v4002
  %v4011 = vsel %vm3995, %v3987, %v4003
  %v4012 = vsel %vm3996, %v3988, %v4004
  %v4013 = vsel %vm3997, %v3989, %v4005
  %v4014 = vsel %vm3998, %v3990, %v4006
  %vm4015 = vcmp.ge.s32.totalorder %v109, 12
  %vm4016 = vcmask 1048320
  %4017 = vrot.lane.b32.xlu0 %v4007, 96
  %v4018 = vpop.permute.xlu0 %4017
  %v4019 = vsel %vm4016, %v4018, %v4007
  %4020 = vrot.lane.b32.xlu0 %v4008, 96
  %v4021 = vpop.permute.xlu0 %4020
  %v4022 = vsel %vm4016, %v4021, %v4008
  %4023 = vrot.lane.b32.xlu0 %v4009, 96
  %v4024 = vpop.permute.xlu0 %4023
  %v4025 = vsel %vm4016, %v4024, %v4009
  %4026 = vrot.lane.b32.xlu0 %v4010, 96
  %v4027 = vpop.permute.xlu0 %4026
  %v4028 = vsel %vm4016, %v4027, %v4010
  %4029 = vrot.lane.b32.xlu0 %v4011, 96
  %v4030 = vpop.permute.xlu0 %4029
  %v4031 = vsel %vm4016, %v4030, %v4011
  %4032 = vrot.lane.b32.xlu0 %v4012, 96
  %v4033 = vpop.permute.xlu0 %4032
  %v4034 = vsel %vm4016, %v4033, %v4012
  %4035 = vrot.lane.b32.xlu0 %v4013, 96
  %v4036 = vpop.permute.xlu0 %4035
  %v4037 = vsel %vm4016, %v4036, %v4013
  %4038 = vrot.lane.b32.xlu0 %v4014, 96
  %v4039 = vpop.permute.xlu0 %4038
  %v4040 = vsel %vm4016, %v4039, %v4014
  %4041 = vrot.lane.b32.xlu0 %v4019, 96
  %v4042 = vpop.permute.xlu0 %4041
  %4043 = vrot.lane.b32.xlu0 %v4022, 96
  %v4044 = vpop.permute.xlu0 %4043
  %4045 = vrot.lane.b32.xlu0 %v4025, 96
  %v4046 = vpop.permute.xlu0 %4045
  %4047 = vrot.lane.b32.xlu0 %v4028, 96
  %v4048 = vpop.permute.xlu0 %4047
  %4049 = vrot.lane.b32.xlu0 %v4031, 96
  %v4050 = vpop.permute.xlu0 %4049
  %4051 = vrot.lane.b32.xlu0 %v4034, 96
  %v4052 = vpop.permute.xlu0 %4051
  %4053 = vrot.lane.b32.xlu0 %v4037, 96
  %v4054 = vpop.permute.xlu0 %4053
  %4055 = vrot.lane.b32.xlu0 %v4040, 96
  %v4056 = vpop.permute.xlu0 %4055
  %v4057 = vsel %vm4016, %v4042, %v4007
  %v4058 = vsel %vm4016, %v4044, %v4008
  %v4059 = vsel %vm4016, %v4046, %v4009
  %v4060 = vsel %vm4016, %v4048, %v4010
  %v4061 = vsel %vm4016, %v4050, %v4011
  %v4062 = vsel %vm4016, %v4052, %v4012
  %v4063 = vsel %vm4016, %v4054, %v4013
  %v4064 = vsel %vm4016, %v4056, %v4014
  %v4065 = vsel %vm4015, 1, 0
  %vm4066 = vcmp.eq.s32.totalorder %v4065, 1
  %4083 = vrot.lane.b32.xlu0 %v4057, 44
  %v4084 = vpop.permute.xlu0 %4083
  %4085 = vrot.lane.b32.xlu0 %v4042, 44
  %v4086 = vpop.permute.xlu0 %4085
  %4087 = vrot.lane.b32.xlu0 %v4058, 44
  %v4088 = vpop.permute.xlu0 %4087
  %4089 = vrot.lane.b32.xlu0 %v4044, 44
  %v4090 = vpop.permute.xlu0 %4089
  %4091 = vrot.lane.b32.xlu0 %v4059, 44
  %v4092 = vpop.permute.xlu0 %4091
  %4093 = vrot.lane.b32.xlu0 %v4046, 44
  %v4094 = vpop.permute.xlu0 %4093
  %4095 = vrot.lane.b32.xlu0 %v4060, 44
  %v4096 = vpop.permute.xlu0 %4095
  %4097 = vrot.lane.b32.xlu0 %v4048, 44
  %v4098 = vpop.permute.xlu0 %4097
  %4099 = vrot.lane.b32.xlu0 %v4061, 44
  %v4100 = vpop.permute.xlu0 %4099
  %4101 = vrot.lane.b32.xlu0 %v4050, 44
  %v4102 = vpop.permute.xlu0 %4101
  %4103 = vrot.lane.b32.xlu0 %v4062, 44
  %v4104 = vpop.permute.xlu0 %4103
  %4105 = vrot.lane.b32.xlu0 %v4052, 44
  %v4106 = vpop.permute.xlu0 %4105
  %4107 = vrot.lane.b32.xlu0 %v4063, 44
  %v4108 = vpop.permute.xlu0 %4107
  %4109 = vrot.lane.b32.xlu0 %v4054, 44
  %v4110 = vpop.permute.xlu0 %4109
  %4111 = vrot.lane.b32.xlu0 %v4064, 44
  %v4112 = vpop.permute.xlu0 %4111
  %4113 = vrot.lane.b32.xlu0 %v4056, 44
  %v4114 = vpop.permute.xlu0 %4113
  %vm4115 = vcmask 359424
  %v4116 = vsel %vm4115, %v4084, %v4086
  %v4117 = vsel %vm4115, %v4088, %v4090
  %v4118 = vsel %vm4115, %v4092, %v4094
  %v4119 = vsel %vm4115, %v4096, %v4098
  %v4120 = vsel %vm4115, %v4100, %v4102
  %v4121 = vsel %vm4115, %v4104, %v4106
  %v4122 = vsel %vm4115, %v4108, %v4110
  %v4123 = vsel %vm4115, %v4112, %v4114
  %v4132 = vsel %vm4066, %v4116, 0.0
  %v4133 = vsel %vm4066, %v4117, 0.0
  %v4134 = vsel %vm4066, %v4118, 0.0
  %v4135 = vsel %vm4066, %v4119, 0.0
  %v4136 = vsel %vm4066, %v4120, 0.0
  %v4137 = vsel %vm4066, %v4121, 0.0
  %v4138 = vsel %vm4066, %v4122, 0.0
  %v4139 = vsel %vm4066, %v4123, 0.0
  %vm4140 = vcmp.lt.s32.totalorder %v109, 84
  %v4141 = vsel %vm4140, 1, 0
  %vm4142 = vcmp.eq.s32.totalorder %v4141, 1
  %4143 = vrot.lane.b32.xlu0 %v4057, 116
  %v4144 = vpop.permute.xlu0 %4143
  %4145 = vrot.lane.b32.xlu0 %v4058, 116
  %v4146 = vpop.permute.xlu0 %4145
  %4147 = vrot.lane.b32.xlu0 %v4059, 116
  %v4148 = vpop.permute.xlu0 %4147
  %4149 = vrot.lane.b32.xlu0 %v4060, 116
  %v4150 = vpop.permute.xlu0 %4149
  %4151 = vrot.lane.b32.xlu0 %v4061, 116
  %v4152 = vpop.permute.xlu0 %4151
  %4153 = vrot.lane.b32.xlu0 %v4062, 116
  %v4154 = vpop.permute.xlu0 %4153
  %4155 = vrot.lane.b32.xlu0 %v4063, 116
  %v4156 = vpop.permute.xlu0 %4155
  %4157 = vrot.lane.b32.xlu0 %v4064, 116
  %v4158 = vpop.permute.xlu0 %4157
  %v4167 = vsel %vm4142, %v4144, 0.0
  %v4168 = vsel %vm4142, %v4146, 0.0
  %v4169 = vsel %vm4142, %v4148, 0.0
  %v4170 = vsel %vm4142, %v4150, 0.0
  %v4171 = vsel %vm4142, %v4152, 0.0
  %v4172 = vsel %vm4142, %v4154, 0.0
  %v4173 = vsel %vm4142, %v4156, 0.0
  %v4174 = vsel %vm4142, %v4158, 0.0
  %4175 = vset.pattern.permute.xlu0 6
  %4176 = vperm.xlu0 %4175, %v71
  %v4177 = vpop.permute.xlu0 %4176
  %4179 = vset.pattern.permute.xlu0 6
  %4180 = vperm.xlu0 %4179, %v72
  %v4181 = vpop.permute.xlu0 %4180
  %4183 = vset.pattern.permute.xlu0 6
  %4184 = vperm.xlu0 %4183, %v73
  %v4185 = vpop.permute.xlu0 %4184
  %4187 = vset.pattern.permute.xlu0 6
  %4188 = vperm.xlu0 %4187, %v74
  %v4189 = vpop.permute.xlu0 %4188
  %4191 = vset.pattern.permute.xlu0 6
  %4192 = vperm.xlu0 %4191, %v75
  %v4193 = vpop.permute.xlu0 %4192
  %4195 = vset.pattern.permute.xlu0 6
  %4196 = vperm.xlu0 %4195, %v76
  %v4197 = vpop.permute.xlu0 %4196
  %4199 = vset.pattern.permute.xlu0 6
  %4200 = vperm.xlu0 %4199, %v77
  %v4201 = vpop.permute.xlu0 %4200
  %4203 = vset.pattern.permute.xlu0 6
  %4204 = vperm.xlu0 %4203, %v78
  %v4205 = vpop.permute.xlu0 %4204
  %v4208 = vsel %vm3548, %v28, 0
  %v4211 = vsel %vm3548, %v30, 0
  %v4214 = vsel %vm3548, %v32, 0
  %v4217 = vsel %vm3548, %v34, 0
  %v4220 = vsel %vm3548, %v36, 0
  %v4223 = vsel %vm3548, %v38, 0
  %v4226 = vsel %vm3548, %v40, 0
  %v4229 = vsel %vm3548, %v42, 0
  %4231 = vmatprep.subr.mxu0 0.0
  %4232 = vmatpush1.msra.mxu0 %v4132
  %4233 = vmatprep.subr.mxu0 0.0
  %4234 = vmatpush1.msra.mxu0 %v4133
  %4235 = vmatprep.subr.mxu0 0.0
  %4236 = vmatpush1.msra.mxu0 %v4134
  %4237 = vmatprep.subr.mxu0 0.0
  %4238 = vmatpush1.msra.mxu0 %v4135
  %4239 = vmatprep.subr.mxu0 0.0
  %4240 = vmatpush1.msra.mxu0 %v4136
  %4241 = vmatprep.subr.mxu0 0.0
  %4242 = vmatpush1.msra.mxu0 %v4137
  %4243 = vmatprep.subr.mxu0 0.0
  %4244 = vmatpush1.msra.mxu0 %v4138
  %4245 = vmatprep.subr.mxu0 0.0
  %4246 = vmatpush1.msra.mxu0 %v4139
  %4247 = vmatprep.subr.mxu0 0.0
  %4248 = vmatpush1.msra.mxu0 %v4007
  %4249 = vmatprep.subr.mxu0 0.0
  %4250 = vmatpush1.msra.mxu0 %v4008
  %4251 = vmatprep.subr.mxu0 0.0
  %4252 = vmatpush1.msra.mxu0 %v4009
  %4253 = vmatprep.subr.mxu0 0.0
  %4254 = vmatpush1.msra.mxu0 %v4010
  %4255 = vmatprep.subr.mxu0 0.0
  %4256 = vmatpush1.msra.mxu0 %v4011
  %4257 = vmatprep.subr.mxu0 0.0
  %4258 = vmatpush1.msra.mxu0 %v4012
  %4259 = vmatprep.subr.mxu0 0.0
  %4260 = vmatpush1.msra.mxu0 %v4013
  %4261 = vmatprep.subr.mxu0 0.0
  %4262 = vmatpush1.msra.mxu0 %v4014
  %4263 = vmatprep.subr.mxu0 0.0
  %4264 = vmatpush1.msra.mxu0 %v4167
  %4265 = vmatprep.subr.mxu0 0.0
  %4266 = vmatpush1.msra.mxu0 %v4168
  %4267 = vmatprep.subr.mxu0 0.0
  %4268 = vmatpush1.msra.mxu0 %v4169
  %4269 = vmatprep.subr.mxu0 0.0
  %4270 = vmatpush1.msra.mxu0 %v4170
  %4271 = vmatprep.subr.mxu0 0.0
  %4272 = vmatpush1.msra.mxu0 %v4171
  %4273 = vmatprep.subr.mxu0 0.0
  %4274 = vmatpush1.msra.mxu0 %v4172
  %4275 = vmatprep.subr.mxu0 0.0
  %4276 = vmatpush1.msra.mxu0 %v4173
  %4277 = vmatprep.subr.mxu0 0.0
  %4278 = vmatpush1.msra.mxu0 %v4174
  %4279 = vmatprep.subr.mxu0 0.0
  %4280 = vmatpush1.msra.mxu0 0.0
  %4281 = vmatprep.subr.mxu0 0.0
  %4282 = vmatpush1.msra.mxu0 0.0
  %4283 = vmatprep.subr.mxu0 0.0
  %4284 = vmatpush1.msra.mxu0 0.0
  %4285 = vmatprep.subr.mxu0 0.0
  %4286 = vmatpush1.msra.mxu0 0.0
  %4287 = vmatprep.subr.mxu0 0.0
  %4288 = vmatpush1.msra.mxu0 0.0
  %4289 = vmatprep.subr.mxu0 0.0
  %4290 = vmatpush1.msra.mxu0 0.0
  %4291 = vmatprep.subr.mxu0 0.0
  %4292 = vmatpush1.msra.mxu0 0.0
  %4293 = vmatprep.subr.mxu0 0.0
  %4294 = vmatpush1.msra.mxu0 0.0
  %4295 = vmatprep.mubr.f32.mxu0 %v4208
  %4296 = vmatmul.mubr.f32.gmra.mrb[0].mxu0 %v27
  %v4297 = vpop.f32.mrb[0].mxu0
  %v4298 = vadd.f32 %v4177, %v4297
  %v4299 = vpop.f32.mrb[0].mxu0
  %4300 = vmatprep.mubr.f32.mxu0 %v4211
  %4301 = vmatmul.mubr.f32.gmra.mrb[0].mxu0 %v29
  %v4302 = vpop.f32.mrb[0].mxu0
  %v4303 = vadd.f32 %v4181, %v4302
  %v4304 = vpop.f32.mrb[0].mxu0
  %4305 = vmatprep.mubr.f32.mxu0 %v4214
  %4306 = vmatmul.mubr.f32.gmra.mrb[0].mxu0 %v31
  %v4307 = vpop.f32.mrb[0].mxu0
  %v4308 = vadd.f32 %v4185, %v4307
  %v4309 = vpop.f32.mrb[0].mxu0
  %4310 = vmatprep.mubr.f32.mxu0 %v4217
  %4311 = vmatmul.mubr.f32.gmra.mrb[0].mxu0 %v33
  %v4312 = vpop.f32.mrb[0].mxu0
  %v4313 = vadd.f32 %v4189, %v4312
  %v4314 = vpop.f32.mrb[0].mxu0
  %4315 = vmatprep.mubr.f32.mxu0 %v4220
  %4316 = vmatmul.mubr.f32.gmra.mrb[0].mxu0 %v35
  %v4317 = vpop.f32.mrb[0].mxu0
  %v4318 = vadd.f32 %v4193, %v4317
  %v4319 = vpop.f32.mrb[0].mxu0
  %4320 = vmatprep.mubr.f32.mxu0 %v4223
  %4321 = vmatmul.mubr.f32.gmra.mrb[0].mxu0 %v37
  %v4322 = vpop.f32.mrb[0].mxu0
  %v4323 = vadd.f32 %v4197, %v4322
  %v4324 = vpop.f32.mrb[0].mxu0
  %4325 = vmatprep.mubr.f32.mxu0 %v4226
  %4326 = vmatmul.mubr.f32.gmra.mrb[0].mxu0 %v39
  %v4327 = vpop.f32.mrb[0].mxu0
  %v4328 = vadd.f32 %v4201, %v4327
  %v4329 = vpop.f32.mrb[0].mxu0
  %4330 = vmatprep.mubr.f32.mxu0 %v4229
  %4331 = vmatmul.mubr.f32.gmra.mrb[0].mxu0 %v41
  %v4332 = vpop.f32.mrb[0].mxu0
  %v4333 = vadd.f32 %v4205, %v4332
  %v4334 = vpop.f32.mrb[0].mxu0
  %4335 = vdwg.mxu0
  %v4336 = vsel %vm1376, %v4298, 0.0
  %4337 = vadd.xlane.f32.xlu0 %v4336
  %v4338 = vpop.xlane.xlu0 %4337
  %v4339 = vsel %vm1376, %v4303, 0.0
  %4340 = vadd.xlane.f32.xlu0 %v4339
  %v4341 = vpop.xlane.xlu0 %4340
  %v4342 = vsel %vm1376, %v4308, 0.0
  %4343 = vadd.xlane.f32.xlu0 %v4342
  %v4344 = vpop.xlane.xlu0 %4343
  %v4345 = vsel %vm1376, %v4313, 0.0
  %4346 = vadd.xlane.f32.xlu0 %v4345
  %v4347 = vpop.xlane.xlu0 %4346
  %v4348 = vsel %vm1376, %v4318, 0.0
  %4349 = vadd.xlane.f32.xlu0 %v4348
  %v4350 = vpop.xlane.xlu0 %4349
  %v4351 = vsel %vm1376, %v4323, 0.0
  %4352 = vadd.xlane.f32.xlu0 %v4351
  %v4353 = vpop.xlane.xlu0 %4352
  %v4354 = vsel %vm1376, %v4328, 0.0
  %4355 = vadd.xlane.f32.xlu0 %v4354
  %v4356 = vpop.xlane.xlu0 %4355
  %v4357 = vsel %vm1376, %v4333, 0.0
  %4358 = vadd.xlane.f32.xlu0 %v4357
  %v4359 = vpop.xlane.xlu0 %4358
  %v4360 = vmul.f32 %v4338, 0.010416667
  %v4361 = vmul.f32 %v4341, 0.010416667
  %v4362 = vmul.f32 %v4344, 0.010416667
  %v4363 = vmul.f32 %v4347, 0.010416667
  %v4364 = vmul.f32 %v4350, 0.010416667
  %v4365 = vmul.f32 %v4353, 0.010416667
  %v4366 = vmul.f32 %v4356, 0.010416667
  %v4367 = vmul.f32 %v4359, 0.010416667
  %v4368 = vsub.f32 %v4298, %v4360
  %v4369 = vsub.f32 %v4303, %v4361
  %v4370 = vsub.f32 %v4308, %v4362
  %v4371 = vsub.f32 %v4313, %v4363
  %v4372 = vsub.f32 %v4318, %v4364
  %v4373 = vsub.f32 %v4323, %v4365
  %v4374 = vsub.f32 %v4328, %v4366
  %v4375 = vsub.f32 %v4333, %v4367
  %v4376 = vmul.f32 %v4368, %v4368
  %v4377 = vmul.f32 %v4369, %v4369
  %v4378 = vmul.f32 %v4370, %v4370
  %v4379 = vmul.f32 %v4371, %v4371
  %v4380 = vmul.f32 %v4372, %v4372
  %v4381 = vmul.f32 %v4373, %v4373
  %v4382 = vmul.f32 %v4374, %v4374
  %v4383 = vmul.f32 %v4375, %v4375
  %v4384 = vsel %vm1376, %v4376, 0.0
  %4385 = vadd.xlane.f32.xlu0 %v4384
  %v4386 = vpop.xlane.xlu0 %4385
  %v4387 = vsel %vm1376, %v4377, 0.0
  %4388 = vadd.xlane.f32.xlu0 %v4387
  %v4389 = vpop.xlane.xlu0 %4388
  %v4390 = vsel %vm1376, %v4378, 0.0
  %4391 = vadd.xlane.f32.xlu0 %v4390
  %v4392 = vpop.xlane.xlu0 %4391
  %v4393 = vsel %vm1376, %v4379, 0.0
  %4394 = vadd.xlane.f32.xlu0 %v4393
  %v4395 = vpop.xlane.xlu0 %4394
  %v4396 = vsel %vm1376, %v4380, 0.0
  %4397 = vadd.xlane.f32.xlu0 %v4396
  %v4398 = vpop.xlane.xlu0 %4397
  %v4399 = vsel %vm1376, %v4381, 0.0
  %4400 = vadd.xlane.f32.xlu0 %v4399
  %v4401 = vpop.xlane.xlu0 %4400
  %v4402 = vsel %vm1376, %v4382, 0.0
  %4403 = vadd.xlane.f32.xlu0 %v4402
  %v4404 = vpop.xlane.xlu0 %4403
  %v4405 = vsel %vm1376, %v4383, 0.0
  %4406 = vadd.xlane.f32.xlu0 %v4405
  %v4407 = vpop.xlane.xlu0 %4406
  %v4408 = vmul.f32 %v4386, 0.010416667
  %v4409 = vmul.f32 %v4389, 0.010416667
  %v4410 = vmul.f32 %v4392, 0.010416667
  %v4411 = vmul.f32 %v4395, 0.010416667
  %v4412 = vmul.f32 %v4398, 0.010416667
  %v4413 = vmul.f32 %v4401, 0.010416667
  %v4414 = vmul.f32 %v4404, 0.010416667
  %v4415 = vmul.f32 %v4407, 0.010416667
  %v4416 = vadd.f32 %v4408, 1e-05
  %v4417 = vadd.f32 %v4409, 1e-05
  %v4418 = vadd.f32 %v4410, 1e-05
  %v4419 = vadd.f32 %v4411, 1e-05
  %v4420 = vadd.f32 %v4412, 1e-05
  %v4421 = vadd.f32 %v4413, 1e-05
  %v4422 = vadd.f32 %v4414, 1e-05
  %v4423 = vadd.f32 %v4415, 1e-05
  %v4424 = vrsqrt.pop %v4416
  %v4425 = vrsqrt.pop %v4417
  %v4426 = vrsqrt.pop %v4418
  %v4427 = vrsqrt.pop %v4419
  %v4428 = vrsqrt.pop %v4420
  %v4429 = vrsqrt.pop %v4421
  %v4430 = vrsqrt.pop %v4422
  %v4431 = vrsqrt.pop %v4423
  %v4432 = vmul.f32 %v4368, %v4424
  %v4433 = vmul.f32 %v4369, %v4425
  %v4434 = vmul.f32 %v4370, %v4426
  %v4435 = vmul.f32 %v4371, %v4427
  %v4436 = vmul.f32 %v4372, %v4428
  %v4437 = vmul.f32 %v4373, %v4429
  %v4438 = vmul.f32 %v4374, %v4430
  %v4439 = vmul.f32 %v4375, %v4431
  %4440 = vset.pattern.permute.xlu0 7
  %4441 = vperm.xlu0 %4440, %v71
  %v4442 = vpop.permute.xlu0 %4441
  %4444 = vset.pattern.permute.xlu0 7
  %4445 = vperm.xlu0 %4444, %v72
  %v4446 = vpop.permute.xlu0 %4445
  %4448 = vset.pattern.permute.xlu0 7
  %4449 = vperm.xlu0 %4448, %v73
  %v4450 = vpop.permute.xlu0 %4449
  %4452 = vset.pattern.permute.xlu0 7
  %4453 = vperm.xlu0 %4452, %v74
  %v4454 = vpop.permute.xlu0 %4453
  %4456 = vset.pattern.permute.xlu0 7
  %4457 = vperm.xlu0 %4456, %v75
  %v4458 = vpop.permute.xlu0 %4457
  %4460 = vset.pattern.permute.xlu0 7
  %4461 = vperm.xlu0 %4460, %v76
  %v4462 = vpop.permute.xlu0 %4461
  %4464 = vset.pattern.permute.xlu0 7
  %4465 = vperm.xlu0 %4464, %v77
  %v4466 = vpop.permute.xlu0 %4465
  %4468 = vset.pattern.permute.xlu0 7
  %4469 = vperm.xlu0 %4468, %v78
  %v4470 = vpop.permute.xlu0 %4469
  %v4472 = vmul.f32 %v4432, %v4442
  %v4473 = vmul.f32 %v4433, %v4446
  %v4474 = vmul.f32 %v4434, %v4450
  %v4475 = vmul.f32 %v4435, %v4454
  %v4476 = vmul.f32 %v4436, %v4458
  %v4477 = vmul.f32 %v4437, %v4462
  %v4478 = vmul.f32 %v4438, %v4466
  %v4479 = vmul.f32 %v4439, %v4470
  %4480 = vset.pattern.permute.xlu0 8
  %4481 = vperm.xlu0 %4480, %v71
  %v4482 = vpop.permute.xlu0 %4481
  %4484 = vset.pattern.permute.xlu0 8
  %4485 = vperm.xlu0 %4484, %v72
  %v4486 = vpop.permute.xlu0 %4485
  %4488 = vset.pattern.permute.xlu0 8
  %4489 = vperm.xlu0 %4488, %v73
  %v4490 = vpop.permute.xlu0 %4489
  %4492 = vset.pattern.permute.xlu0 8
  %4493 = vperm.xlu0 %4492, %v74
  %v4494 = vpop.permute.xlu0 %4493
  %4496 = vset.pattern.permute.xlu0 8
  %4497 = vperm.xlu0 %4496, %v75
  %v4498 = vpop.permute.xlu0 %4497
  %4500 = vset.pattern.permute.xlu0 8
  %4501 = vperm.xlu0 %4500, %v76
  %v4502 = vpop.permute.xlu0 %4501
  %4504 = vset.pattern.permute.xlu0 8
  %4505 = vperm.xlu0 %4504, %v77
  %v4506 = vpop.permute.xlu0 %4505
  %4508 = vset.pattern.permute.xlu0 8
  %4509 = vperm.xlu0 %4508, %v78
  %v4510 = vpop.permute.xlu0 %4509
  %v4512 = vadd.f32 %v4472, %v4482
  %v4513 = vadd.f32 %v4473, %v4486
  %v4514 = vadd.f32 %v4474, %v4490
  %v4515 = vadd.f32 %v4475, %v4494
  %v4516 = vadd.f32 %v4476, %v4498
  %v4517 = vadd.f32 %v4477, %v4502
  %v4518 = vadd.f32 %v4478, %v4506
  %v4519 = vadd.f32 %v4479, %v4510
  %v4520 = vadd.f32 %v4512, %v3508
  %v4521 = vadd.f32 %v4513, %v3509
  %v4522 = vadd.f32 %v4514, %v3510
  %v4523 = vadd.f32 %v4515, %v3511
  %v4524 = vadd.f32 %v4516, %v3512
  %v4525 = vadd.f32 %v4517, %v3513
  %v4526 = vadd.f32 %v4518, %v3514
  %v4527 = vadd.f32 %v4519, %v3515
  %v4528 = vld [vmem:[%s2] sm:$0xff]
  %v4529 = vld [vmem:[%s2 + $0x8] sm:$0xff]
  %v4530 = vld [vmem:[%s2 + $0x10] sm:$0xff]
  %v4531 = vld [vmem:[%s2 + $0x18] sm:$0xff]
  %v4532 = vld [vmem:[%s2 + $0x20] sm:$0xff]
  %v4533 = vld [vmem:[%s2 + $0x28] sm:$0xff]
  %v4534 = vld [vmem:[%s2 + $0x30] sm:$0xff]
  %v4535 = vld [vmem:[%s2 + $0x38] sm:$0xff]
  %v4536 = vld [vmem:[%s2 + $0x40] sm:$0xff]
  %v4537 = vld [vmem:[%s2 + $0x48] sm:$0xff]
  %v4538 = vld [vmem:[%s2 + $0x50] sm:$0xff]
  %v4539 = vld [vmem:[%s2 + $0x58] sm:$0xff]
  %v4540 = vld [vmem:[%s2 + $0x60] sm:$0xff]
  %v4541 = vld [vmem:[%s2 + $0x68] sm:$0xff]
  %v4542 = vld [vmem:[%s2 + $0x70] sm:$0xff]
  %v4543 = vld [vmem:[%s2 + $0x78] sm:$0xff]
  %v4544 = vld [vmem:[%s2 + $0x80] sm:$0xff]
  %v4545 = vld [vmem:[%s2 + $0x88] sm:$0xff]
  %v4546 = vld [vmem:[%s2 + $0x90] sm:$0xff]
  %v4547 = vld [vmem:[%s2 + $0x98] sm:$0xff]
  %v4548 = vld [vmem:[%s2 + $0xa0] sm:$0xff]
  %v4549 = vld [vmem:[%s2 + $0xa8] sm:$0xff]
  %v4550 = vld [vmem:[%s2 + $0xb0] sm:$0xff]
  %v4551 = vld [vmem:[%s2 + $0xb8] sm:$0xff]
  %v4552 = vld [vmem:[%s2 + $0xc0] sm:$0xff]
  %v4553 = vld [vmem:[%s2 + $0xc8] sm:$0xff]
  %v4554 = vld [vmem:[%s2 + $0xd0] sm:$0xff]
  %v4555 = vld [vmem:[%s2 + $0xd8] sm:$0xff]
  %v4556 = vld [vmem:[%s2 + $0xe0] sm:$0xff]
  %v4557 = vld [vmem:[%s2 + $0xe8] sm:$0xff]
  %v4558 = vld [vmem:[%s2 + $0xf0] sm:$0xff]
  %v4559 = vld [vmem:[%s2 + $0xf8] sm:$0xff]
  %v4560 = vld [vmem:[%s2 + $0x100] sm:$0xff]
  %v4561 = vld [vmem:[%s2 + $0x108] sm:$0xff]
  %v4562 = vld [vmem:[%s2 + $0x110] sm:$0xff]
  %v4563 = vld [vmem:[%s2 + $0x118] sm:$0xff]
  %v4564 = vld [vmem:[%s2 + $0x120] sm:$0xff]
  %v4565 = vld [vmem:[%s2 + $0x128] sm:$0xff]
  %v4566 = vld [vmem:[%s2 + $0x130] sm:$0xff]
  %v4567 = vld [vmem:[%s2 + $0x138] sm:$0xff]
  %v4568 = vld [vmem:[%s2 + $0x140] sm:$0xff]
  %v4569 = vld [vmem:[%s2 + $0x148] sm:$0xff]
  %v4570 = vld [vmem:[%s2 + $0x150] sm:$0xff]
  %v4571 = vld [vmem:[%s2 + $0x158] sm:$0xff]
  %v4572 = vld [vmem:[%s2 + $0x160] sm:$0xff]
  %v4573 = vld [vmem:[%s2 + $0x168] sm:$0xff]
  %v4574 = vld [vmem:[%s2 + $0x170] sm:$0xff]
  %v4575 = vld [vmem:[%s2 + $0x178] sm:$0xff]
  %v4576 = vld [vmem:[%s2 + $0x180] sm:$0xff]
  %v4577 = vld [vmem:[%s2 + $0x188] sm:$0xff]
  %v4578 = vld [vmem:[%s2 + $0x190] sm:$0xff]
  %v4579 = vld [vmem:[%s2 + $0x198] sm:$0xff]
  %v4580 = vld [vmem:[%s2 + $0x1a0] sm:$0xff]
  %v4581 = vld [vmem:[%s2 + $0x1a8] sm:$0xff]
  %v4582 = vld [vmem:[%s2 + $0x1b0] sm:$0xff]
  %v4583 = vld [vmem:[%s2 + $0x1b8] sm:$0xff]
  %v4584 = vld [vmem:[%s2 + $0x1c0] sm:$0xff]
  %v4585 = vld [vmem:[%s2 + $0x1c8] sm:$0xff]
  %v4586 = vld [vmem:[%s2 + $0x1d0] sm:$0xff]
  %v4587 = vld [vmem:[%s2 + $0x1d8] sm:$0xff]
  %v4588 = vld [vmem:[%s2 + $0x1e0] sm:$0xff]
  %v4589 = vld [vmem:[%s2 + $0x1e8] sm:$0xff]
  %v4590 = vld [vmem:[%s2 + $0x1f0] sm:$0xff]
  %v4591 = vld [vmem:[%s2 + $0x1f8] sm:$0xff]
  %v4592 = vld [vmem:[%s2 + $0x200] sm:$0xff]
  %v4593 = vld [vmem:[%s2 + $0x208] sm:$0xff]
  %v4594 = vld [vmem:[%s2 + $0x210] sm:$0xff]
  %v4595 = vld [vmem:[%s2 + $0x218] sm:$0xff]
  %v4596 = vld [vmem:[%s2 + $0x220] sm:$0xff]
  %v4597 = vld [vmem:[%s2 + $0x228] sm:$0xff]
  %v4598 = vld [vmem:[%s2 + $0x230] sm:$0xff]
  %v4599 = vld [vmem:[%s2 + $0x238] sm:$0xff]
  %v4601 = vsel %vm1376, %v4520, 0
  %v4604 = vsel %vm1376, %v4521, 0
  %v4607 = vsel %vm1376, %v4522, 0
  %v4610 = vsel %vm1376, %v4523, 0
  %v4613 = vsel %vm1376, %v4524, 0
  %v4616 = vsel %vm1376, %v4525, 0
  %v4619 = vsel %vm1376, %v4526, 0
  %v4622 = vsel %vm1376, %v4527, 0
  %4624 = vmatprep.subr.mxu0 %v4529
  %4625 = vmatpush1.msra.mxu0 %v4528
  %4626 = vmatprep.subr.mxu0 %v4535
  %4627 = vmatpush1.msra.mxu0 %v4534
  %4628 = vmatprep.subr.mxu0 %v4541
  %4629 = vmatpush1.msra.mxu0 %v4540
  %4630 = vmatprep.subr.mxu0 %v4547
  %4631 = vmatpush1.msra.mxu0 %v4546
  %4632 = vmatprep.subr.mxu0 %v4553
  %4633 = vmatpush1.msra.mxu0 %v4552
  %4634 = vmatprep.subr.mxu0 %v4559
  %4635 = vmatpush1.msra.mxu0 %v4558
  %4636 = vmatprep.subr.mxu0 %v4565
  %4637 = vmatpush1.msra.mxu0 %v4564
  %4638 = vmatprep.subr.mxu0 %v4571
  %4639 = vmatpush1.msra.mxu0 %v4570
  %4640 = vmatprep.subr.mxu0 %v4577
  %4641 = vmatpush1.msra.mxu0 %v4576
  %4642 = vmatprep.subr.mxu0 %v4583
  %4643 = vmatpush1.msra.mxu0 %v4582
  %4644 = vmatprep.subr.mxu0 %v4589
  %4645 = vmatpush1.msra.mxu0 %v4588
  %4646 = vmatprep.subr.mxu0 %v4595
  %4647 = vmatpush1.msra.mxu0 %v4594
  %4648 = vmatprep.subr.mxu0 0.0
  %4649 = vmatpush1.msra.mxu0 0.0
  %4650 = vmatprep.subr.mxu0 0.0
  %4651 = vmatpush1.msra.mxu0 0.0
  %4652 = vmatprep.subr.mxu0 0.0
  %4653 = vmatpush1.msra.mxu0 0.0
  %4654 = vmatprep.subr.mxu0 0.0
  %4655 = vmatpush1.msra.mxu0 0.0
  %4656 = vmatprep.subr.mxu0 0.0
  %4657 = vmatpush1.msra.mxu0 0.0
  %4658 = vmatprep.subr.mxu0 0.0
  %4659 = vmatpush1.msra.mxu0 0.0
  %4660 = vmatprep.subr.mxu0 0.0
  %4661 = vmatpush1.msra.mxu0 0.0
  %4662 = vmatprep.subr.mxu0 0.0
  %4663 = vmatpush1.msra.mxu0 0.0
  %4664 = vmatprep.subr.mxu0 0.0
  %4665 = vmatpush1.msra.mxu0 0.0
  %4666 = vmatprep.subr.mxu0 0.0
  %4667 = vmatpush1.msra.mxu0 0.0
  %4668 = vmatprep.subr.mxu0 0.0
  %4669 = vmatpush1.msra.mxu0 0.0
  %4670 = vmatprep.subr.mxu0 0.0
  %4671 = vmatpush1.msra.mxu0 0.0
  %4672 = vmatprep.subr.mxu0 0.0
  %4673 = vmatpush1.msra.mxu0 0.0
  %4674 = vmatprep.subr.mxu0 0.0
  %4675 = vmatpush1.msra.mxu0 0.0
  %4676 = vmatprep.subr.mxu0 0.0
  %4677 = vmatpush1.msra.mxu0 0.0
  %4678 = vmatprep.subr.mxu0 0.0
  %4679 = vmatpush1.msra.mxu0 0.0
  %4680 = vmatprep.subr.mxu0 0.0
  %4681 = vmatpush1.msra.mxu0 0.0
  %4682 = vmatprep.subr.mxu0 0.0
  %4683 = vmatpush1.msra.mxu0 0.0
  %4684 = vmatprep.subr.mxu0 0.0
  %4685 = vmatpush1.msra.mxu0 0.0
  %4686 = vmatprep.subr.mxu0 0.0
  %4687 = vmatpush1.msra.mxu0 0.0
  %4688 = vmatprep.mubr.f32.mxu0 0.0
  %4689 = vmatmul.mubr.f32.gmra.mrb[0].mxu0 %v4601
  %v4690 = vpop.f32.mrb[0].mxu0
  %v4691 = vadd.f32 0.0, %v4690
  %v4692 = vpop.f32.mrb[0].mxu0
  %v4693 = vadd.f32 0.0, %v4692
  %4694 = vmatprep.mubr.f32.mxu0 0.0
  %4695 = vmatmul.mubr.f32.gmra.mrb[0].mxu0 %v4604
  %v4696 = vpop.f32.mrb[0].mxu0
  %v4697 = vadd.f32 0.0, %v4696
  %v4698 = vpop.f32.mrb[0].mxu0
  %v4699 = vadd.f32 0.0, %v4698
  %4700 = vmatprep.mubr.f32.mxu0 0.0
  %4701 = vmatmul.mubr.f32.gmra.mrb[0].mxu0 %v4607
  %v4702 = vpop.f32.mrb[0].mxu0
  %v4703 = vadd.f32 0.0, %v4702
  %v4704 = vpop.f32.mrb[0].mxu0
  %v4705 = vadd.f32 0.0, %v4704
  %4706 = vmatprep.mubr.f32.mxu0 0.0
  %4707 = vmatmul.mubr.f32.gmra.mrb[0].mxu0 %v4610
  %v4708 = vpop.f32.mrb[0].mxu0
  %v4709 = vadd.f32 0.0, %v4708
  %v4710 = vpop.f32.mrb[0].mxu0
  %v4711 = vadd.f32 0.0, %v4710
  %4712 = vmatprep.mubr.f32.mxu0 0.0
  %4713 = vmatmul.mubr.f32.gmra.mrb[0].mxu0 %v4613
  %v4714 = vpop.f32.mrb[0].mxu0
  %v4715 = vadd.f32 0.0, %v4714
  %v4716 = vpop.f32.mrb[0].mxu0
  %v4717 = vadd.f32 0.0, %v4716
  %4718 = vmatprep.mubr.f32.mxu0 0.0
  %4719 = vmatmul.mubr.f32.gmra.mrb[0].mxu0 %v4616
  %v4720 = vpop.f32.mrb[0].mxu0
  %v4721 = vadd.f32 0.0, %v4720
  %v4722 = vpop.f32.mrb[0].mxu0
  %v4723 = vadd.f32 0.0, %v4722
  %4724 = vmatprep.mubr.f32.mxu0 0.0
  %4725 = vmatmul.mubr.f32.gmra.mrb[0].mxu0 %v4619
  %v4726 = vpop.f32.mrb[0].mxu0
  %v4727 = vadd.f32 0.0, %v4726
  %v4728 = vpop.f32.mrb[0].mxu0
  %v4729 = vadd.f32 0.0, %v4728
  %4730 = vmatprep.mubr.f32.mxu0 0.0
  %4731 = vmatmul.mubr.f32.gmra.mrb[0].mxu0 %v4622
  %v4732 = vpop.f32.mrb[0].mxu0
  %v4733 = vadd.f32 0.0, %v4732
  %v4734 = vpop.f32.mrb[0].mxu0
  %v4735 = vadd.f32 0.0, %v4734
  %4736 = vdwg.mxu0
  %4737 = vmatprep.subr.mxu0 %v4531
  %4738 = vmatpush1.msra.mxu0 %v4530
  %4739 = vmatprep.subr.mxu0 %v4537
  %4740 = vmatpush1.msra.mxu0 %v4536
  %4741 = vmatprep.subr.mxu0 %v4543
  %4742 = vmatpush1.msra.mxu0 %v4542
  %4743 = vmatprep.subr.mxu0 %v4549
  %4744 = vmatpush1.msra.mxu0 %v4548
  %4745 = vmatprep.subr.mxu0 %v4555
  %4746 = vmatpush1.msra.mxu0 %v4554
  %4747 = vmatprep.subr.mxu0 %v4561
  %4748 = vmatpush1.msra.mxu0 %v4560
  %4749 = vmatprep.subr.mxu0 %v4567
  %4750 = vmatpush1.msra.mxu0 %v4566
  %4751 = vmatprep.subr.mxu0 %v4573
  %4752 = vmatpush1.msra.mxu0 %v4572
  %4753 = vmatprep.subr.mxu0 %v4579
  %4754 = vmatpush1.msra.mxu0 %v4578
  %4755 = vmatprep.subr.mxu0 %v4585
  %4756 = vmatpush1.msra.mxu0 %v4584
  %4757 = vmatprep.subr.mxu0 %v4591
  %4758 = vmatpush1.msra.mxu0 %v4590
  %4759 = vmatprep.subr.mxu0 %v4597
  %4760 = vmatpush1.msra.mxu0 %v4596
  %4761 = vmatprep.subr.mxu0 0.0
  %4762 = vmatpush1.msra.mxu0 0.0
  %4763 = vmatprep.subr.mxu0 0.0
  %4764 = vmatpush1.msra.mxu0 0.0
  %4765 = vmatprep.subr.mxu0 0.0
  %4766 = vmatpush1.msra.mxu0 0.0
  %4767 = vmatprep.subr.mxu0 0.0
  %4768 = vmatpush1.msra.mxu0 0.0
  %4769 = vmatprep.subr.mxu0 0.0
  %4770 = vmatpush1.msra.mxu0 0.0
  %4771 = vmatprep.subr.mxu0 0.0
  %4772 = vmatpush1.msra.mxu0 0.0
  %4773 = vmatprep.subr.mxu0 0.0
  %4774 = vmatpush1.msra.mxu0 0.0
  %4775 = vmatprep.subr.mxu0 0.0
  %4776 = vmatpush1.msra.mxu0 0.0
  %4777 = vmatprep.subr.mxu0 0.0
  %4778 = vmatpush1.msra.mxu0 0.0
  %4779 = vmatprep.subr.mxu0 0.0
  %4780 = vmatpush1.msra.mxu0 0.0
  %4781 = vmatprep.subr.mxu0 0.0
  %4782 = vmatpush1.msra.mxu0 0.0
  %4783 = vmatprep.subr.mxu0 0.0
  %4784 = vmatpush1.msra.mxu0 0.0
  %4785 = vmatprep.subr.mxu0 0.0
  %4786 = vmatpush1.msra.mxu0 0.0
  %4787 = vmatprep.subr.mxu0 0.0
  %4788 = vmatpush1.msra.mxu0 0.0
  %4789 = vmatprep.subr.mxu0 0.0
  %4790 = vmatpush1.msra.mxu0 0.0
  %4791 = vmatprep.subr.mxu0 0.0
  %4792 = vmatpush1.msra.mxu0 0.0
  %4793 = vmatprep.subr.mxu0 0.0
  %4794 = vmatpush1.msra.mxu0 0.0
  %4795 = vmatprep.subr.mxu0 0.0
  %4796 = vmatpush1.msra.mxu0 0.0
  %4797 = vmatprep.subr.mxu0 0.0
  %4798 = vmatpush1.msra.mxu0 0.0
  %4799 = vmatprep.subr.mxu0 0.0
  %4800 = vmatpush1.msra.mxu0 0.0
  %4801 = vmatprep.mubr.f32.mxu0 0.0
  %4802 = vmatmul.mubr.f32.gmra.mrb[0].mxu0 %v4601
  %v4803 = vpop.f32.mrb[0].mxu0
  %v4804 = vadd.f32 0.0, %v4803
  %v4805 = vpop.f32.mrb[0].mxu0
  %v4806 = vadd.f32 0.0, %v4805
  %4807 = vmatprep.mubr.f32.mxu0 0.0
  %4808 = vmatmul.mubr.f32.gmra.mrb[0].mxu0 %v4604
  %v4809 = vpop.f32.mrb[0].mxu0
  %v4810 = vadd.f32 0.0, %v4809
  %v4811 = vpop.f32.mrb[0].mxu0
  %v4812 = vadd.f32 0.0, %v4811
  %4813 = vmatprep.mubr.f32.mxu0 0.0
  %4814 = vmatmul.mubr.f32.gmra.mrb[0].mxu0 %v4607
  %v4815 = vpop.f32.mrb[0].mxu0
  %v4816 = vadd.f32 0.0, %v4815
  %v4817 = vpop.f32.mrb[0].mxu0
  %v4818 = vadd.f32 0.0, %v4817
  %4819 = vmatprep.mubr.f32.mxu0 0.0
  %4820 = vmatmul.mubr.f32.gmra.mrb[0].mxu0 %v4610
  %v4821 = vpop.f32.mrb[0].mxu0
  %v4822 = vadd.f32 0.0, %v4821
  %v4823 = vpop.f32.mrb[0].mxu0
  %v4824 = vadd.f32 0.0, %v4823
  %4825 = vmatprep.mubr.f32.mxu0 0.0
  %4826 = vmatmul.mubr.f32.gmra.mrb[0].mxu0 %v4613
  %v4827 = vpop.f32.mrb[0].mxu0
  %v4828 = vadd.f32 0.0, %v4827
  %v4829 = vpop.f32.mrb[0].mxu0
  %v4830 = vadd.f32 0.0, %v4829
  %4831 = vmatprep.mubr.f32.mxu0 0.0
  %4832 = vmatmul.mubr.f32.gmra.mrb[0].mxu0 %v4616
  %v4833 = vpop.f32.mrb[0].mxu0
  %v4834 = vadd.f32 0.0, %v4833
  %v4835 = vpop.f32.mrb[0].mxu0
  %v4836 = vadd.f32 0.0, %v4835
  %4837 = vmatprep.mubr.f32.mxu0 0.0
  %4838 = vmatmul.mubr.f32.gmra.mrb[0].mxu0 %v4619
  %v4839 = vpop.f32.mrb[0].mxu0
  %v4840 = vadd.f32 0.0, %v4839
  %v4841 = vpop.f32.mrb[0].mxu0
  %v4842 = vadd.f32 0.0, %v4841
  %4843 = vmatprep.mubr.f32.mxu0 0.0
  %4844 = vmatmul.mubr.f32.gmra.mrb[0].mxu0 %v4622
  %v4845 = vpop.f32.mrb[0].mxu0
  %v4846 = vadd.f32 0.0, %v4845
  %v4847 = vpop.f32.mrb[0].mxu0
  %v4848 = vadd.f32 0.0, %v4847
  %4849 = vdwg.mxu0
  %4850 = vmatprep.subr.mxu0 %v4533
  %4851 = vmatpush1.msra.mxu0 %v4532
  %4852 = vmatprep.subr.mxu0 %v4539
  %4853 = vmatpush1.msra.mxu0 %v4538
  %4854 = vmatprep.subr.mxu0 %v4545
  %4855 = vmatpush1.msra.mxu0 %v4544
  %4856 = vmatprep.subr.mxu0 %v4551
  %4857 = vmatpush1.msra.mxu0 %v4550
  %4858 = vmatprep.subr.mxu0 %v4557
  %4859 = vmatpush1.msra.mxu0 %v4556
  %4860 = vmatprep.subr.mxu0 %v4563
  %4861 = vmatpush1.msra.mxu0 %v4562
  %4862 = vmatprep.subr.mxu0 %v4569
  %4863 = vmatpush1.msra.mxu0 %v4568
  %4864 = vmatprep.subr.mxu0 %v4575
  %4865 = vmatpush1.msra.mxu0 %v4574
  %4866 = vmatprep.subr.mxu0 %v4581
  %4867 = vmatpush1.msra.mxu0 %v4580
  %4868 = vmatprep.subr.mxu0 %v4587
  %4869 = vmatpush1.msra.mxu0 %v4586
  %4870 = vmatprep.subr.mxu0 %v4593
  %4871 = vmatpush1.msra.mxu0 %v4592
  %4872 = vmatprep.subr.mxu0 %v4599
  %4873 = vmatpush1.msra.mxu0 %v4598
  %4874 = vmatprep.subr.mxu0 0.0
  %4875 = vmatpush1.msra.mxu0 0.0
  %4876 = vmatprep.subr.mxu0 0.0
  %4877 = vmatpush1.msra.mxu0 0.0
  %4878 = vmatprep.subr.mxu0 0.0
  %4879 = vmatpush1.msra.mxu0 0.0
  %4880 = vmatprep.subr.mxu0 0.0
  %4881 = vmatpush1.msra.mxu0 0.0
  %4882 = vmatprep.subr.mxu0 0.0
  %4883 = vmatpush1.msra.mxu0 0.0
  %4884 = vmatprep.subr.mxu0 0.0
  %4885 = vmatpush1.msra.mxu0 0.0
  %4886 = vmatprep.subr.mxu0 0.0
  %4887 = vmatpush1.msra.mxu0 0.0
  %4888 = vmatprep.subr.mxu0 0.0
  %4889 = vmatpush1.msra.mxu0 0.0
  %4890 = vmatprep.subr.mxu0 0.0
  %4891 = vmatpush1.msra.mxu0 0.0
  %4892 = vmatprep.subr.mxu0 0.0
  %4893 = vmatpush1.msra.mxu0 0.0
  %4894 = vmatprep.subr.mxu0 0.0
  %4895 = vmatpush1.msra.mxu0 0.0
  %4896 = vmatprep.subr.mxu0 0.0
  %4897 = vmatpush1.msra.mxu0 0.0
  %4898 = vmatprep.subr.mxu0 0.0
  %4899 = vmatpush1.msra.mxu0 0.0
  %4900 = vmatprep.subr.mxu0 0.0
  %4901 = vmatpush1.msra.mxu0 0.0
  %4902 = vmatprep.subr.mxu0 0.0
  %4903 = vmatpush1.msra.mxu0 0.0
  %4904 = vmatprep.subr.mxu0 0.0
  %4905 = vmatpush1.msra.mxu0 0.0
  %4906 = vmatprep.subr.mxu0 0.0
  %4907 = vmatpush1.msra.mxu0 0.0
  %4908 = vmatprep.subr.mxu0 0.0
  %4909 = vmatpush1.msra.mxu0 0.0
  %4910 = vmatprep.subr.mxu0 0.0
  %4911 = vmatpush1.msra.mxu0 0.0
  %4912 = vmatprep.subr.mxu0 0.0
  %4913 = vmatpush1.msra.mxu0 0.0
  %4914 = vmatprep.mubr.f32.mxu0 0.0
  %4915 = vmatmul.mubr.f32.gmra.mrb[0].mxu0 %v4601
  %v4916 = vpop.f32.mrb[0].mxu0
  %v4917 = vadd.f32 0.0, %v4916
  %v4918 = vpop.f32.mrb[0].mxu0
  %v4919 = vadd.f32 0.0, %v4918
  %4920 = vmatprep.mubr.f32.mxu0 0.0
  %4921 = vmatmul.mubr.f32.gmra.mrb[0].mxu0 %v4604
  %v4922 = vpop.f32.mrb[0].mxu0
  %v4923 = vadd.f32 0.0, %v4922
  %v4924 = vpop.f32.mrb[0].mxu0
  %v4925 = vadd.f32 0.0, %v4924
  %4926 = vmatprep.mubr.f32.mxu0 0.0
  %4927 = vmatmul.mubr.f32.gmra.mrb[0].mxu0 %v4607
  %v4928 = vpop.f32.mrb[0].mxu0
  %v4929 = vadd.f32 0.0, %v4928
  %v4930 = vpop.f32.mrb[0].mxu0
  %v4931 = vadd.f32 0.0, %v4930
  %4932 = vmatprep.mubr.f32.mxu0 0.0
  %4933 = vmatmul.mubr.f32.gmra.mrb[0].mxu0 %v4610
  %v4934 = vpop.f32.mrb[0].mxu0
  %v4935 = vadd.f32 0.0, %v4934
  %v4936 = vpop.f32.mrb[0].mxu0
  %v4937 = vadd.f32 0.0, %v4936
  %4938 = vmatprep.mubr.f32.mxu0 0.0
  %4939 = vmatmul.mubr.f32.gmra.mrb[0].mxu0 %v4613
  %v4940 = vpop.f32.mrb[0].mxu0
  %v4941 = vadd.f32 0.0, %v4940
  %v4942 = vpop.f32.mrb[0].mxu0
  %v4943 = vadd.f32 0.0, %v4942
  %4944 = vmatprep.mubr.f32.mxu0 0.0
  %4945 = vmatmul.mubr.f32.gmra.mrb[0].mxu0 %v4616
  %v4946 = vpop.f32.mrb[0].mxu0
  %v4947 = vadd.f32 0.0, %v4946
  %v4948 = vpop.f32.mrb[0].mxu0
  %v4949 = vadd.f32 0.0, %v4948
  %4950 = vmatprep.mubr.f32.mxu0 0.0
  %4951 = vmatmul.mubr.f32.gmra.mrb[0].mxu0 %v4619
  %v4952 = vpop.f32.mrb[0].mxu0
  %v4953 = vadd.f32 0.0, %v4952
  %v4954 = vpop.f32.mrb[0].mxu0
  %v4955 = vadd.f32 0.0, %v4954
  %4956 = vmatprep.mubr.f32.mxu0 0.0
  %4957 = vmatmul.mubr.f32.gmra.mrb[0].mxu0 %v4622
  %v4958 = vpop.f32.mrb[0].mxu0
  %v4959 = vadd.f32 0.0, %v4958
  %v4960 = vpop.f32.mrb[0].mxu0
  %v4961 = vadd.f32 0.0, %v4960
  %4962 = vdwg.mxu0
  %vm4963 = vcmp.ge.s32.totalorder %v84, 1
  %vm4964 = vcmp.ge.s32.totalorder %v85, 1
  %vm4965 = vcmp.ge.s32.totalorder %v86, 1
  %vm4966 = vcmp.ge.s32.totalorder %v87, 1
  %vm4967 = vcmp.ge.s32.totalorder %v88, 1
  %vm4968 = vcmp.ge.s32.totalorder %v89, 1
  %vm4969 = vcmp.ge.s32.totalorder %v90, 1
  %vm4970 = vcmp.ge.s32.totalorder %v91, 1
  %v4971 = vrot.slane %v4691, 7
  %v4972 = vrot.slane %v4693, 7
  %v4973 = vrot.slane %v4697, 7
  %v4974 = vrot.slane %v4699, 7
  %v4975 = vrot.slane %v4703, 7
  %v4976 = vrot.slane %v4705, 7
  %v4977 = vrot.slane %v4709, 7
  %v4978 = vrot.slane %v4711, 7
  %v4979 = vrot.slane %v4715, 7
  %v4980 = vrot.slane %v4717, 7
  %v4981 = vrot.slane %v4721, 7
  %v4982 = vrot.slane %v4723, 7
  %v4983 = vrot.slane %v4727, 7
  %v4984 = vrot.slane %v4729, 7
  %v4985 = vrot.slane %v4733, 7
  %v4986 = vrot.slane %v4735, 7
  %vm4987 = vcmp.lt.s32.totalorder %v84, 1
  %v4988 = vsel %vm4987, %v4983, %v4985
  %v4989 = vsel %vm4987, %v4984, %v4986
  %v4990 = vsel %vm4987, %v4981, %v4983
  %v4991 = vsel %vm4987, %v4982, %v4984
  %v4992 = vsel %vm4987, %v4979, %v4981
  %v4993 = vsel %vm4987, %v4980, %v4982
  %v4994 = vsel %vm4987, %v4977, %v4979
  %v4995 = vsel %vm4987, %v4978, %v4980
  %v4996 = vsel %vm4987, %v4975, %v4977
  %v4997 = vsel %vm4987, %v4976, %v4978
  %v4998 = vsel %vm4987, %v4973, %v4975
  %v4999 = vsel %vm4987, %v4974, %v4976
  %v5000 = vsel %vm4987, %v4971, %v4973
  %v5001 = vsel %vm4987, %v4972, %v4974
  %v5002 = vsel %vm4987, %v4985, %v4971
  %v5003 = vsel %vm4987, %v4986, %v4972
  %v5004 = vsel %vm4963, 1, 0
  %v5005 = vsel %vm4964, 1, 0
  %v5006 = vsel %vm4965, 1, 0
  %v5007 = vsel %vm4966, 1, 0
  %v5008 = vsel %vm4967, 1, 0
  %v5009 = vsel %vm4968, 1, 0
  %v5010 = vsel %vm4969, 1, 0
  %v5011 = vsel %vm4970, 1, 0
  %vm5012 = vcmp.eq.s32.totalorder %v5004, 1
  %vm5013 = vcmp.eq.s32.totalorder %v5005, 1
  %vm5014 = vcmp.eq.s32.totalorder %v5006, 1
  %vm5015 = vcmp.eq.s32.totalorder %v5007, 1
  %vm5016 = vcmp.eq.s32.totalorder %v5008, 1
  %vm5017 = vcmp.eq.s32.totalorder %v5009, 1
  %vm5018 = vcmp.eq.s32.totalorder %v5010, 1
  %vm5019 = vcmp.eq.s32.totalorder %v5011, 1
  %v5020 = vsel %vm5012, %v5002, 0.0
  %v5021 = vsel %vm5012, %v5003, 0.0
  %v5022 = vsel %vm5013, %v5000, 0.0
  %v5023 = vsel %vm5013, %v5001, 0.0
  %v5024 = vsel %vm5014, %v4998, 0.0
  %v5025 = vsel %vm5014, %v4999, 0.0
  %v5026 = vsel %vm5015, %v4996, 0.0
  %v5027 = vsel %vm5015, %v4997, 0.0
  %v5028 = vsel %vm5016, %v4994, 0.0
  %v5029 = vsel %vm5016, %v4995, 0.0
  %v5030 = vsel %vm5017, %v4992, 0.0
  %v5031 = vsel %vm5017, %v4993, 0.0
  %v5032 = vsel %vm5018, %v4990, 0.0
  %v5033 = vsel %vm5018, %v4991, 0.0
  %v5034 = vsel %vm5019, %v4988, 0.0
  %v5035 = vsel %vm5019, %v4989, 0.0
  %vm5036 = vcmp.lt.s32.totalorder %v84, 63
  %vm5037 = vcmp.lt.s32.totalorder %v85, 63
  %vm5038 = vcmp.lt.s32.totalorder %v86, 63
  %vm5039 = vcmp.lt.s32.totalorder %v87, 63
  %vm5040 = vcmp.lt.s32.totalorder %v88, 63
  %vm5041 = vcmp.lt.s32.totalorder %v89, 63
  %vm5042 = vcmp.lt.s32.totalorder %v90, 63
  %vm5043 = vcmp.lt.s32.totalorder %v91, 63
  %v5044 = vrot.slane %v4917, 1
  %v5045 = vrot.slane %v4919, 1
  %v5046 = vrot.slane %v4923, 1
  %v5047 = vrot.slane %v4925, 1
  %v5048 = vrot.slane %v4929, 1
  %v5049 = vrot.slane %v4931, 1
  %v5050 = vrot.slane %v4935, 1
  %v5051 = vrot.slane %v4937, 1
  %v5052 = vrot.slane %v4941, 1
  %v5053 = vrot.slane %v4943, 1
  %v5054 = vrot.slane %v4947, 1
  %v5055 = vrot.slane %v4949, 1
  %v5056 = vrot.slane %v4953, 1
  %v5057 = vrot.slane %v4955, 1
  %v5058 = vrot.slane %v4959, 1
  %v5059 = vrot.slane %v4961, 1
  %vm5060 = vcmp.lt.s32.totalorder %v84, 7
  %v5061 = vsel %vm5060, %v5056, %v5058
  %v5062 = vsel %vm5060, %v5057, %v5059
  %v5063 = vsel %vm5060, %v5054, %v5056
  %v5064 = vsel %vm5060, %v5055, %v5057
  %v5065 = vsel %vm5060, %v5052, %v5054
  %v5066 = vsel %vm5060, %v5053, %v5055
  %v5067 = vsel %vm5060, %v5050, %v5052
  %v5068 = vsel %vm5060, %v5051, %v5053
  %v5069 = vsel %vm5060, %v5048, %v5050
  %v5070 = vsel %vm5060, %v5049, %v5051
  %v5071 = vsel %vm5060, %v5046, %v5048
  %v5072 = vsel %vm5060, %v5047, %v5049
  %v5073 = vsel %vm5060, %v5044, %v5046
  %v5074 = vsel %vm5060, %v5045, %v5047
  %v5075 = vsel %vm5060, %v5058, %v5044
  %v5076 = vsel %vm5060, %v5059, %v5045
  %v5077 = vsel %vm5036, 1, 0
  %v5078 = vsel %vm5037, 1, 0
  %v5079 = vsel %vm5038, 1, 0
  %v5080 = vsel %vm5039, 1, 0
  %v5081 = vsel %vm5040, 1, 0
  %v5082 = vsel %vm5041, 1, 0
  %v5083 = vsel %vm5042, 1, 0
  %v5084 = vsel %vm5043, 1, 0
  %vm5085 = vcmp.eq.s32.totalorder %v5077, 1
  %vm5086 = vcmp.eq.s32.totalorder %v5078, 1
  %vm5087 = vcmp.eq.s32.totalorder %v5079, 1
  %vm5088 = vcmp.eq.s32.totalorder %v5080, 1
  %vm5089 = vcmp.eq.s32.totalorder %v5081, 1
  %vm5090 = vcmp.eq.s32.totalorder %v5082, 1
  %vm5091 = vcmp.eq.s32.totalorder %v5083, 1
  %vm5092 = vcmp.eq.s32.totalorder %v5084, 1
  %v5093 = vsel %vm5085, %v5073, 0.0
  %v5094 = vsel %vm5085, %v5074, 0.0
  %v5095 = vsel %vm5086, %v5071, 0.0
  %v5096 = vsel %vm5086, %v5072, 0.0
  %v5097 = vsel %vm5087, %v5069, 0.0
  %v5098 = vsel %vm5087, %v5070, 0.0
  %v5099 = vsel %vm5088, %v5067, 0.0
  %v5100 = vsel %vm5088, %v5068, 0.0
  %v5101 = vsel %vm5089, %v5065, 0.0
  %v5102 = vsel %vm5089, %v5066, 0.0
  %v5103 = vsel %vm5090, %v5063, 0.0
  %v5104 = vsel %vm5090, %v5064, 0.0
  %v5105 = vsel %vm5091, %v5061, 0.0
  %v5106 = vsel %vm5091, %v5062, 0.0
  %v5107 = vsel %vm5092, %v5075, 0.0
  %v5108 = vsel %vm5092, %v5076, 0.0
  %v5109 = vadd.f32 %v5020, %v4804
  %v5110 = vadd.f32 %v5021, %v4806
  %v5111 = vadd.f32 %v5022, %v4810
  %v5112 = vadd.f32 %v5023, %v4812
  %v5113 = vadd.f32 %v5024, %v4816
  %v5114 = vadd.f32 %v5025, %v4818
  %v5115 = vadd.f32 %v5026, %v4822
  %v5116 = vadd.f32 %v5027, %v4824
  %v5117 = vadd.f32 %v5028, %v4828
  %v5118 = vadd.f32 %v5029, %v4830
  %v5119 = vadd.f32 %v5030, %v4834
  %v5120 = vadd.f32 %v5031, %v4836
  %v5121 = vadd.f32 %v5032, %v4840
  %v5122 = vadd.f32 %v5033, %v4842
  %v5123 = vadd.f32 %v5034, %v4846
  %v5124 = vadd.f32 %v5035, %v4848
  %v5125 = vadd.f32 %v5109, %v5093
  %v5126 = vadd.f32 %v5110, %v5094
  %v5127 = vadd.f32 %v5111, %v5095
  %v5128 = vadd.f32 %v5112, %v5096
  %v5129 = vadd.f32 %v5113, %v5097
  %v5130 = vadd.f32 %v5114, %v5098
  %v5131 = vadd.f32 %v5115, %v5099
  %v5132 = vadd.f32 %v5116, %v5100
  %v5133 = vadd.f32 %v5117, %v5101
  %v5134 = vadd.f32 %v5118, %v5102
  %v5135 = vadd.f32 %v5119, %v5103
  %v5136 = vadd.f32 %v5120, %v5104
  %v5137 = vadd.f32 %v5121, %v5105
  %v5138 = vadd.f32 %v5122, %v5106
  %v5139 = vadd.f32 %v5123, %v5107
  %v5140 = vadd.f32 %v5124, %v5108
  %v5142 = vlaneseq
  %v5143 = vshrl.u32 %v5142, 7
  %v5144 = vsub.s32 0, %v5143
  %v5145 = vrot.slane %v81, %v5144
  %v5146 = vlaneseq
  %v5147 = vshrl.u32 %v5146, 7
  %v5148 = vsub.s32 1, %v5147
  %v5149 = vrot.slane %v81, %v5148
  %v5152 = vadd.f32 %v5125, %v5145
  %v5153 = vadd.f32 %v5126, %v5149
  %v5154 = vadd.f32 %v5127, %v5145
  %v5155 = vadd.f32 %v5128, %v5149
  %v5156 = vadd.f32 %v5129, %v5145
  %v5157 = vadd.f32 %v5130, %v5149
  %v5158 = vadd.f32 %v5131, %v5145
  %v5159 = vadd.f32 %v5132, %v5149
  %v5160 = vadd.f32 %v5133, %v5145
  %v5161 = vadd.f32 %v5134, %v5149
  %v5162 = vadd.f32 %v5135, %v5145
  %v5163 = vadd.f32 %v5136, %v5149
  %v5164 = vadd.f32 %v5137, %v5145
  %v5165 = vadd.f32 %v5138, %v5149
  %v5166 = vadd.f32 %v5139, %v5145
  %v5167 = vadd.f32 %v5140, %v5149
  %vm5168 = vcmp.gt.f32.partialorder %v5152, 0.0
  %vm5169 = vcmp.gt.f32.partialorder %v5153, 0.0
  %vm5170 = vcmp.gt.f32.partialorder %v5154, 0.0
  %vm5171 = vcmp.gt.f32.partialorder %v5155, 0.0
  %vm5172 = vcmp.gt.f32.partialorder %v5156, 0.0
  %vm5173 = vcmp.gt.f32.partialorder %v5157, 0.0
  %vm5174 = vcmp.gt.f32.partialorder %v5158, 0.0
  %vm5175 = vcmp.gt.f32.partialorder %v5159, 0.0
  %vm5176 = vcmp.gt.f32.partialorder %v5160, 0.0
  %vm5177 = vcmp.gt.f32.partialorder %v5161, 0.0
  %vm5178 = vcmp.gt.f32.partialorder %v5162, 0.0
  %vm5179 = vcmp.gt.f32.partialorder %v5163, 0.0
  %vm5180 = vcmp.gt.f32.partialorder %v5164, 0.0
  %vm5181 = vcmp.gt.f32.partialorder %v5165, 0.0
  %vm5182 = vcmp.gt.f32.partialorder %v5166, 0.0
  %vm5183 = vcmp.gt.f32.partialorder %v5167, 0.0
  %v5184 = vmul.f32 %v5152, 0.25
  %v5185 = vmul.f32 %v5153, 0.25
  %v5186 = vmul.f32 %v5154, 0.25
  %v5187 = vmul.f32 %v5155, 0.25
  %v5188 = vmul.f32 %v5156, 0.25
  %v5189 = vmul.f32 %v5157, 0.25
  %v5190 = vmul.f32 %v5158, 0.25
  %v5191 = vmul.f32 %v5159, 0.25
  %v5192 = vmul.f32 %v5160, 0.25
  %v5193 = vmul.f32 %v5161, 0.25
  %v5194 = vmul.f32 %v5162, 0.25
  %v5195 = vmul.f32 %v5163, 0.25
  %v5196 = vmul.f32 %v5164, 0.25
  %v5197 = vmul.f32 %v5165, 0.25
  %v5198 = vmul.f32 %v5166, 0.25
  %v5199 = vmul.f32 %v5167, 0.25
  %v5200 = vsel %vm5168, %v5152, %v5184
  %v5201 = vsel %vm5169, %v5153, %v5185
  %v5202 = vsel %vm5170, %v5154, %v5186
  %v5203 = vsel %vm5171, %v5155, %v5187
  %v5204 = vsel %vm5172, %v5156, %v5188
  %v5205 = vsel %vm5173, %v5157, %v5189
  %v5206 = vsel %vm5174, %v5158, %v5190
  %v5207 = vsel %vm5175, %v5159, %v5191
  %v5208 = vsel %vm5176, %v5160, %v5192
  %v5209 = vsel %vm5177, %v5161, %v5193
  %v5210 = vsel %vm5178, %v5162, %v5194
  %v5211 = vsel %vm5179, %v5163, %v5195
  %v5212 = vsel %vm5180, %v5164, %v5196
  %v5213 = vsel %vm5181, %v5165, %v5197
  %v5214 = vsel %vm5182, %v5166, %v5198
  %v5215 = vsel %vm5183, %v5167, %v5199
  %5217 = vset.pattern.permute.xlu0 64
  %5218 = vperm.xlu0 %5217, %v82
  %v5219 = vpop.permute.xlu0 %5218
  %v5221 = vsel %vm3548, %v82, 0
  %5223 = vmatprep.subr.mxu0 %v5201
  %5224 = vmatpush1.msra.mxu0 %v5200
  %5225 = vmatprep.subr.mxu0 %v5203
  %5226 = vmatpush1.msra.mxu0 %v5202
  %5227 = vmatprep.subr.mxu0 %v5205
  %5228 = vmatpush1.msra.mxu0 %v5204
  %5229 = vmatprep.subr.mxu0 %v5207
  %5230 = vmatpush1.msra.mxu0 %v5206
  %5231 = vmatprep.subr.mxu0 %v5209
  %5232 = vmatpush1.msra.mxu0 %v5208
  %5233 = vmatprep.subr.mxu0 %v5211
  %5234 = vmatpush1.msra.mxu0 %v5210
  %5235 = vmatprep.subr.mxu0 %v5213
  %5236 = vmatpush1.msra.mxu0 %v5212
  %5237 = vmatprep.subr.mxu0 %v5215
  %5238 = vmatpush1.msra.mxu0 %v5214
  %5239 = vmatprep.subr.mxu0 0.0
  %5240 = vmatpush1.msra.mxu0 0.0
  %5241 = vmatprep.subr.mxu0 0.0
  %5242 = vmatpush1.msra.mxu0 0.0
  %5243 = vmatprep.subr.mxu0 0.0
  %5244 = vmatpush1.msra.mxu0 0.0
  %5245 = vmatprep.subr.mxu0 0.0
  %5246 = vmatpush1.msra.mxu0 0.0
  %5247 = vmatprep.subr.mxu0 0.0
  %5248 = vmatpush1.msra.mxu0 0.0
  %5249 = vmatprep.subr.mxu0 0.0
  %5250 = vmatpush1.msra.mxu0 0.0
  %5251 = vmatprep.subr.mxu0 0.0
  %5252 = vmatpush1.msra.mxu0 0.0
  %5253 = vmatprep.subr.mxu0 0.0
  %5254 = vmatpush1.msra.mxu0 0.0
  %5255 = vmatprep.subr.mxu0 0.0
  %5256 = vmatpush1.msra.mxu0 0.0
  %5257 = vmatprep.subr.mxu0 0.0
  %5258 = vmatpush1.msra.mxu0 0.0
  %5259 = vmatprep.subr.mxu0 0.0
  %5260 = vmatpush1.msra.mxu0 0.0
  %5261 = vmatprep.subr.mxu0 0.0
  %5262 = vmatpush1.msra.mxu0 0.0
  %5263 = vmatprep.subr.mxu0 0.0
  %5264 = vmatpush1.msra.mxu0 0.0
  %5265 = vmatprep.subr.mxu0 0.0
  %5266 = vmatpush1.msra.mxu0 0.0
  %5267 = vmatprep.subr.mxu0 0.0
  %5268 = vmatpush1.msra.mxu0 0.0
  %5269 = vmatprep.subr.mxu0 0.0
  %5270 = vmatpush1.msra.mxu0 0.0
  %5271 = vmatprep.subr.mxu0 0.0
  %5272 = vmatpush1.msra.mxu0 0.0
  %5273 = vmatprep.subr.mxu0 0.0
  %5274 = vmatpush1.msra.mxu0 0.0
  %5275 = vmatprep.subr.mxu0 0.0
  %5276 = vmatpush1.msra.mxu0 0.0
  %5277 = vmatprep.subr.mxu0 0.0
  %5278 = vmatpush1.msra.mxu0 0.0
  %5279 = vmatprep.subr.mxu0 0.0
  %5280 = vmatpush1.msra.mxu0 0.0
  %5281 = vmatprep.subr.mxu0 0.0
  %5282 = vmatpush1.msra.mxu0 0.0
  %5283 = vmatprep.subr.mxu0 0.0
  %5284 = vmatpush1.msra.mxu0 0.0
  %5285 = vmatprep.subr.mxu0 0.0
  %5286 = vmatpush1.msra.mxu0 0.0
  %5287 = vmatprep.mubr.f32.mxu0 0.0
  %5288 = vmatmul.mubr.f32.gmra.mrb[0].mxu0 %v5221
  %v5289 = vpop.f32.mrb[0].mxu0
  %v5290 = vadd.f32 %v5219, %v5289
  %v5291 = vpop.f32.mrb[0].mxu0
  %v5292 = vadd.f32 %v5219, %v5291
  %5293 = vdwg.mxu0
  %5294 = vst.msk [vmem:[%s3] sm:$0xff] %vm1376, %v3162
  %vm5295 = vcmask 781312
  %5296 = vst.msk [vmem:[%s3 + $0x10] sm:$0xf] %vm5295, %v3163
  %5297 = vst [vmem:[%s3 + $0x20] sm:$0x1f] %v5290
  %vm5298 = vcmask 126976
  %5299 = vst.msk [vmem:[%s3 + $0x28] sm:$0x1f] %vm5298, %v5292
  // Predicated region
  $region14: #{t_gnn_forward.1} parent=0 // pred_check
    _
  $region15: #{t_gnn_forward.1} parent=0 // pred_check_branch
    %5301 = sbr.rel (0) target = $region17
  $region16: #{t_gnn_forward.1} parent=0 // pred_region
    _
  $region17: #{t_gnn_forward.1} parent=0 // pred_fallthru
    _
  // Predicated region
  $region18: #{t_gnn_forward.1} parent=0 // pred_check
    _
  $region19: #{t_gnn_forward.1} parent=0 // pred_check_branch
    %5303 = sbr.rel (0) target = $region21
  $region20: #{t_gnn_forward.1} parent=0 // pred_region
    _
  $region21: #{t_gnn_forward.1} parent=0 // pred_fallthru
    _

</llo_original>
